<compile_context>
chip_gen: v7x
topology: tpu7x:2x2x1
jax: 0.10.0
libtpu: 0.0.40
codegen_flags: <defaults>
</compile_context>

<pallas_src>
import functools

import numpy as np
import jax
import jax.numpy as jnp
from jax import lax
from jax.experimental import pallas as pl
from jax.experimental.pallas import tpu as pltpu

# ----- model config (TransformerDecoderLayer defaults) -----
D_MODEL = 32
N_HEAD = 4
HEAD_DIM = D_MODEL // N_HEAD
D_FF = 2048
EPS = 1e-5
ATTN_SCALE = 1.0 / (HEAD_DIM ** 0.5)
NEG_INF = -1e30

PARAM_ORDER = [
    "sa_wq", "sa_wk", "sa_wv", "sa_bq", "sa_bk", "sa_bv", "sa_wo", "sa_bo",
    "ca_wq", "ca_wk", "ca_wv", "ca_bq", "ca_bk", "ca_bv", "ca_wo", "ca_bo",
    "n1_w", "n1_b", "n2_w", "n2_b", "n3_w", "n3_b",
    "w1", "b1", "w2", "b2",
]


def _layernorm(x, w, b):
    mu = jnp.mean(x, axis=-1, keepdims=True)
    var = jnp.mean((x - mu) ** 2, axis=-1, keepdims=True)
    return (x - mu) * lax.rsqrt(var + EPS) * w + b


# ----- Pallas kernel: whole decoder layer, single invocation -----
def decoder_kernel(
        tgt_ref, mem_ref, hmask_ref,
        sa_wq, sa_wk, sa_wv, sa_bq, sa_bk, sa_bv, sa_wo, sa_bo,
        ca_wq, ca_wk, ca_wv, ca_bq, ca_bk, ca_bv, ca_wo, ca_bo,
        n1_w, n1_b, n2_w, n2_b, n3_w, n3_b,
        w1, b1, w2, b2,
        out_ref, *, batch):
    R = tgt_ref.shape[0]       # T * B   (rows are (t, b) with b = row % batch)
    Rm = mem_ref.shape[0]      # S * B

    x = tgt_ref[...]           # (R,  D) f32
    mem = mem_ref[...]         # (Rm, D) f32
    hmask = hmask_ref[...]     # (H, 1, D): 1.0 on head h's feature columns

    def batch_bias(nq, nk):
        # additive bias forbidding attention across different batch elements
        rb = lax.broadcasted_iota(jnp.int32, (nq, nk), 0) % batch
        cb = lax.broadcasted_iota(jnp.int32, (nq, nk), 1) % batch
        return jnp.where(rb == cb, 0.0, NEG_INF)

    self_bias = batch_bias(R, R)       # (R, R)
    cross_bias = batch_bias(R, Rm)     # (R, Rm)

    def mha(q_in, kv_in, bias, wq, wk, wv, bq, bk, bv, wo, bo):
        nq, nk = q_in.shape[0], kv_in.shape[0]
        q = jnp.dot(q_in, wq[...], preferred_element_type=jnp.float32) + bq[...]
        k = jnp.dot(kv_in, wk[...], preferred_element_type=jnp.float32) + bk[...]
        v = jnp.dot(kv_in, wv[...], preferred_element_type=jnp.float32) + bv[...]

        # Per-head column masking: K/V keep only head h's columns in slice h, so
        # a single batched contraction over the full D computes per-head scores
        # and the head outputs land in their own columns (reassemble by sum).
        qb = jnp.broadcast_to(q[None], (N_HEAD, nq, D_MODEL))   # (H, nq, D)
        ks = k[None] * hmask                                    # (H, nk, D)
        vs = v[None] * hmask                                    # (H, nk, D)

        s = jnp.einsum('hqd,hkd->hqk', qb, ks,
                       preferred_element_type=jnp.float32)      # (H, nq, nk)
        s = s * ATTN_SCALE + bias[None]
        s = s - jnp.max(s, axis=-1, keepdims=True)
        p = jnp.exp(s)
        denom = jnp.sum(p, axis=-1, keepdims=True)
        p = p * pl.reciprocal(denom, approx=True)               # EUP reciprocal

        ctx = jnp.einsum('hqk,hkd->hqd', p, vs,
                         preferred_element_type=jnp.float32)    # (H, nq, D)
        o = jnp.sum(ctx, axis=0)                                # (nq, D) heads merged
        return jnp.dot(o, wo[...], preferred_element_type=jnp.float32) + bo[...]

    # --- self-attention block: x = norm1(tgt + self_attn(tgt, tgt, tgt)) ---
    sa = mha(x, x, self_bias,
             sa_wq, sa_wk, sa_wv, sa_bq, sa_bk, sa_bv, sa_wo, sa_bo)
    x = _layernorm(x + sa, n1_w[...], n1_b[...])

    # --- cross-attention block: x = norm2(x + mha(x, memory, memory)) ---
    ca = mha(x, mem, cross_bias,
             ca_wq, ca_wk, ca_wv, ca_bq, ca_bk, ca_bv, ca_wo, ca_bo)
    x = _layernorm(x + ca, n2_w[...], n2_b[...])

    # --- feed-forward block: x = norm3(x + linear2(relu(linear1(x)))) ---
    # TODO(synk): dropout (p=0.1) omitted — eval-mode semantics.
    h = jnp.maximum(
        jnp.dot(x, w1[...], preferred_element_type=jnp.float32) + b1[...], 0.0)
    y = jnp.dot(h, w2[...], preferred_element_type=jnp.float32) + b2[...]
    x = _layernorm(x + y, n3_w[...], n3_b[...])

    out_ref[...] = x.astype(out_ref.dtype)


# ----- wrapper -----
@jax.jit
def decoder_forward(encoder_output, decoder_sequence, params):
    # encoder_output: (S, B, D), decoder_sequence: (T, B, D)  (PyTorch layout)
    S, B, D = encoder_output.shape
    T, B2, D2 = decoder_sequence.shape
    assert D == D_MODEL and D2 == D_MODEL and B2 == B

    # Free row-major reshapes (no transposes, no extra HBM round trips):
    # row r = t*B + b  /  row m = s*B + b.
    tgt2d = decoder_sequence.reshape(T * B, D)
    mem2d = encoder_output.reshape(S * B, D)

    hmask = jnp.asarray(
        np.repeat(np.eye(N_HEAD, dtype=np.float32), HEAD_DIM, axis=1)
        .reshape(N_HEAD, 1, D_MODEL))

    param_list = [params[name] for name in PARAM_ORDER]

    vmem_spec = pl.BlockSpec(memory_space=pltpu.MemorySpace.VMEM)
    out2d = pl.pallas_call(
        functools.partial(decoder_kernel, batch=B),
        out_shape=jax.ShapeDtypeStruct((T * B, D), jnp.float32),
        in_specs=[vmem_spec] * (3 + len(param_list)),
        out_specs=vmem_spec,
    )(tgt2d, mem2d, hmask, *param_list)

    return out2d.reshape(T, B, D)    # free reshape back to (T, B, D)


# ----- pure-JAX reference (independent formulation: per-batch, per-head) -----
def decoder_ref(encoder_output, decoder_sequence, params):
    mem = jnp.transpose(encoder_output, (1, 0, 2))    # (B, S, D)
    tgt = jnp.transpose(decoder_sequence, (1, 0, 2))  # (B, T, D)

    def mha(q_in, kv_in, wq, wk, wv, bq, bk, bv, wo, bo):
        q = q_in @ wq + bq
        k = kv_in @ wk + bk
        v = kv_in @ wv + bv
        heads = []
        for hh in range(N_HEAD):
            sl = slice(hh * HEAD_DIM, (hh + 1) * HEAD_DIM)
            s = (q[:, sl] @ k[:, sl].T) * ATTN_SCALE
            p = jax.nn.softmax(s, axis=-1)
            heads.append(p @ v[:, sl])
        return jnp.concatenate(heads, axis=-1) @ wo + bo

    def one(tgt_b, mem_b):
        sa = mha(tgt_b, tgt_b, params["sa_wq"], params["sa_wk"], params["sa_wv"],
                 params["sa_bq"], params["sa_bk"], params["sa_bv"],
                 params["sa_wo"], params["sa_bo"])
        x = _layernorm(tgt_b + sa, params["n1_w"], params["n1_b"])
        ca = mha(x, mem_b, params["ca_wq"], params["ca_wk"], params["ca_wv"],
                 params["ca_bq"], params["ca_bk"], params["ca_bv"],
                 params["ca_wo"], params["ca_bo"])
        x = _layernorm(x + ca, params["n2_w"], params["n2_b"])
        hdn = jnp.maximum(x @ params["w1"] + params["b1"], 0.0)
        y = hdn @ params["w2"] + params["b2"]
        return _layernorm(x + y, params["n3_w"], params["n3_b"])

    out = jax.vmap(one)(tgt, mem)                     # (B, T, D)
    return jnp.transpose(out, (1, 0, 2))              # (T, B, D)


# ----- deterministic parameter init (shapes follow TransformerDecoderLayer) -----
def init_params(key):
    keys = jax.random.split(key, 20)
    D, F = D_MODEL, D_FF

    def nrm(k, shape, scale=0.05):
        return (scale * jax.random.normal(k, shape)).astype(jnp.float32)

    p = {}
    sa_in_w = nrm(keys[0], (3 * D, D))
    sa_in_b = nrm(keys[1], (3 * D,), 0.02)
    p["sa_wq"], p["sa_wk"], p["sa_wv"] = (sa_in_w[:D].T, sa_in_w[D:2 * D].T, sa_in_w[2 * D:].T)
    p["sa_bq"], p["sa_bk"], p["sa_bv"] = (sa_in_b[:D].reshape(1, D),
                                          sa_in_b[D:2 * D].reshape(1, D),
                                          sa_in_b[2 * D:].reshape(1, D))
    p["sa_wo"] = nrm(keys[2], (D, D)).T
    p["sa_bo"] = nrm(keys[3], (D,), 0.02).reshape(1, D)
    ca_in_w = nrm(keys[4], (3 * D, D))
    ca_in_b = nrm(keys[5], (3 * D,), 0.02)
    p["ca_wq"], p["ca_wk"], p["ca_wv"] = (ca_in_w[:D].T, ca_in_w[D:2 * D].T, ca_in_w[2 * D:].T)
    p["ca_bq"], p["ca_bk"], p["ca_bv"] = (ca_in_b[:D].reshape(1, D),
                                          ca_in_b[D:2 * D].reshape(1, D),
                                          ca_in_b[2 * D:].reshape(1, D))
    p["ca_wo"] = nrm(keys[6], (D, D)).T
    p["ca_bo"] = nrm(keys[7], (D,), 0.02).reshape(1, D)
    p["n1_w"] = (1.0 + nrm(keys[8], (D,), 0.01)).reshape(1, D)
    p["n1_b"] = nrm(keys[9], (D,), 0.01).reshape(1, D)
    p["n2_w"] = (1.0 + nrm(keys[10], (D,), 0.01)).reshape(1, D)
    p["n2_b"] = nrm(keys[11], (D,), 0.01).reshape(1, D)
    p["n3_w"] = (1.0 + nrm(keys[12], (D,), 0.01)).reshape(1, D)
    p["n3_b"] = nrm(keys[13], (D,), 0.01).reshape(1, D)
    p["w1"] = nrm(keys[14], (F, D)).T          # (D, F)
    p["b1"] = nrm(keys[15], (F,), 0.02).reshape(1, F)
    p["w2"] = nrm(keys[16], (D, F)).T          # (F, D)
    p["b2"] = nrm(keys[17], (D,), 0.02).reshape(1, D)
    return p


if __name__ == "__main__":
    key = jax.random.PRNGKey(0)
    kp, ke, kd = jax.random.split(key, 3)
    params = init_params(kp)

    S, T, B = 16, 8, 2   # encoder seq, decoder seq, batch
    encoder_output = jax.random.normal(ke, (S, B, D_MODEL), dtype=jnp.float32)
    decoder_sequence = jax.random.normal(kd, (T, B, D_MODEL), dtype=jnp.float32)

    out = decoder_forward(encoder_output, decoder_sequence, params)
    out = jax.block_until_ready(out)

    ref = decoder_ref(encoder_output, decoder_sequence, params)
    assert out.shape == (T, B, D_MODEL)
    err = float(jnp.max(jnp.abs(out - ref)))
    # tolerance covers pl.reciprocal(approx=True) in the kernel softmax
    assert jnp.allclose(out, ref, atol=2e-3, rtol=2e-3), f"max abs err {err}"

    print("KERNEL_OK")
</pallas_src>

<mosaic_0001>
module attributes {stable_mosaic.version = 11 : i64} {
  func.func @decoder_kernel(%arg0: memref<16x32xf32, #tpu.memory_space<vmem>>, %arg1: memref<32x32xf32, #tpu.memory_space<vmem>>, %arg2: memref<4x1x32xf32, #tpu.memory_space<vmem>>, %arg3: memref<32x32xf32, #tpu.memory_space<vmem>>, %arg4: memref<32x32xf32, #tpu.memory_space<vmem>>, %arg5: memref<32x32xf32, #tpu.memory_space<vmem>>, %arg6: memref<1x32xf32, #tpu.memory_space<vmem>>, %arg7: memref<1x32xf32, #tpu.memory_space<vmem>>, %arg8: memref<1x32xf32, #tpu.memory_space<vmem>>, %arg9: memref<32x32xf32, #tpu.memory_space<vmem>>, %arg10: memref<1x32xf32, #tpu.memory_space<vmem>>, %arg11: memref<32x32xf32, #tpu.memory_space<vmem>>, %arg12: memref<32x32xf32, #tpu.memory_space<vmem>>, %arg13: memref<32x32xf32, #tpu.memory_space<vmem>>, %arg14: memref<1x32xf32, #tpu.memory_space<vmem>>, %arg15: memref<1x32xf32, #tpu.memory_space<vmem>>, %arg16: memref<1x32xf32, #tpu.memory_space<vmem>>, %arg17: memref<32x32xf32, #tpu.memory_space<vmem>>, %arg18: memref<1x32xf32, #tpu.memory_space<vmem>>, %arg19: memref<1x32xf32, #tpu.memory_space<vmem>>, %arg20: memref<1x32xf32, #tpu.memory_space<vmem>>, %arg21: memref<1x32xf32, #tpu.memory_space<vmem>>, %arg22: memref<1x32xf32, #tpu.memory_space<vmem>>, %arg23: memref<1x32xf32, #tpu.memory_space<vmem>>, %arg24: memref<1x32xf32, #tpu.memory_space<vmem>>, %arg25: memref<32x2048xf32, #tpu.memory_space<vmem>>, %arg26: memref<1x2048xf32, #tpu.memory_space<vmem>>, %arg27: memref<2048x32xf32, #tpu.memory_space<vmem>>, %arg28: memref<1x32xf32, #tpu.memory_space<vmem>>, %arg29: memref<16x32xf32, #tpu.memory_space<vmem>>) attributes {dimension_semantics = [], scalar_prefetch = 0 : i64, scratch_operands = 0 : i64, tpu.core_type = #tpu.core_type<tc>} {
    %c0 = arith.constant 0 : index
    %c0_0 = arith.constant 0 : index
    %0 = vector.load %arg0[%c0, %c0_0] : memref<16x32xf32, #tpu.memory_space<vmem>>, vector<16x32xf32>
    %c0_1 = arith.constant 0 : index
    %c0_2 = arith.constant 0 : index
    %1 = vector.load %arg1[%c0_1, %c0_2] : memref<32x32xf32, #tpu.memory_space<vmem>>, vector<32x32xf32>
    %c0_3 = arith.constant 0 : index
    %c0_4 = arith.constant 0 : index
    %c0_5 = arith.constant 0 : index
    %2 = vector.load %arg2[%c0_3, %c0_4, %c0_5] : memref<4x1x32xf32, #tpu.memory_space<vmem>>, vector<4x1x32xf32>
    %3 = tpu.iota {dimensions = array<i32: 0>} : vector<16x16xi32>
    %c2_i32 = arith.constant 2 : i32
    %c0_i32 = arith.constant 0 : i32
    %4 = arith.cmpi eq, %c2_i32, %c0_i32 : i32
    %c1_i32 = arith.constant 1 : i32
    %5 = arith.select %4, %c1_i32, %c2_i32 : i32
    %6 = vector.broadcast %5 : i32 to vector<16x16xi32>
    %7 = arith.remsi %3, %6 : vector<16x16xi32>
    %c0_i32_6 = arith.constant 0 : i32
    %8 = vector.broadcast %c0_i32_6 : i32 to vector<16x16xi32>
    %9 = arith.cmpi ne, %7, %8 : vector<16x16xi32>
    %c0_i32_7 = arith.constant 0 : i32
    %10 = vector.broadcast %c0_i32_7 : i32 to vector<16x16xi32>
    %11 = arith.cmpi slt, %7, %10 : vector<16x16xi32>
    %c0_i32_8 = arith.constant 0 : i32
    %12 = arith.cmpi slt, %5, %c0_i32_8 : i32
    %13 = vector.broadcast %12 : i1 to vector<16x16xi1>
    %14 = vector.broadcast %13 : vector<16x16xi1> to vector<16x16xi1>
    %15 = arith.xori %11, %14 : vector<16x16xi1>
    %16 = arith.andi %15, %9 : vector<16x16xi1>
    %17 = vector.broadcast %5 : i32 to vector<16x16xi32>
    %18 = arith.addi %7, %17 : vector<16x16xi32>
    %19 = arith.select %16, %18, %7 : vector<16x16xi1>, vector<16x16xi32>
    %20 = tpu.iota {dimensions = array<i32: 1>} : vector<16x16xi32>
    %c2_i32_9 = arith.constant 2 : i32
    %c0_i32_10 = arith.constant 0 : i32
    %21 = arith.cmpi eq, %c2_i32_9, %c0_i32_10 : i32
    %c1_i32_11 = arith.constant 1 : i32
    %22 = arith.select %21, %c1_i32_11, %c2_i32_9 : i32
    %23 = vector.broadcast %22 : i32 to vector<16x16xi32>
    %24 = arith.remsi %20, %23 : vector<16x16xi32>
    %c0_i32_12 = arith.constant 0 : i32
    %25 = vector.broadcast %c0_i32_12 : i32 to vector<16x16xi32>
    %26 = arith.cmpi ne, %24, %25 : vector<16x16xi32>
    %c0_i32_13 = arith.constant 0 : i32
    %27 = vector.broadcast %c0_i32_13 : i32 to vector<16x16xi32>
    %28 = arith.cmpi slt, %24, %27 : vector<16x16xi32>
    %c0_i32_14 = arith.constant 0 : i32
    %29 = arith.cmpi slt, %22, %c0_i32_14 : i32
    %30 = vector.broadcast %29 : i1 to vector<16x16xi1>
    %31 = vector.broadcast %30 : vector<16x16xi1> to vector<16x16xi1>
    %32 = arith.xori %28, %31 : vector<16x16xi1>
    %33 = arith.andi %32, %26 : vector<16x16xi1>
    %34 = vector.broadcast %22 : i32 to vector<16x16xi32>
    %35 = arith.addi %24, %34 : vector<16x16xi32>
    %36 = arith.select %33, %35, %24 : vector<16x16xi1>, vector<16x16xi32>
    %37 = arith.cmpi eq, %19, %36 : vector<16x16xi32>
    %cst = arith.constant 0.000000e+00 : f32
    %cst_15 = arith.constant -1.000000e+30 : f32
    %38 = vector.broadcast %cst : f32 to vector<16x16xf32>
    %39 = vector.broadcast %cst_15 : f32 to vector<16x16xf32>
    %40 = arith.select %37, %38, %39 : vector<16x16xi1>, vector<16x16xf32>
    %41 = tpu.iota {dimensions = array<i32: 0>} : vector<16x32xi32>
    %c2_i32_16 = arith.constant 2 : i32
    %c0_i32_17 = arith.constant 0 : i32
    %42 = arith.cmpi eq, %c2_i32_16, %c0_i32_17 : i32
    %c1_i32_18 = arith.constant 1 : i32
    %43 = arith.select %42, %c1_i32_18, %c2_i32_16 : i32
    %44 = vector.broadcast %43 : i32 to vector<16x32xi32>
    %45 = arith.remsi %41, %44 : vector<16x32xi32>
    %c0_i32_19 = arith.constant 0 : i32
    %46 = vector.broadcast %c0_i32_19 : i32 to vector<16x32xi32>
    %47 = arith.cmpi ne, %45, %46 : vector<16x32xi32>
    %c0_i32_20 = arith.constant 0 : i32
    %48 = vector.broadcast %c0_i32_20 : i32 to vector<16x32xi32>
    %49 = arith.cmpi slt, %45, %48 : vector<16x32xi32>
    %c0_i32_21 = arith.constant 0 : i32
    %50 = arith.cmpi slt, %43, %c0_i32_21 : i32
    %51 = vector.broadcast %50 : i1 to vector<16x32xi1>
    %52 = vector.broadcast %51 : vector<16x32xi1> to vector<16x32xi1>
    %53 = arith.xori %49, %52 : vector<16x32xi1>
    %54 = arith.andi %53, %47 : vector<16x32xi1>
    %55 = vector.broadcast %43 : i32 to vector<16x32xi32>
    %56 = arith.addi %45, %55 : vector<16x32xi32>
    %57 = arith.select %54, %56, %45 : vector<16x32xi1>, vector<16x32xi32>
    %58 = tpu.iota {dimensions = array<i32: 1>} : vector<16x32xi32>
    %c2_i32_22 = arith.constant 2 : i32
    %c0_i32_23 = arith.constant 0 : i32
    %59 = arith.cmpi eq, %c2_i32_22, %c0_i32_23 : i32
    %c1_i32_24 = arith.constant 1 : i32
    %60 = arith.select %59, %c1_i32_24, %c2_i32_22 : i32
    %61 = vector.broadcast %60 : i32 to vector<16x32xi32>
    %62 = arith.remsi %58, %61 : vector<16x32xi32>
    %c0_i32_25 = arith.constant 0 : i32
    %63 = vector.broadcast %c0_i32_25 : i32 to vector<16x32xi32>
    %64 = arith.cmpi ne, %62, %63 : vector<16x32xi32>
    %c0_i32_26 = arith.constant 0 : i32
    %65 = vector.broadcast %c0_i32_26 : i32 to vector<16x32xi32>
    %66 = arith.cmpi slt, %62, %65 : vector<16x32xi32>
    %c0_i32_27 = arith.constant 0 : i32
    %67 = arith.cmpi slt, %60, %c0_i32_27 : i32
    %68 = vector.broadcast %67 : i1 to vector<16x32xi1>
    %69 = vector.broadcast %68 : vector<16x32xi1> to vector<16x32xi1>
    %70 = arith.xori %66, %69 : vector<16x32xi1>
    %71 = arith.andi %70, %64 : vector<16x32xi1>
    %72 = vector.broadcast %60 : i32 to vector<16x32xi32>
    %73 = arith.addi %62, %72 : vector<16x32xi32>
    %74 = arith.select %71, %73, %62 : vector<16x32xi1>, vector<16x32xi32>
    %75 = arith.cmpi eq, %57, %74 : vector<16x32xi32>
    %cst_28 = arith.constant 0.000000e+00 : f32
    %cst_29 = arith.constant -1.000000e+30 : f32
    %76 = vector.broadcast %cst_28 : f32 to vector<16x32xf32>
    %77 = vector.broadcast %cst_29 : f32 to vector<16x32xf32>
    %78 = arith.select %75, %76, %77 : vector<16x32xi1>, vector<16x32xf32>
    %c0_30 = arith.constant 0 : index
    %c0_31 = arith.constant 0 : index
    %79 = vector.load %arg3[%c0_30, %c0_31] : memref<32x32xf32, #tpu.memory_space<vmem>>, vector<32x32xf32>
    %cst_32 = arith.constant dense<0.000000e+00> : vector<16x32xf32>
    %80 = tpu.matmul %0, %79, %cst_32 {dimension_numbers = #tpu.dot_dimension_numbers<[1], [0], [0], [1], [0, 0, 1, 1], [], []>} : vector<16x32xf32>, vector<32x32xf32>, vector<16x32xf32> -> vector<16x32xf32>
    %c0_33 = arith.constant 0 : index
    %c0_34 = arith.constant 0 : index
    %81 = vector.load %arg6[%c0_33, %c0_34] : memref<1x32xf32, #tpu.memory_space<vmem>>, vector<1x32xf32>
    %82 = vector.broadcast %81 : vector<1x32xf32> to vector<16x32xf32>
    %83 = arith.addf %80, %82 : vector<16x32xf32>
    %c0_35 = arith.constant 0 : index
    %c0_36 = arith.constant 0 : index
    %84 = vector.load %arg4[%c0_35, %c0_36] : memref<32x32xf32, #tpu.memory_space<vmem>>, vector<32x32xf32>
    %cst_37 = arith.constant dense<0.000000e+00> : vector<16x32xf32>
    %85 = tpu.matmul %0, %84, %cst_37 {dimension_numbers = #tpu.dot_dimension_numbers<[1], [0], [0], [1], [0, 0, 1, 1], [], []>} : vector<16x32xf32>, vector<32x32xf32>, vector<16x32xf32> -> vector<16x32xf32>
    %c0_38 = arith.constant 0 : index
    %c0_39 = arith.constant 0 : index
    %86 = vector.load %arg7[%c0_38, %c0_39] : memref<1x32xf32, #tpu.memory_space<vmem>>, vector<1x32xf32>
    %87 = vector.broadcast %86 : vector<1x32xf32> to vector<16x32xf32>
    %88 = arith.addf %85, %87 : vector<16x32xf32>
    %c0_40 = arith.constant 0 : index
    %c0_41 = arith.constant 0 : index
    %89 = vector.load %arg5[%c0_40, %c0_41] : memref<32x32xf32, #tpu.memory_space<vmem>>, vector<32x32xf32>
    %cst_42 = arith.constant dense<0.000000e+00> : vector<16x32xf32>
    %90 = tpu.matmul %0, %89, %cst_42 {dimension_numbers = #tpu.dot_dimension_numbers<[1], [0], [0], [1], [0, 0, 1, 1], [], []>} : vector<16x32xf32>, vector<32x32xf32>, vector<16x32xf32> -> vector<16x32xf32>
    %c0_43 = arith.constant 0 : index
    %c0_44 = arith.constant 0 : index
    %91 = vector.load %arg8[%c0_43, %c0_44] : memref<1x32xf32, #tpu.memory_space<vmem>>, vector<1x32xf32>
    %92 = vector.broadcast %91 : vector<1x32xf32> to vector<16x32xf32>
    %93 = arith.addf %90, %92 : vector<16x32xf32>
    %94 = vector.shape_cast %83 : vector<16x32xf32> to vector<1x16x32xf32>
    %95 = vector.shape_cast %94 : vector<1x16x32xf32> to vector<1x16x32xf32>
    %96 = vector.broadcast %95 : vector<1x16x32xf32> to vector<4x16x32xf32>
    %97 = vector.shape_cast %88 : vector<16x32xf32> to vector<1x16x32xf32>
    %98 = vector.broadcast %97 : vector<1x16x32xf32> to vector<4x16x32xf32>
    %99 = vector.broadcast %2 : vector<4x1x32xf32> to vector<4x16x32xf32>
    %100 = arith.mulf %98, %99 : vector<4x16x32xf32>
    %101 = vector.shape_cast %93 : vector<16x32xf32> to vector<1x16x32xf32>
    %102 = vector.broadcast %101 : vector<1x16x32xf32> to vector<4x16x32xf32>
    %103 = vector.broadcast %2 : vector<4x1x32xf32> to vector<4x16x32xf32>
    %104 = arith.mulf %102, %103 : vector<4x16x32xf32>
    "tpu.trace_start"() <{level = 10 : i32, message = "hqd,hkd->hqk"}> : () -> ()
    %cst_45 = arith.constant dense<0.000000e+00> : vector<4x16x16xf32>
    %105 = tpu.matmul %96, %100, %cst_45 {dimension_numbers = #tpu.dot_dimension_numbers<[2], [2], [1], [1], [0, 0, 0, 1, 1, 1], [0], [0]>} : vector<4x16x32xf32>, vector<4x16x32xf32>, vector<4x16x16xf32> -> vector<4x16x16xf32>
    "tpu.trace_stop"() : () -> ()
    %cst_46 = arith.constant 0.353553385 : f32
    %106 = vector.broadcast %cst_46 : f32 to vector<4x16x16xf32>
    %107 = arith.mulf %105, %106 : vector<4x16x16xf32>
    %108 = vector.shape_cast %40 : vector<16x16xf32> to vector<1x16x16xf32>
    %109 = vector.broadcast %108 : vector<1x16x16xf32> to vector<4x16x16xf32>
    %110 = arith.addf %107, %109 : vector<4x16x16xf32>
    %cst_47 = arith.constant dense<0xFF800000> : vector<4x16xf32>
    %111 = vector.multi_reduction <maximumf>, %110, %cst_47 [2] : vector<4x16x16xf32> to vector<4x16xf32>
    %112 = vector.shape_cast %111 : vector<4x16xf32> to vector<4x16x1xf32>
    %113 = vector.broadcast %112 : vector<4x16x1xf32> to vector<4x16x16xf32>
    %114 = arith.subf %110, %113 : vector<4x16x16xf32>
    %115 = math.exp %114 : vector<4x16x16xf32>
    %cst_48 = arith.constant dense<0.000000e+00> : vector<4x16xf32>
    %116 = vector.multi_reduction <add>, %115, %cst_48 [2] : vector<4x16x16xf32> to vector<4x16xf32>
    %117 = vector.shape_cast %116 : vector<4x16xf32> to vector<4x16x1xf32>
    %118 = tpu.reciprocal %117 {approx = true} : vector<4x16x1xf32> -> vector<4x16x1xf32>
    %119 = vector.broadcast %118 : vector<4x16x1xf32> to vector<4x16x16xf32>
    %120 = arith.mulf %115, %119 : vector<4x16x16xf32>
    "tpu.trace_start"() <{level = 10 : i32, message = "hqk,hkd->hqd"}> : () -> ()
    %cst_49 = arith.constant dense<0.000000e+00> : vector<4x16x32xf32>
    %121 = tpu.matmul %120, %104, %cst_49 {dimension_numbers = #tpu.dot_dimension_numbers<[2], [1], [1], [2], [0, 0, 0, 1, 1, 2], [0], [0]>} : vector<4x16x16xf32>, vector<4x16x32xf32>, vector<4x16x32xf32> -> vector<4x16x32xf32>
    "tpu.trace_stop"() : () -> ()
    %cst_50 = arith.constant dense<0.000000e+00> : vector<16x32xf32>
    %122 = vector.multi_reduction <add>, %121, %cst_50 [0] : vector<4x16x32xf32> to vector<16x32xf32>
    %c0_51 = arith.constant 0 : index
    %c0_52 = arith.constant 0 : index
    %123 = vector.load %arg9[%c0_51, %c0_52] : memref<32x32xf32, #tpu.memory_space<vmem>>, vector<32x32xf32>
    %cst_53 = arith.constant dense<0.000000e+00> : vector<16x32xf32>
    %124 = tpu.matmul %122, %123, %cst_53 {dimension_numbers = #tpu.dot_dimension_numbers<[1], [0], [0], [1], [0, 0, 1, 1], [], []>} : vector<16x32xf32>, vector<32x32xf32>, vector<16x32xf32> -> vector<16x32xf32>
    %c0_54 = arith.constant 0 : index
    %c0_55 = arith.constant 0 : index
    %125 = vector.load %arg10[%c0_54, %c0_55] : memref<1x32xf32, #tpu.memory_space<vmem>>, vector<1x32xf32>
    %126 = vector.broadcast %125 : vector<1x32xf32> to vector<16x32xf32>
    %127 = arith.addf %124, %126 : vector<16x32xf32>
    %128 = arith.addf %0, %127 : vector<16x32xf32>
    %c0_56 = arith.constant 0 : index
    %c0_57 = arith.constant 0 : index
    %129 = vector.load %arg19[%c0_56, %c0_57] : memref<1x32xf32, #tpu.memory_space<vmem>>, vector<1x32xf32>
    %c0_58 = arith.constant 0 : index
    %c0_59 = arith.constant 0 : index
    %130 = vector.load %arg20[%c0_58, %c0_59] : memref<1x32xf32, #tpu.memory_space<vmem>>, vector<1x32xf32>
    %cst_60 = arith.constant dense<0.000000e+00> : vector<16xf32>
    %131 = vector.multi_reduction <add>, %128, %cst_60 [1] : vector<16x32xf32> to vector<16xf32>
    %132 = vector.shape_cast %131 : vector<16xf32> to vector<16x1xf32>
    %cst_61 = arith.constant 3.200000e+01 : f32
    %133 = vector.broadcast %cst_61 : f32 to vector<16x1xf32>
    %134 = arith.divf %132, %133 : vector<16x1xf32>
    %135 = vector.broadcast %134 : vector<16x1xf32> to vector<16x32xf32>
    %136 = arith.subf %128, %135 : vector<16x32xf32>
    %137 = arith.mulf %136, %136 : vector<16x32xf32>
    %cst_62 = arith.constant dense<0.000000e+00> : vector<16xf32>
    %138 = vector.multi_reduction <add>, %137, %cst_62 [1] : vector<16x32xf32> to vector<16xf32>
    %139 = vector.shape_cast %138 : vector<16xf32> to vector<16x1xf32>
    %cst_63 = arith.constant 3.200000e+01 : f32
    %140 = vector.broadcast %cst_63 : f32 to vector<16x1xf32>
    %141 = arith.divf %139, %140 : vector<16x1xf32>
    %142 = vector.broadcast %134 : vector<16x1xf32> to vector<16x32xf32>
    %143 = arith.subf %128, %142 : vector<16x32xf32>
    %cst_64 = arith.constant 9.99999974E-6 : f32
    %144 = vector.broadcast %cst_64 : f32 to vector<16x1xf32>
    %145 = arith.addf %141, %144 : vector<16x1xf32>
    %146 = math.rsqrt %145 : vector<16x1xf32>
    %147 = vector.broadcast %146 : vector<16x1xf32> to vector<16x32xf32>
    %148 = arith.mulf %143, %147 : vector<16x32xf32>
    %149 = vector.broadcast %129 : vector<1x32xf32> to vector<16x32xf32>
    %150 = arith.mulf %148, %149 : vector<16x32xf32>
    %151 = vector.broadcast %130 : vector<1x32xf32> to vector<16x32xf32>
    %152 = arith.addf %150, %151 : vector<16x32xf32>
    %c0_65 = arith.constant 0 : index
    %c0_66 = arith.constant 0 : index
    %153 = vector.load %arg11[%c0_65, %c0_66] : memref<32x32xf32, #tpu.memory_space<vmem>>, vector<32x32xf32>
    %cst_67 = arith.constant dense<0.000000e+00> : vector<16x32xf32>
    %154 = tpu.matmul %152, %153, %cst_67 {dimension_numbers = #tpu.dot_dimension_numbers<[1], [0], [0], [1], [0, 0, 1, 1], [], []>} : vector<16x32xf32>, vector<32x32xf32>, vector<16x32xf32> -> vector<16x32xf32>
    %c0_68 = arith.constant 0 : index
    %c0_69 = arith.constant 0 : index
    %155 = vector.load %arg14[%c0_68, %c0_69] : memref<1x32xf32, #tpu.memory_space<vmem>>, vector<1x32xf32>
    %156 = vector.broadcast %155 : vector<1x32xf32> to vector<16x32xf32>
    %157 = arith.addf %154, %156 : vector<16x32xf32>
    %c0_70 = arith.constant 0 : index
    %c0_71 = arith.constant 0 : index
    %158 = vector.load %arg12[%c0_70, %c0_71] : memref<32x32xf32, #tpu.memory_space<vmem>>, vector<32x32xf32>
    %cst_72 = arith.constant dense<0.000000e+00> : vector<32x32xf32>
    %159 = tpu.matmul %1, %158, %cst_72 {dimension_numbers = #tpu.dot_dimension_numbers<[1], [0], [0], [1], [0, 0, 1, 1], [], []>} : vector<32x32xf32>, vector<32x32xf32>, vector<32x32xf32> -> vector<32x32xf32>
    %c0_73 = arith.constant 0 : index
    %c0_74 = arith.constant 0 : index
    %160 = vector.load %arg15[%c0_73, %c0_74] : memref<1x32xf32, #tpu.memory_space<vmem>>, vector<1x32xf32>
    %161 = vector.broadcast %160 : vector<1x32xf32> to vector<32x32xf32>
    %162 = arith.addf %159, %161 : vector<32x32xf32>
    %c0_75 = arith.constant 0 : index
    %c0_76 = arith.constant 0 : index
    %163 = vector.load %arg13[%c0_75, %c0_76] : memref<32x32xf32, #tpu.memory_space<vmem>>, vector<32x32xf32>
    %cst_77 = arith.constant dense<0.000000e+00> : vector<32x32xf32>
    %164 = tpu.matmul %1, %163, %cst_77 {dimension_numbers = #tpu.dot_dimension_numbers<[1], [0], [0], [1], [0, 0, 1, 1], [], []>} : vector<32x32xf32>, vector<32x32xf32>, vector<32x32xf32> -> vector<32x32xf32>
    %c0_78 = arith.constant 0 : index
    %c0_79 = arith.constant 0 : index
    %165 = vector.load %arg16[%c0_78, %c0_79] : memref<1x32xf32, #tpu.memory_space<vmem>>, vector<1x32xf32>
    %166 = vector.broadcast %165 : vector<1x32xf32> to vector<32x32xf32>
    %167 = arith.addf %164, %166 : vector<32x32xf32>
    %168 = vector.shape_cast %157 : vector<16x32xf32> to vector<1x16x32xf32>
    %169 = vector.shape_cast %168 : vector<1x16x32xf32> to vector<1x16x32xf32>
    %170 = vector.broadcast %169 : vector<1x16x32xf32> to vector<4x16x32xf32>
    %171 = vector.shape_cast %162 : vector<32x32xf32> to vector<1x32x32xf32>
    %172 = vector.broadcast %171 : vector<1x32x32xf32> to vector<4x32x32xf32>
    %173 = vector.broadcast %2 : vector<4x1x32xf32> to vector<4x32x32xf32>
    %174 = arith.mulf %172, %173 : vector<4x32x32xf32>
    %175 = vector.shape_cast %167 : vector<32x32xf32> to vector<1x32x32xf32>
    %176 = vector.broadcast %175 : vector<1x32x32xf32> to vector<4x32x32xf32>
    %177 = vector.broadcast %2 : vector<4x1x32xf32> to vector<4x32x32xf32>
    %178 = arith.mulf %176, %177 : vector<4x32x32xf32>
    "tpu.trace_start"() <{level = 10 : i32, message = "hqd,hkd->hqk"}> : () -> ()
    %cst_80 = arith.constant dense<0.000000e+00> : vector<4x16x32xf32>
    %179 = tpu.matmul %170, %174, %cst_80 {dimension_numbers = #tpu.dot_dimension_numbers<[2], [2], [1], [1], [0, 0, 0, 1, 1, 1], [0], [0]>} : vector<4x16x32xf32>, vector<4x32x32xf32>, vector<4x16x32xf32> -> vector<4x16x32xf32>
    "tpu.trace_stop"() : () -> ()
    %cst_81 = arith.constant 0.353553385 : f32
    %180 = vector.broadcast %cst_81 : f32 to vector<4x16x32xf32>
    %181 = arith.mulf %179, %180 : vector<4x16x32xf32>
    %182 = vector.shape_cast %78 : vector<16x32xf32> to vector<1x16x32xf32>
    %183 = vector.broadcast %182 : vector<1x16x32xf32> to vector<4x16x32xf32>
    %184 = arith.addf %181, %183 : vector<4x16x32xf32>
    %cst_82 = arith.constant dense<0xFF800000> : vector<4x16xf32>
    %185 = vector.multi_reduction <maximumf>, %184, %cst_82 [2] : vector<4x16x32xf32> to vector<4x16xf32>
    %186 = vector.shape_cast %185 : vector<4x16xf32> to vector<4x16x1xf32>
    %187 = vector.broadcast %186 : vector<4x16x1xf32> to vector<4x16x32xf32>
    %188 = arith.subf %184, %187 : vector<4x16x32xf32>
    %189 = math.exp %188 : vector<4x16x32xf32>
    %cst_83 = arith.constant dense<0.000000e+00> : vector<4x16xf32>
    %190 = vector.multi_reduction <add>, %189, %cst_83 [2] : vector<4x16x32xf32> to vector<4x16xf32>
    %191 = vector.shape_cast %190 : vector<4x16xf32> to vector<4x16x1xf32>
    %192 = tpu.reciprocal %191 {approx = true} : vector<4x16x1xf32> -> vector<4x16x1xf32>
    %193 = vector.broadcast %192 : vector<4x16x1xf32> to vector<4x16x32xf32>
    %194 = arith.mulf %189, %193 : vector<4x16x32xf32>
    "tpu.trace_start"() <{level = 10 : i32, message = "hqk,hkd->hqd"}> : () -> ()
    %cst_84 = arith.constant dense<0.000000e+00> : vector<4x16x32xf32>
    %195 = tpu.matmul %194, %178, %cst_84 {dimension_numbers = #tpu.dot_dimension_numbers<[2], [1], [1], [2], [0, 0, 0, 1, 1, 2], [0], [0]>} : vector<4x16x32xf32>, vector<4x32x32xf32>, vector<4x16x32xf32> -> vector<4x16x32xf32>
    "tpu.trace_stop"() : () -> ()
    %cst_85 = arith.constant dense<0.000000e+00> : vector<16x32xf32>
    %196 = vector.multi_reduction <add>, %195, %cst_85 [0] : vector<4x16x32xf32> to vector<16x32xf32>
    %c0_86 = arith.constant 0 : index
    %c0_87 = arith.constant 0 : index
    %197 = vector.load %arg17[%c0_86, %c0_87] : memref<32x32xf32, #tpu.memory_space<vmem>>, vector<32x32xf32>
    %cst_88 = arith.constant dense<0.000000e+00> : vector<16x32xf32>
    %198 = tpu.matmul %196, %197, %cst_88 {dimension_numbers = #tpu.dot_dimension_numbers<[1], [0], [0], [1], [0, 0, 1, 1], [], []>} : vector<16x32xf32>, vector<32x32xf32>, vector<16x32xf32> -> vector<16x32xf32>
    %c0_89 = arith.constant 0 : index
    %c0_90 = arith.constant 0 : index
    %199 = vector.load %arg18[%c0_89, %c0_90] : memref<1x32xf32, #tpu.memory_space<vmem>>, vector<1x32xf32>
    %200 = vector.broadcast %199 : vector<1x32xf32> to vector<16x32xf32>
    %201 = arith.addf %198, %200 : vector<16x32xf32>
    %202 = arith.addf %152, %201 : vector<16x32xf32>
    %c0_91 = arith.constant 0 : index
    %c0_92 = arith.constant 0 : index
    %203 = vector.load %arg21[%c0_91, %c0_92] : memref<1x32xf32, #tpu.memory_space<vmem>>, vector<1x32xf32>
    %c0_93 = arith.constant 0 : index
    %c0_94 = arith.constant 0 : index
    %204 = vector.load %arg22[%c0_93, %c0_94] : memref<1x32xf32, #tpu.memory_space<vmem>>, vector<1x32xf32>
    %cst_95 = arith.constant dense<0.000000e+00> : vector<16xf32>
    %205 = vector.multi_reduction <add>, %202, %cst_95 [1] : vector<16x32xf32> to vector<16xf32>
    %206 = vector.shape_cast %205 : vector<16xf32> to vector<16x1xf32>
    %cst_96 = arith.constant 3.200000e+01 : f32
    %207 = vector.broadcast %cst_96 : f32 to vector<16x1xf32>
    %208 = arith.divf %206, %207 : vector<16x1xf32>
    %209 = vector.broadcast %208 : vector<16x1xf32> to vector<16x32xf32>
    %210 = arith.subf %202, %209 : vector<16x32xf32>
    %211 = arith.mulf %210, %210 : vector<16x32xf32>
    %cst_97 = arith.constant dense<0.000000e+00> : vector<16xf32>
    %212 = vector.multi_reduction <add>, %211, %cst_97 [1] : vector<16x32xf32> to vector<16xf32>
    %213 = vector.shape_cast %212 : vector<16xf32> to vector<16x1xf32>
    %cst_98 = arith.constant 3.200000e+01 : f32
    %214 = vector.broadcast %cst_98 : f32 to vector<16x1xf32>
    %215 = arith.divf %213, %214 : vector<16x1xf32>
    %216 = vector.broadcast %208 : vector<16x1xf32> to vector<16x32xf32>
    %217 = arith.subf %202, %216 : vector<16x32xf32>
    %cst_99 = arith.constant 9.99999974E-6 : f32
    %218 = vector.broadcast %cst_99 : f32 to vector<16x1xf32>
    %219 = arith.addf %215, %218 : vector<16x1xf32>
    %220 = math.rsqrt %219 : vector<16x1xf32>
    %221 = vector.broadcast %220 : vector<16x1xf32> to vector<16x32xf32>
    %222 = arith.mulf %217, %221 : vector<16x32xf32>
    %223 = vector.broadcast %203 : vector<1x32xf32> to vector<16x32xf32>
    %224 = arith.mulf %222, %223 : vector<16x32xf32>
    %225 = vector.broadcast %204 : vector<1x32xf32> to vector<16x32xf32>
    %226 = arith.addf %224, %225 : vector<16x32xf32>
    %c0_100 = arith.constant 0 : index
    %c0_101 = arith.constant 0 : index
    %227 = vector.load %arg25[%c0_100, %c0_101] : memref<32x2048xf32, #tpu.memory_space<vmem>>, vector<32x2048xf32>
    %cst_102 = arith.constant dense<0.000000e+00> : vector<16x2048xf32>
    %228 = tpu.matmul %226, %227, %cst_102 {dimension_numbers = #tpu.dot_dimension_numbers<[1], [0], [0], [1], [0, 0, 1, 1], [], []>} : vector<16x32xf32>, vector<32x2048xf32>, vector<16x2048xf32> -> vector<16x2048xf32>
    %c0_103 = arith.constant 0 : index
    %c0_104 = arith.constant 0 : index
    %229 = vector.load %arg26[%c0_103, %c0_104] : memref<1x2048xf32, #tpu.memory_space<vmem>>, vector<1x2048xf32>
    %230 = vector.broadcast %229 : vector<1x2048xf32> to vector<16x2048xf32>
    %231 = arith.addf %228, %230 : vector<16x2048xf32>
    %cst_105 = arith.constant 0.000000e+00 : f32
    %232 = vector.broadcast %cst_105 : f32 to vector<16x2048xf32>
    %233 = arith.maximumf %231, %232 : vector<16x2048xf32>
    %c0_106 = arith.constant 0 : index
    %c0_107 = arith.constant 0 : index
    %234 = vector.load %arg27[%c0_106, %c0_107] : memref<2048x32xf32, #tpu.memory_space<vmem>>, vector<2048x32xf32>
    %cst_108 = arith.constant dense<0.000000e+00> : vector<16x32xf32>
    %235 = tpu.matmul %233, %234, %cst_108 {dimension_numbers = #tpu.dot_dimension_numbers<[1], [0], [0], [1], [0, 0, 1, 1], [], []>} : vector<16x2048xf32>, vector<2048x32xf32>, vector<16x32xf32> -> vector<16x32xf32>
    %c0_109 = arith.constant 0 : index
    %c0_110 = arith.constant 0 : index
    %236 = vector.load %arg28[%c0_109, %c0_110] : memref<1x32xf32, #tpu.memory_space<vmem>>, vector<1x32xf32>
    %237 = vector.broadcast %236 : vector<1x32xf32> to vector<16x32xf32>
    %238 = arith.addf %235, %237 : vector<16x32xf32>
    %239 = arith.addf %226, %238 : vector<16x32xf32>
    %c0_111 = arith.constant 0 : index
    %c0_112 = arith.constant 0 : index
    %240 = vector.load %arg23[%c0_111, %c0_112] : memref<1x32xf32, #tpu.memory_space<vmem>>, vector<1x32xf32>
    %c0_113 = arith.constant 0 : index
    %c0_114 = arith.constant 0 : index
    %241 = vector.load %arg24[%c0_113, %c0_114] : memref<1x32xf32, #tpu.memory_space<vmem>>, vector<1x32xf32>
    %cst_115 = arith.constant dense<0.000000e+00> : vector<16xf32>
    %242 = vector.multi_reduction <add>, %239, %cst_115 [1] : vector<16x32xf32> to vector<16xf32>
    %243 = vector.shape_cast %242 : vector<16xf32> to vector<16x1xf32>
    %cst_116 = arith.constant 3.200000e+01 : f32
    %244 = vector.broadcast %cst_116 : f32 to vector<16x1xf32>
    %245 = arith.divf %243, %244 : vector<16x1xf32>
    %246 = vector.broadcast %245 : vector<16x1xf32> to vector<16x32xf32>
    %247 = arith.subf %239, %246 : vector<16x32xf32>
    %248 = arith.mulf %247, %247 : vector<16x32xf32>
    %cst_117 = arith.constant dense<0.000000e+00> : vector<16xf32>
    %249 = vector.multi_reduction <add>, %248, %cst_117 [1] : vector<16x32xf32> to vector<16xf32>
    %250 = vector.shape_cast %249 : vector<16xf32> to vector<16x1xf32>
    %cst_118 = arith.constant 3.200000e+01 : f32
    %251 = vector.broadcast %cst_118 : f32 to vector<16x1xf32>
    %252 = arith.divf %250, %251 : vector<16x1xf32>
    %253 = vector.broadcast %245 : vector<16x1xf32> to vector<16x32xf32>
    %254 = arith.subf %239, %253 : vector<16x32xf32>
    %cst_119 = arith.constant 9.99999974E-6 : f32
    %255 = vector.broadcast %cst_119 : f32 to vector<16x1xf32>
    %256 = arith.addf %252, %255 : vector<16x1xf32>
    %257 = math.rsqrt %256 : vector<16x1xf32>
    %258 = vector.broadcast %257 : vector<16x1xf32> to vector<16x32xf32>
    %259 = arith.mulf %254, %258 : vector<16x32xf32>
    %260 = vector.broadcast %240 : vector<1x32xf32> to vector<16x32xf32>
    %261 = arith.mulf %259, %260 : vector<16x32xf32>
    %262 = vector.broadcast %241 : vector<1x32xf32> to vector<16x32xf32>
    %263 = arith.addf %261, %262 : vector<16x32xf32>
    %c0_120 = arith.constant 0 : index
    %c0_121 = arith.constant 0 : index
    %264 = vector.load %arg29[%c0_120, %c0_121] : memref<16x32xf32, #tpu.memory_space<vmem>>, vector<16x32xf32>
    tpu.vector_store %arg29[%c0_120, %c0_121], %263 {strides = array<i32>} : memref<16x32xf32, #tpu.memory_space<vmem>>, vector<16x32xf32>,
    return
  }
}

</mosaic_0001>

<llo_original>
// kernel: decoder_forward.1
$region0: #{decoder_forward.1}
  #allocation0 [shape = 'u32[]', space=smem, size = 0x4, offset = 0x4, fixed_abs, tag = 'smem constant byte address 0x4 - core index']
  #allocation1 [shape = 'u32[144,128]{1,0:T(1,128)}', space=vmem, size = 0x12000, scoped, tag = 'internal scratch']
  %s0 = inlined_call_operand.smem [shape: u32[30], index: -1, kind: input, shape index: {}]
  %s1 = sld [smem:[%s0]]
  %s2 = scalar_lea.smem %s0, 1
  %s3 = sld [smem:[%s2]]
  %s4 = scalar_lea.smem %s0, 2
  %s5 = sld [smem:[%s4]]
  %s6 = scalar_lea.smem %s0, 3
  %s7 = sld [smem:[%s6]]
  %s8 = scalar_lea.smem %s0, 4
  %s9 = sld [smem:[%s8]]
  %s10 = scalar_lea.smem %s0, 5
  %s11 = sld [smem:[%s10]]
  %s12 = scalar_lea.smem %s0, 6
  %s13 = sld [smem:[%s12]]
  %s14 = scalar_lea.smem %s0, 7
  %s15 = sld [smem:[%s14]]
  %s16 = scalar_lea.smem %s0, 8
  %s17 = sld [smem:[%s16]]
  %s18 = scalar_lea.smem %s0, 9
  %s19 = sld [smem:[%s18]]
  %s20 = scalar_lea.smem %s0, 10
  %s21 = sld [smem:[%s20]]
  %s22 = scalar_lea.smem %s0, 11
  %s23 = sld [smem:[%s22]]
  %s24 = scalar_lea.smem %s0, 12
  %s25 = sld [smem:[%s24]]
  %s26 = scalar_lea.smem %s0, 13
  %s27 = sld [smem:[%s26]]
  %s28 = scalar_lea.smem %s0, 14
  %s29 = sld [smem:[%s28]]
  %s30 = scalar_lea.smem %s0, 15
  %s31 = sld [smem:[%s30]]
  %s32 = scalar_lea.smem %s0, 16
  %s33 = sld [smem:[%s32]]
  %s34 = scalar_lea.smem %s0, 17
  %s35 = sld [smem:[%s34]]
  %s36 = scalar_lea.smem %s0, 18
  %s37 = sld [smem:[%s36]]
  %s38 = scalar_lea.smem %s0, 19
  %s39 = sld [smem:[%s38]]
  %s40 = scalar_lea.smem %s0, 20
  %s41 = sld [smem:[%s40]]
  %s42 = scalar_lea.smem %s0, 21
  %s43 = sld [smem:[%s42]]
  %s44 = scalar_lea.smem %s0, 22
  %s45 = sld [smem:[%s44]]
  %s46 = scalar_lea.smem %s0, 23
  %s47 = sld [smem:[%s46]]
  %s48 = scalar_lea.smem %s0, 24
  %s49 = sld [smem:[%s48]]
  %s50 = scalar_lea.smem %s0, 25
  %s51 = sld [smem:[%s50]]
  %s52 = scalar_lea.smem %s0, 26
  %s53 = sld [smem:[%s52]]
  %s54 = scalar_lea.smem %s0, 27
  %s55 = sld [smem:[%s54]]
  %s56 = scalar_lea.smem %s0, 28
  %s57 = sld [smem:[%s56]]
  %s58 = scalar_lea.smem %s0, 29
  %s59 = sld [smem:[%s58]]
  %s60 = sld [smem:[#allocation0]]
  $region126: #{decoder_forward.1} parent=0
    _
  %s62 = ssub.s32 1, %s60
  %s63 = scalar_select 0, %s62, %s60
  $region1: #{decoder_forward.1} parent=0
    #allocation2 [shape = 'u8[8192]{0}', space=vmem, size = 0x2000, scoped, tag = 'output window, operand 0, single buffered']
    #allocation3 [shape = 's32[1]{0}', space=sflag, size = 0x4, scoped, tag = 'scoped memory for decoder_forward.1']
    %64 = vsyncpa [#allocation3], 0
    // Predicated region
    $region2: #{decoder_forward.1} parent=1 // pred_check
      _
    $region3: #{decoder_forward.1} parent=1 // pred_check_branch
      %66 = sbr.rel (0) target = $region5
    $region4: #{decoder_forward.1} parent=1 // pred_region
      _
    $region5: #{decoder_forward.1} parent=1 // pred_fallthru
      _
    // Predicated region
    $region6: #{decoder_forward.1} parent=1 // pred_check
      _
    $region7: #{decoder_forward.1} parent=1 // pred_check_branch
      %68 = sbr.rel (0) target = $region9
    $region8: #{decoder_forward.1} parent=1 // pred_region
      _
    $region9: #{decoder_forward.1} parent=1 // pred_fallthru
      _
    // Predicated region
    $region10: #{decoder_forward.1} parent=1 // pred_check
      _
    $region11: #{decoder_forward.1} parent=1 // pred_check_branch
      %70 = sbr.rel (0) target = $region13
    $region12: #{decoder_forward.1} parent=1 // pred_region
      _
    $region13: #{decoder_forward.1} parent=1 // pred_fallthru
      _
    // Predicated region
    $region14: #{decoder_forward.1} parent=1 // pred_check
      _
    $region15: #{decoder_forward.1} parent=1 // pred_check_branch
      %72 = sbr.rel (0) target = $region17
    $region16: #{decoder_forward.1} parent=1 // pred_region
      _
    $region17: #{decoder_forward.1} parent=1 // pred_fallthru
      _
    // Predicated region
    $region18: #{decoder_forward.1} parent=1 // pred_check
      _
    $region19: #{decoder_forward.1} parent=1 // pred_check_branch
      %74 = sbr.rel (0) target = $region21
    $region20: #{decoder_forward.1} parent=1 // pred_region
      _
    $region21: #{decoder_forward.1} parent=1 // pred_fallthru
      _
    // Predicated region
    $region22: #{decoder_forward.1} parent=1 // pred_check
      _
    $region23: #{decoder_forward.1} parent=1 // pred_check_branch
      %76 = sbr.rel (0) target = $region25
    $region24: #{decoder_forward.1} parent=1 // pred_region
      _
    $region25: #{decoder_forward.1} parent=1 // pred_fallthru
      _
    // Predicated region
    $region26: #{decoder_forward.1} parent=1 // pred_check
      _
    $region27: #{decoder_forward.1} parent=1 // pred_check_branch
      %78 = sbr.rel (0) target = $region29
    $region28: #{decoder_forward.1} parent=1 // pred_region
      _
    $region29: #{decoder_forward.1} parent=1 // pred_fallthru
      _
    // Predicated region
    $region30: #{decoder_forward.1} parent=1 // pred_check
      _
    $region31: #{decoder_forward.1} parent=1 // pred_check_branch
      %80 = sbr.rel (0) target = $region33
    $region32: #{decoder_forward.1} parent=1 // pred_region
      _
    $region33: #{decoder_forward.1} parent=1 // pred_fallthru
      _
    // Predicated region
    $region34: #{decoder_forward.1} parent=1 // pred_check
      _
    $region35: #{decoder_forward.1} parent=1 // pred_check_branch
      %82 = sbr.rel (0) target = $region37
    $region36: #{decoder_forward.1} parent=1 // pred_region
      _
    $region37: #{decoder_forward.1} parent=1 // pred_fallthru
      _
    // Predicated region
    $region38: #{decoder_forward.1} parent=1 // pred_check
      _
    $region39: #{decoder_forward.1} parent=1 // pred_check_branch
      %84 = sbr.rel (0) target = $region41
    $region40: #{decoder_forward.1} parent=1 // pred_region
      _
    $region41: #{decoder_forward.1} parent=1 // pred_fallthru
      _
    // Predicated region
    $region42: #{decoder_forward.1} parent=1 // pred_check
      _
    $region43: #{decoder_forward.1} parent=1 // pred_check_branch
      %86 = sbr.rel (0) target = $region45
    $region44: #{decoder_forward.1} parent=1 // pred_region
      _
    $region45: #{decoder_forward.1} parent=1 // pred_fallthru
      _
    // Predicated region
    $region46: #{decoder_forward.1} parent=1 // pred_check
      _
    $region47: #{decoder_forward.1} parent=1 // pred_check_branch
      %88 = sbr.rel (0) target = $region49
    $region48: #{decoder_forward.1} parent=1 // pred_region
      _
    $region49: #{decoder_forward.1} parent=1 // pred_fallthru
      _
    // Predicated region
    $region50: #{decoder_forward.1} parent=1 // pred_check
      _
    $region51: #{decoder_forward.1} parent=1 // pred_check_branch
      %90 = sbr.rel (0) target = $region53
    $region52: #{decoder_forward.1} parent=1 // pred_region
      _
    $region53: #{decoder_forward.1} parent=1 // pred_fallthru
      _
    // Predicated region
    $region54: #{decoder_forward.1} parent=1 // pred_check
      _
    $region55: #{decoder_forward.1} parent=1 // pred_check_branch
      %92 = sbr.rel (0) target = $region57
    $region56: #{decoder_forward.1} parent=1 // pred_region
      _
    $region57: #{decoder_forward.1} parent=1 // pred_fallthru
      _
    // Predicated region
    $region58: #{decoder_forward.1} parent=1 // pred_check
      _
    $region59: #{decoder_forward.1} parent=1 // pred_check_branch
      %94 = sbr.rel (0) target = $region61
    $region60: #{decoder_forward.1} parent=1 // pred_region
      _
    $region61: #{decoder_forward.1} parent=1 // pred_fallthru
      _
    // Predicated region
    $region62: #{decoder_forward.1} parent=1 // pred_check
      _
    $region63: #{decoder_forward.1} parent=1 // pred_check_branch
      %96 = sbr.rel (0) target = $region65
    $region64: #{decoder_forward.1} parent=1 // pred_region
      _
    $region65: #{decoder_forward.1} parent=1 // pred_fallthru
      _
    // Predicated region
    $region66: #{decoder_forward.1} parent=1 // pred_check
      _
    $region67: #{decoder_forward.1} parent=1 // pred_check_branch
      %98 = sbr.rel (0) target = $region69
    $region68: #{decoder_forward.1} parent=1 // pred_region
      _
    $region69: #{decoder_forward.1} parent=1 // pred_fallthru
      _
    // Predicated region
    $region70: #{decoder_forward.1} parent=1 // pred_check
      _
    $region71: #{decoder_forward.1} parent=1 // pred_check_branch
      %100 = sbr.rel (0) target = $region73
    $region72: #{decoder_forward.1} parent=1 // pred_region
      _
    $region73: #{decoder_forward.1} parent=1 // pred_fallthru
      _
    // Predicated region
    $region74: #{decoder_forward.1} parent=1 // pred_check
      _
    $region75: #{decoder_forward.1} parent=1 // pred_check_branch
      %102 = sbr.rel (0) target = $region77
    $region76: #{decoder_forward.1} parent=1 // pred_region
      _
    $region77: #{decoder_forward.1} parent=1 // pred_fallthru
      _
    // Predicated region
    $region78: #{decoder_forward.1} parent=1 // pred_check
      _
    $region79: #{decoder_forward.1} parent=1 // pred_check_branch
      %104 = sbr.rel (0) target = $region81
    $region80: #{decoder_forward.1} parent=1 // pred_region
      _
    $region81: #{decoder_forward.1} parent=1 // pred_fallthru
      _
    // Predicated region
    $region82: #{decoder_forward.1} parent=1 // pred_check
      _
    $region83: #{decoder_forward.1} parent=1 // pred_check_branch
      %106 = sbr.rel (0) target = $region85
    $region84: #{decoder_forward.1} parent=1 // pred_region
      _
    $region85: #{decoder_forward.1} parent=1 // pred_fallthru
      _
    // Predicated region
    $region86: #{decoder_forward.1} parent=1 // pred_check
      _
    $region87: #{decoder_forward.1} parent=1 // pred_check_branch
      %108 = sbr.rel (0) target = $region89
    $region88: #{decoder_forward.1} parent=1 // pred_region
      _
    $region89: #{decoder_forward.1} parent=1 // pred_fallthru
      _
    // Predicated region
    $region90: #{decoder_forward.1} parent=1 // pred_check
      _
    $region91: #{decoder_forward.1} parent=1 // pred_check_branch
      %110 = sbr.rel (0) target = $region93
    $region92: #{decoder_forward.1} parent=1 // pred_region
      _
    $region93: #{decoder_forward.1} parent=1 // pred_fallthru
      _
    // Predicated region
    $region94: #{decoder_forward.1} parent=1 // pred_check
      _
    $region95: #{decoder_forward.1} parent=1 // pred_check_branch
      %112 = sbr.rel (0) target = $region97
    $region96: #{decoder_forward.1} parent=1 // pred_region
      _
    $region97: #{decoder_forward.1} parent=1 // pred_fallthru
      _
    // Predicated region
    $region98: #{decoder_forward.1} parent=1 // pred_check
      _
    $region99: #{decoder_forward.1} parent=1 // pred_check_branch
      %114 = sbr.rel (0) target = $region101
    $region100: #{decoder_forward.1} parent=1 // pred_region
      _
    $region101: #{decoder_forward.1} parent=1 // pred_fallthru
      _
    // Predicated region
    $region102: #{decoder_forward.1} parent=1 // pred_check
      _
    $region103: #{decoder_forward.1} parent=1 // pred_check_branch
      %116 = sbr.rel (0) target = $region105
    $region104: #{decoder_forward.1} parent=1 // pred_region
      _
    $region105: #{decoder_forward.1} parent=1 // pred_fallthru
      _
    // Predicated region
    $region106: #{decoder_forward.1} parent=1 // pred_check
      _
    $region107: #{decoder_forward.1} parent=1 // pred_check_branch
      %118 = sbr.rel (0) target = $region109
    $region108: #{decoder_forward.1} parent=1 // pred_region
      _
    $region109: #{decoder_forward.1} parent=1 // pred_fallthru
      _
    // Predicated region
    $region110: #{decoder_forward.1} parent=1 // pred_check
      _
    $region111: #{decoder_forward.1} parent=1 // pred_check_branch
      %120 = sbr.rel (0) target = $region113
    $region112: #{decoder_forward.1} parent=1 // pred_region
      _
    $region113: #{decoder_forward.1} parent=1 // pred_fallthru
      _
    // Predicated region
    $region114: #{decoder_forward.1} parent=1 // pred_check
      _
    $region115: #{decoder_forward.1} parent=1 // pred_check_branch
      %122 = sbr.rel (0) target = $region117
    $region116: #{decoder_forward.1} parent=1 // pred_region
      _
    $region117: #{decoder_forward.1} parent=1 // pred_fallthru
      _
    %v123 = vld [vmem:[%s1] sm:$0xff]
    %v124 = vld [vmem:[%s1 + $0x8] sm:$0xff]
    %v125 = vld [vmem:[%s3] sm:$0xff]
    %v126 = vld [vmem:[%s3 + $0x8] sm:$0xff]
    %v127 = vld [vmem:[%s3 + $0x10] sm:$0xff]
    %v128 = vld [vmem:[%s3 + $0x18] sm:$0xff]
    %v129 = vld [vmem:[%s5] sm:$0x1]
    %v130 = vld [vmem:[%s5 + $0x1] sm:$0x1]
    %v131 = vld [vmem:[%s5 + $0x2] sm:$0x1]
    %v132 = vld [vmem:[%s5 + $0x3] sm:$0x1]
    %v133 = vlaneseq
    %v134 = vshrl.u32 %v133, 7
    %v135 = vadd.s32 %v134, 8
    %vm136 = vcmp.lt.s32.totalorder %v134, 0
    %v137 = vsub.s32 0, %v134
    %v138 = vsel %vm136, %v137, %v134
    %v139 = vshrl.u32 %v138, 1
    %v140 = vand.u32 %v138, 1
    %v141 = vsub.s32 0, %v140
    %v142 = vsel %vm136, %v141, %v140
    %vm143 = vcmp.lt.s32.totalorder %v135, 0
    %v144 = vsub.s32 0, %v135
    %v145 = vsel %vm143, %v144, %v135
    %v146 = vshrl.u32 %v145, 1
    %v147 = vand.u32 %v145, 1
    %v148 = vsub.s32 0, %v147
    %v149 = vsel %vm143, %v148, %v147
    %vm150 = vcmp.ne.s32.totalorder %v142, 0
    %vm151 = vcmp.ne.s32.totalorder %v149, 0
    %vm152 = vcmp.lt.s32.totalorder %v142, 0
    %vm153 = vcmp.lt.s32.totalorder %v149, 0
    %vm154 = vmand %vm152, %vm150
    %vm155 = vmand %vm153, %vm151
    %v156 = vadd.s32 %v142, 2
    %v157 = vadd.s32 %v149, 2
    %v158 = vsel %vm154, %v156, %v142
    %v159 = vsel %vm155, %v157, %v149
    %v160 = vlaneseq
    %v161 = vand.u32 %v160, 127
    %vm162 = vcmp.lt.s32.totalorder %v161, 0
    %v163 = vsub.s32 0, %v161
    %v164 = vsel %vm162, %v163, %v161
    %v165 = vshrl.u32 %v164, 1
    %v166 = vand.u32 %v164, 1
    %v167 = vsub.s32 0, %v166
    %v168 = vsel %vm162, %v167, %v166
    %vm169 = vcmp.ne.s32.totalorder %v168, 0
    %vm170 = vcmp.lt.s32.totalorder %v168, 0
    %vm171 = vmand %vm170, %vm169
    %v172 = vadd.s32 %v168, 2
    %v173 = vsel %vm171, %v172, %v168
    %vm174 = vcmp.eq.s32.totalorder %v158, %v173
    %vm175 = vcmp.eq.s32.totalorder %v159, %v173
    %v176 = vsel %vm174, 0.0, -1e+30
    %v177 = vsel %vm175, 0.0, -1e+30
    %v178 = vld [vmem:[%s7] sm:$0xff]
    %v179 = vld [vmem:[%s7 + $0x8] sm:$0xff]
    %v180 = vld [vmem:[%s7 + $0x10] sm:$0xff]
    %v181 = vld [vmem:[%s7 + $0x18] sm:$0xff]
    %v182 = vld [vmem:[%s13] sm:$0x1]
    %v184 = vlaneseq
    %v185 = vshrl.u32 %v184, 7
    %v186 = vsub.s32 0, %v185
    %v187 = vrot.slane %v182, %v186
    %vm189 = vcmask 261120
    %v191 = vsel %vm189, %v123, 0
    %v194 = vsel %vm189, %v124, 0
    %196 = vmatprep.subr.mxu0 0.0
    %197 = vmatpush1.msra.mxu0 %v178
    %198 = vmatprep.subr.mxu0 0.0
    %199 = vmatpush1.msra.mxu0 %v179
    %200 = vmatprep.subr.mxu0 0.0
    %201 = vmatpush1.msra.mxu0 %v180
    %202 = vmatprep.subr.mxu0 0.0
    %203 = vmatpush1.msra.mxu0 %v181
    %204 = vmatprep.subr.mxu0 0.0
    %205 = vmatpush1.msra.mxu0 0.0
    %206 = vmatprep.subr.mxu0 0.0
    %207 = vmatpush1.msra.mxu0 0.0
    %208 = vmatprep.subr.mxu0 0.0
    %209 = vmatpush1.msra.mxu0 0.0
    %210 = vmatprep.subr.mxu0 0.0
    %211 = vmatpush1.msra.mxu0 0.0
    %212 = vmatprep.subr.mxu0 0.0
    %213 = vmatpush1.msra.mxu0 0.0
    %214 = vmatprep.subr.mxu0 0.0
    %215 = vmatpush1.msra.mxu0 0.0
    %216 = vmatprep.subr.mxu0 0.0
    %217 = vmatpush1.msra.mxu0 0.0
    %218 = vmatprep.subr.mxu0 0.0
    %219 = vmatpush1.msra.mxu0 0.0
    %220 = vmatprep.subr.mxu0 0.0
    %221 = vmatpush1.msra.mxu0 0.0
    %222 = vmatprep.subr.mxu0 0.0
    %223 = vmatpush1.msra.mxu0 0.0
    %224 = vmatprep.subr.mxu0 0.0
    %225 = vmatpush1.msra.mxu0 0.0
    %226 = vmatprep.subr.mxu0 0.0
    %227 = vmatpush1.msra.mxu0 0.0
    %228 = vmatprep.subr.mxu0 0.0
    %229 = vmatpush1.msra.mxu0 0.0
    %230 = vmatprep.subr.mxu0 0.0
    %231 = vmatpush1.msra.mxu0 0.0
    %232 = vmatprep.subr.mxu0 0.0
    %233 = vmatpush1.msra.mxu0 0.0
    %234 = vmatprep.subr.mxu0 0.0
    %235 = vmatpush1.msra.mxu0 0.0
    %236 = vmatprep.subr.mxu0 0.0
    %237 = vmatpush1.msra.mxu0 0.0
    %238 = vmatprep.subr.mxu0 0.0
    %239 = vmatpush1.msra.mxu0 0.0
    %240 = vmatprep.subr.mxu0 0.0
    %241 = vmatpush1.msra.mxu0 0.0
    %242 = vmatprep.subr.mxu0 0.0
    %243 = vmatpush1.msra.mxu0 0.0
    %244 = vmatprep.subr.mxu0 0.0
    %245 = vmatpush1.msra.mxu0 0.0
    %246 = vmatprep.subr.mxu0 0.0
    %247 = vmatpush1.msra.mxu0 0.0
    %248 = vmatprep.subr.mxu0 0.0
    %249 = vmatpush1.msra.mxu0 0.0
    %250 = vmatprep.subr.mxu0 0.0
    %251 = vmatpush1.msra.mxu0 0.0
    %252 = vmatprep.subr.mxu0 0.0
    %253 = vmatpush1.msra.mxu0 0.0
    %254 = vmatprep.subr.mxu0 0.0
    %255 = vmatpush1.msra.mxu0 0.0
    %256 = vmatprep.subr.mxu0 0.0
    %257 = vmatpush1.msra.mxu0 0.0
    %258 = vmatprep.subr.mxu0 0.0
    %259 = vmatpush1.msra.mxu0 0.0
    %260 = vmatprep.mubr.f32.mxu0 0.0
    %261 = vmatmul.mubr.f32.gmra.mrb[0].mxu0 %v191
    %v262 = vpop.f32.mrb[0].mxu0
    %v263 = vadd.f32 %v187, %v262
    %v264 = vpop.f32.mrb[0].mxu0
    %265 = vmatprep.mubr.f32.mxu0 0.0
    %266 = vmatmul.mubr.f32.gmra.mrb[0].mxu0 %v194
    %v267 = vpop.f32.mrb[0].mxu0
    %v268 = vadd.f32 %v187, %v267
    %v269 = vpop.f32.mrb[0].mxu0
    %270 = vdwg.mxu0
    %v271 = vld [vmem:[%s9] sm:$0xff]
    %v272 = vld [vmem:[%s9 + $0x8] sm:$0xff]
    %v273 = vld [vmem:[%s9 + $0x10] sm:$0xff]
    %v274 = vld [vmem:[%s9 + $0x18] sm:$0xff]
    %v275 = vld [vmem:[%s15] sm:$0x1]
    %v277 = vlaneseq
    %v278 = vshrl.u32 %v277, 7
    %v279 = vsub.s32 0, %v278
    %v280 = vrot.slane %v275, %v279
    %282 = vmatprep.subr.mxu0 0.0
    %283 = vmatpush1.msra.mxu0 %v271
    %284 = vmatprep.subr.mxu0 0.0
    %285 = vmatpush1.msra.mxu0 %v272
    %286 = vmatprep.subr.mxu0 0.0
    %287 = vmatpush1.msra.mxu0 %v273
    %288 = vmatprep.subr.mxu0 0.0
    %289 = vmatpush1.msra.mxu0 %v274
    %290 = vmatprep.subr.mxu0 0.0
    %291 = vmatpush1.msra.mxu0 0.0
    %292 = vmatprep.subr.mxu0 0.0
    %293 = vmatpush1.msra.mxu0 0.0
    %294 = vmatprep.subr.mxu0 0.0
    %295 = vmatpush1.msra.mxu0 0.0
    %296 = vmatprep.subr.mxu0 0.0
    %297 = vmatpush1.msra.mxu0 0.0
    %298 = vmatprep.subr.mxu0 0.0
    %299 = vmatpush1.msra.mxu0 0.0
    %300 = vmatprep.subr.mxu0 0.0
    %301 = vmatpush1.msra.mxu0 0.0
    %302 = vmatprep.subr.mxu0 0.0
    %303 = vmatpush1.msra.mxu0 0.0
    %304 = vmatprep.subr.mxu0 0.0
    %305 = vmatpush1.msra.mxu0 0.0
    %306 = vmatprep.subr.mxu0 0.0
    %307 = vmatpush1.msra.mxu0 0.0
    %308 = vmatprep.subr.mxu0 0.0
    %309 = vmatpush1.msra.mxu0 0.0
    %310 = vmatprep.subr.mxu0 0.0
    %311 = vmatpush1.msra.mxu0 0.0
    %312 = vmatprep.subr.mxu0 0.0
    %313 = vmatpush1.msra.mxu0 0.0
    %314 = vmatprep.subr.mxu0 0.0
    %315 = vmatpush1.msra.mxu0 0.0
    %316 = vmatprep.subr.mxu0 0.0
    %317 = vmatpush1.msra.mxu0 0.0
    %318 = vmatprep.subr.mxu0 0.0
    %319 = vmatpush1.msra.mxu0 0.0
    %320 = vmatprep.subr.mxu0 0.0
    %321 = vmatpush1.msra.mxu0 0.0
    %322 = vmatprep.subr.mxu0 0.0
    %323 = vmatpush1.msra.mxu0 0.0
    %324 = vmatprep.subr.mxu0 0.0
    %325 = vmatpush1.msra.mxu0 0.0
    %326 = vmatprep.subr.mxu0 0.0
    %327 = vmatpush1.msra.mxu0 0.0
    %328 = vmatprep.subr.mxu0 0.0
    %329 = vmatpush1.msra.mxu0 0.0
    %330 = vmatprep.subr.mxu0 0.0
    %331 = vmatpush1.msra.mxu0 0.0
    %332 = vmatprep.subr.mxu0 0.0
    %333 = vmatpush1.msra.mxu0 0.0
    %334 = vmatprep.subr.mxu0 0.0
    %335 = vmatpush1.msra.mxu0 0.0
    %336 = vmatprep.subr.mxu0 0.0
    %337 = vmatpush1.msra.mxu0 0.0
    %338 = vmatprep.subr.mxu0 0.0
    %339 = vmatpush1.msra.mxu0 0.0
    %340 = vmatprep.subr.mxu0 0.0
    %341 = vmatpush1.msra.mxu0 0.0
    %342 = vmatprep.subr.mxu0 0.0
    %343 = vmatpush1.msra.mxu0 0.0
    %344 = vmatprep.subr.mxu0 0.0
    %345 = vmatpush1.msra.mxu0 0.0
    %346 = vmatprep.mubr.f32.mxu0 0.0
    %347 = vmatmul.mubr.f32.gmra.mrb[0].mxu0 %v191
    %v348 = vpop.f32.mrb[0].mxu0
    %v349 = vadd.f32 %v280, %v348
    %v350 = vpop.f32.mrb[0].mxu0
    %351 = vmatprep.mubr.f32.mxu0 0.0
    %352 = vmatmul.mubr.f32.gmra.mrb[0].mxu0 %v194
    %v353 = vpop.f32.mrb[0].mxu0
    %v354 = vadd.f32 %v280, %v353
    %v355 = vpop.f32.mrb[0].mxu0
    %356 = vdwg.mxu0
    %v357 = vld [vmem:[%s11] sm:$0xff]
    %v358 = vld [vmem:[%s11 + $0x8] sm:$0xff]
    %v359 = vld [vmem:[%s11 + $0x10] sm:$0xff]
    %v360 = vld [vmem:[%s11 + $0x18] sm:$0xff]
    %v361 = vld [vmem:[%s17] sm:$0x1]
    %v363 = vlaneseq
    %v364 = vshrl.u32 %v363, 7
    %v365 = vsub.s32 0, %v364
    %v366 = vrot.slane %v361, %v365
    %368 = vmatprep.subr.mxu0 0.0
    %369 = vmatpush1.msra.mxu0 %v357
    %370 = vmatprep.subr.mxu0 0.0
    %371 = vmatpush1.msra.mxu0 %v358
    %372 = vmatprep.subr.mxu0 0.0
    %373 = vmatpush1.msra.mxu0 %v359
    %374 = vmatprep.subr.mxu0 0.0
    %375 = vmatpush1.msra.mxu0 %v360
    %376 = vmatprep.subr.mxu0 0.0
    %377 = vmatpush1.msra.mxu0 0.0
    %378 = vmatprep.subr.mxu0 0.0
    %379 = vmatpush1.msra.mxu0 0.0
    %380 = vmatprep.subr.mxu0 0.0
    %381 = vmatpush1.msra.mxu0 0.0
    %382 = vmatprep.subr.mxu0 0.0
    %383 = vmatpush1.msra.mxu0 0.0
    %384 = vmatprep.subr.mxu0 0.0
    %385 = vmatpush1.msra.mxu0 0.0
    %386 = vmatprep.subr.mxu0 0.0
    %387 = vmatpush1.msra.mxu0 0.0
    %388 = vmatprep.subr.mxu0 0.0
    %389 = vmatpush1.msra.mxu0 0.0
    %390 = vmatprep.subr.mxu0 0.0
    %391 = vmatpush1.msra.mxu0 0.0
    %392 = vmatprep.subr.mxu0 0.0
    %393 = vmatpush1.msra.mxu0 0.0
    %394 = vmatprep.subr.mxu0 0.0
    %395 = vmatpush1.msra.mxu0 0.0
    %396 = vmatprep.subr.mxu0 0.0
    %397 = vmatpush1.msra.mxu0 0.0
    %398 = vmatprep.subr.mxu0 0.0
    %399 = vmatpush1.msra.mxu0 0.0
    %400 = vmatprep.subr.mxu0 0.0
    %401 = vmatpush1.msra.mxu0 0.0
    %402 = vmatprep.subr.mxu0 0.0
    %403 = vmatpush1.msra.mxu0 0.0
    %404 = vmatprep.subr.mxu0 0.0
    %405 = vmatpush1.msra.mxu0 0.0
    %406 = vmatprep.subr.mxu0 0.0
    %407 = vmatpush1.msra.mxu0 0.0
    %408 = vmatprep.subr.mxu0 0.0
    %409 = vmatpush1.msra.mxu0 0.0
    %410 = vmatprep.subr.mxu0 0.0
    %411 = vmatpush1.msra.mxu0 0.0
    %412 = vmatprep.subr.mxu0 0.0
    %413 = vmatpush1.msra.mxu0 0.0
    %414 = vmatprep.subr.mxu0 0.0
    %415 = vmatpush1.msra.mxu0 0.0
    %416 = vmatprep.subr.mxu0 0.0
    %417 = vmatpush1.msra.mxu0 0.0
    %418 = vmatprep.subr.mxu0 0.0
    %419 = vmatpush1.msra.mxu0 0.0
    %420 = vmatprep.subr.mxu0 0.0
    %421 = vmatpush1.msra.mxu0 0.0
    %422 = vmatprep.subr.mxu0 0.0
    %423 = vmatpush1.msra.mxu0 0.0
    %424 = vmatprep.subr.mxu0 0.0
    %425 = vmatpush1.msra.mxu0 0.0
    %426 = vmatprep.subr.mxu0 0.0
    %427 = vmatpush1.msra.mxu0 0.0
    %428 = vmatprep.subr.mxu0 0.0
    %429 = vmatpush1.msra.mxu0 0.0
    %430 = vmatprep.subr.mxu0 0.0
    %431 = vmatpush1.msra.mxu0 0.0
    %432 = vmatprep.mubr.f32.mxu0 0.0
    %433 = vmatmul.mubr.f32.gmra.mrb[0].mxu0 %v191
    %v434 = vpop.f32.mrb[0].mxu0
    %v435 = vadd.f32 %v366, %v434
    %v436 = vpop.f32.mrb[0].mxu0
    %437 = vmatprep.mubr.f32.mxu0 0.0
    %438 = vmatmul.mubr.f32.gmra.mrb[0].mxu0 %v194
    %v439 = vpop.f32.mrb[0].mxu0
    %v440 = vadd.f32 %v366, %v439
    %v441 = vpop.f32.mrb[0].mxu0
    %442 = vdwg.mxu0
    %v447 = vlaneseq
    %v448 = vshrl.u32 %v447, 7
    %v449 = vsub.s32 0, %v448
    %v450 = vrot.slane %v129, %v449
    %v451 = vlaneseq
    %v452 = vshrl.u32 %v451, 7
    %v453 = vsub.s32 0, %v452
    %v454 = vrot.slane %v130, %v453
    %v455 = vlaneseq
    %v456 = vshrl.u32 %v455, 7
    %v457 = vsub.s32 0, %v456
    %v458 = vrot.slane %v131, %v457
    %v459 = vlaneseq
    %v460 = vshrl.u32 %v459, 7
    %v461 = vsub.s32 0, %v460
    %v462 = vrot.slane %v132, %v461
    %v467 = vmul.f32 %v349, %v450
    %v468 = vmul.f32 %v354, %v450
    %v469 = vmul.f32 %v349, %v454
    %v470 = vmul.f32 %v354, %v454
    %v471 = vmul.f32 %v349, %v458
    %v472 = vmul.f32 %v354, %v458
    %v473 = vmul.f32 %v349, %v462
    %v474 = vmul.f32 %v354, %v462
    %v475 = vmul.f32 %v435, %v450
    %v476 = vmul.f32 %v440, %v450
    %v477 = vmul.f32 %v435, %v454
    %v478 = vmul.f32 %v440, %v454
    %v479 = vmul.f32 %v435, %v458
    %v480 = vmul.f32 %v440, %v458
    %v481 = vmul.f32 %v435, %v462
    %v482 = vmul.f32 %v440, %v462
    %v484 = vsel %vm189, %v263, 0
    %v487 = vsel %vm189, %v268, 0
    %v490 = vsel %vm189, %v467, 0
    %v493 = vsel %vm189, %v468, 0
    %495 = vmatprep.subr.mxu0 0.0
    %496 = vmatpush1.xpose.msra.mxu0 %v490
    %497 = vmatprep.subr.mxu0 0.0
    %498 = vmatpush1.xpose.msra.mxu0 %v493
    %499 = vmatprep.subr.mxu0 0.0
    %500 = vmatpush1.xpose.msra.mxu0 0.0
    %501 = vmatprep.subr.mxu0 0.0
    %502 = vmatpush1.xpose.msra.mxu0 0.0
    %503 = vmatprep.subr.mxu0 0.0
    %504 = vmatpush1.xpose.msra.mxu0 0.0
    %505 = vmatprep.subr.mxu0 0.0
    %506 = vmatpush1.xpose.msra.mxu0 0.0
    %507 = vmatprep.subr.mxu0 0.0
    %508 = vmatpush1.xpose.msra.mxu0 0.0
    %509 = vmatprep.subr.mxu0 0.0
    %510 = vmatpush1.xpose.msra.mxu0 0.0
    %511 = vmatprep.subr.mxu0 0.0
    %512 = vmatpush1.xpose.msra.mxu0 0.0
    %513 = vmatprep.subr.mxu0 0.0
    %514 = vmatpush1.xpose.msra.mxu0 0.0
    %515 = vmatprep.subr.mxu0 0.0
    %516 = vmatpush1.xpose.msra.mxu0 0.0
    %517 = vmatprep.subr.mxu0 0.0
    %518 = vmatpush1.xpose.msra.mxu0 0.0
    %519 = vmatprep.subr.mxu0 0.0
    %520 = vmatpush1.xpose.msra.mxu0 0.0
    %521 = vmatprep.subr.mxu0 0.0
    %522 = vmatpush1.xpose.msra.mxu0 0.0
    %523 = vmatprep.subr.mxu0 0.0
    %524 = vmatpush1.xpose.msra.mxu0 0.0
    %525 = vmatprep.subr.mxu0 0.0
    %526 = vmatpush1.xpose.msra.mxu0 0.0
    %527 = vmatprep.subr.mxu0 0.0
    %528 = vmatpush1.xpose.msra.mxu0 0.0
    %529 = vmatprep.subr.mxu0 0.0
    %530 = vmatpush1.xpose.msra.mxu0 0.0
    %531 = vmatprep.subr.mxu0 0.0
    %532 = vmatpush1.xpose.msra.mxu0 0.0
    %533 = vmatprep.subr.mxu0 0.0
    %534 = vmatpush1.xpose.msra.mxu0 0.0
    %535 = vmatprep.subr.mxu0 0.0
    %536 = vmatpush1.xpose.msra.mxu0 0.0
    %537 = vmatprep.subr.mxu0 0.0
    %538 = vmatpush1.xpose.msra.mxu0 0.0
    %539 = vmatprep.subr.mxu0 0.0
    %540 = vmatpush1.xpose.msra.mxu0 0.0
    %541 = vmatprep.subr.mxu0 0.0
    %542 = vmatpush1.xpose.msra.mxu0 0.0
    %543 = vmatprep.subr.mxu0 0.0
    %544 = vmatpush1.xpose.msra.mxu0 0.0
    %545 = vmatprep.subr.mxu0 0.0
    %546 = vmatpush1.xpose.msra.mxu0 0.0
    %547 = vmatprep.subr.mxu0 0.0
    %548 = vmatpush1.xpose.msra.mxu0 0.0
    %549 = vmatprep.subr.mxu0 0.0
    %550 = vmatpush1.xpose.msra.mxu0 0.0
    %551 = vmatprep.subr.mxu0 0.0
    %552 = vmatpush1.xpose.msra.mxu0 0.0
    %553 = vmatprep.subr.mxu0 0.0
    %554 = vmatpush1.xpose.msra.mxu0 0.0
    %555 = vmatprep.subr.mxu0 0.0
    %556 = vmatpush1.xpose.msra.mxu0 0.0
    %557 = vmatprep.subr.mxu0 0.0
    %558 = vmatpush1.xpose.msra.mxu0 0.0
    %559 = vmatprep.mubr.f32.mxu0 0.0
    %560 = vmatmul.mubr.f32.gmra.mrb[0].mxu0 %v484
    %v561 = vpop.f32.mrb[0].mxu0
    %v562 = vadd.f32 0.0, %v561
    %v563 = vpop.f32.mrb[0].mxu0
    %564 = vmatprep.mubr.f32.mxu0 0.0
    %565 = vmatmul.mubr.f32.gmra.mrb[0].mxu0 %v487
    %v566 = vpop.f32.mrb[0].mxu0
    %v567 = vadd.f32 0.0, %v566
    %v568 = vpop.f32.mrb[0].mxu0
    %569 = vdwg.mxu0
    %v571 = vsel %vm189, %v469, 0
    %v574 = vsel %vm189, %v470, 0
    %576 = vmatprep.subr.mxu0 0.0
    %577 = vmatpush1.xpose.msra.mxu0 %v571
    %578 = vmatprep.subr.mxu0 0.0
    %579 = vmatpush1.xpose.msra.mxu0 %v574
    %580 = vmatprep.subr.mxu0 0.0
    %581 = vmatpush1.xpose.msra.mxu0 0.0
    %582 = vmatprep.subr.mxu0 0.0
    %583 = vmatpush1.xpose.msra.mxu0 0.0
    %584 = vmatprep.subr.mxu0 0.0
    %585 = vmatpush1.xpose.msra.mxu0 0.0
    %586 = vmatprep.subr.mxu0 0.0
    %587 = vmatpush1.xpose.msra.mxu0 0.0
    %588 = vmatprep.subr.mxu0 0.0
    %589 = vmatpush1.xpose.msra.mxu0 0.0
    %590 = vmatprep.subr.mxu0 0.0
    %591 = vmatpush1.xpose.msra.mxu0 0.0
    %592 = vmatprep.subr.mxu0 0.0
    %593 = vmatpush1.xpose.msra.mxu0 0.0
    %594 = vmatprep.subr.mxu0 0.0
    %595 = vmatpush1.xpose.msra.mxu0 0.0
    %596 = vmatprep.subr.mxu0 0.0
    %597 = vmatpush1.xpose.msra.mxu0 0.0
    %598 = vmatprep.subr.mxu0 0.0
    %599 = vmatpush1.xpose.msra.mxu0 0.0
    %600 = vmatprep.subr.mxu0 0.0
    %601 = vmatpush1.xpose.msra.mxu0 0.0
    %602 = vmatprep.subr.mxu0 0.0
    %603 = vmatpush1.xpose.msra.mxu0 0.0
    %604 = vmatprep.subr.mxu0 0.0
    %605 = vmatpush1.xpose.msra.mxu0 0.0
    %606 = vmatprep.subr.mxu0 0.0
    %607 = vmatpush1.xpose.msra.mxu0 0.0
    %608 = vmatprep.subr.mxu0 0.0
    %609 = vmatpush1.xpose.msra.mxu0 0.0
    %610 = vmatprep.subr.mxu0 0.0
    %611 = vmatpush1.xpose.msra.mxu0 0.0
    %612 = vmatprep.subr.mxu0 0.0
    %613 = vmatpush1.xpose.msra.mxu0 0.0
    %614 = vmatprep.subr.mxu0 0.0
    %615 = vmatpush1.xpose.msra.mxu0 0.0
    %616 = vmatprep.subr.mxu0 0.0
    %617 = vmatpush1.xpose.msra.mxu0 0.0
    %618 = vmatprep.subr.mxu0 0.0
    %619 = vmatpush1.xpose.msra.mxu0 0.0
    %620 = vmatprep.subr.mxu0 0.0
    %621 = vmatpush1.xpose.msra.mxu0 0.0
    %622 = vmatprep.subr.mxu0 0.0
    %623 = vmatpush1.xpose.msra.mxu0 0.0
    %624 = vmatprep.subr.mxu0 0.0
    %625 = vmatpush1.xpose.msra.mxu0 0.0
    %626 = vmatprep.subr.mxu0 0.0
    %627 = vmatpush1.xpose.msra.mxu0 0.0
    %628 = vmatprep.subr.mxu0 0.0
    %629 = vmatpush1.xpose.msra.mxu0 0.0
    %630 = vmatprep.subr.mxu0 0.0
    %631 = vmatpush1.xpose.msra.mxu0 0.0
    %632 = vmatprep.subr.mxu0 0.0
    %633 = vmatpush1.xpose.msra.mxu0 0.0
    %634 = vmatprep.subr.mxu0 0.0
    %635 = vmatpush1.xpose.msra.mxu0 0.0
    %636 = vmatprep.subr.mxu0 0.0
    %637 = vmatpush1.xpose.msra.mxu0 0.0
    %638 = vmatprep.subr.mxu0 0.0
    %639 = vmatpush1.xpose.msra.mxu0 0.0
    %640 = vmatprep.mubr.f32.mxu0 0.0
    %641 = vmatmul.mubr.f32.gmra.mrb[0].mxu0 %v484
    %v642 = vpop.f32.mrb[0].mxu0
    %v643 = vadd.f32 0.0, %v642
    %v644 = vpop.f32.mrb[0].mxu0
    %645 = vmatprep.mubr.f32.mxu0 0.0
    %646 = vmatmul.mubr.f32.gmra.mrb[0].mxu0 %v487
    %v647 = vpop.f32.mrb[0].mxu0
    %v648 = vadd.f32 0.0, %v647
    %v649 = vpop.f32.mrb[0].mxu0
    %650 = vdwg.mxu0
    %v652 = vsel %vm189, %v471, 0
    %v655 = vsel %vm189, %v472, 0
    %657 = vmatprep.subr.mxu0 0.0
    %658 = vmatpush1.xpose.msra.mxu0 %v652
    %659 = vmatprep.subr.mxu0 0.0
    %660 = vmatpush1.xpose.msra.mxu0 %v655
    %661 = vmatprep.subr.mxu0 0.0
    %662 = vmatpush1.xpose.msra.mxu0 0.0
    %663 = vmatprep.subr.mxu0 0.0
    %664 = vmatpush1.xpose.msra.mxu0 0.0
    %665 = vmatprep.subr.mxu0 0.0
    %666 = vmatpush1.xpose.msra.mxu0 0.0
    %667 = vmatprep.subr.mxu0 0.0
    %668 = vmatpush1.xpose.msra.mxu0 0.0
    %669 = vmatprep.subr.mxu0 0.0
    %670 = vmatpush1.xpose.msra.mxu0 0.0
    %671 = vmatprep.subr.mxu0 0.0
    %672 = vmatpush1.xpose.msra.mxu0 0.0
    %673 = vmatprep.subr.mxu0 0.0
    %674 = vmatpush1.xpose.msra.mxu0 0.0
    %675 = vmatprep.subr.mxu0 0.0
    %676 = vmatpush1.xpose.msra.mxu0 0.0
    %677 = vmatprep.subr.mxu0 0.0
    %678 = vmatpush1.xpose.msra.mxu0 0.0
    %679 = vmatprep.subr.mxu0 0.0
    %680 = vmatpush1.xpose.msra.mxu0 0.0
    %681 = vmatprep.subr.mxu0 0.0
    %682 = vmatpush1.xpose.msra.mxu0 0.0
    %683 = vmatprep.subr.mxu0 0.0
    %684 = vmatpush1.xpose.msra.mxu0 0.0
    %685 = vmatprep.subr.mxu0 0.0
    %686 = vmatpush1.xpose.msra.mxu0 0.0
    %687 = vmatprep.subr.mxu0 0.0
    %688 = vmatpush1.xpose.msra.mxu0 0.0
    %689 = vmatprep.subr.mxu0 0.0
    %690 = vmatpush1.xpose.msra.mxu0 0.0
    %691 = vmatprep.subr.mxu0 0.0
    %692 = vmatpush1.xpose.msra.mxu0 0.0
    %693 = vmatprep.subr.mxu0 0.0
    %694 = vmatpush1.xpose.msra.mxu0 0.0
    %695 = vmatprep.subr.mxu0 0.0
    %696 = vmatpush1.xpose.msra.mxu0 0.0
    %697 = vmatprep.subr.mxu0 0.0
    %698 = vmatpush1.xpose.msra.mxu0 0.0
    %699 = vmatprep.subr.mxu0 0.0
    %700 = vmatpush1.xpose.msra.mxu0 0.0
    %701 = vmatprep.subr.mxu0 0.0
    %702 = vmatpush1.xpose.msra.mxu0 0.0
    %703 = vmatprep.subr.mxu0 0.0
    %704 = vmatpush1.xpose.msra.mxu0 0.0
    %705 = vmatprep.subr.mxu0 0.0
    %706 = vmatpush1.xpose.msra.mxu0 0.0
    %707 = vmatprep.subr.mxu0 0.0
    %708 = vmatpush1.xpose.msra.mxu0 0.0
    %709 = vmatprep.subr.mxu0 0.0
    %710 = vmatpush1.xpose.msra.mxu0 0.0
    %711 = vmatprep.subr.mxu0 0.0
    %712 = vmatpush1.xpose.msra.mxu0 0.0
    %713 = vmatprep.subr.mxu0 0.0
    %714 = vmatpush1.xpose.msra.mxu0 0.0
    %715 = vmatprep.subr.mxu0 0.0
    %716 = vmatpush1.xpose.msra.mxu0 0.0
    %717 = vmatprep.subr.mxu0 0.0
    %718 = vmatpush1.xpose.msra.mxu0 0.0
    %719 = vmatprep.subr.mxu0 0.0
    %720 = vmatpush1.xpose.msra.mxu0 0.0
    %721 = vmatprep.mubr.f32.mxu0 0.0
    %722 = vmatmul.mubr.f32.gmra.mrb[0].mxu0 %v484
    %v723 = vpop.f32.mrb[0].mxu0
    %v724 = vadd.f32 0.0, %v723
    %v725 = vpop.f32.mrb[0].mxu0
    %726 = vmatprep.mubr.f32.mxu0 0.0
    %727 = vmatmul.mubr.f32.gmra.mrb[0].mxu0 %v487
    %v728 = vpop.f32.mrb[0].mxu0
    %v729 = vadd.f32 0.0, %v728
    %v730 = vpop.f32.mrb[0].mxu0
    %731 = vdwg.mxu0
    %v733 = vsel %vm189, %v473, 0
    %v736 = vsel %vm189, %v474, 0
    %738 = vmatprep.subr.mxu0 0.0
    %739 = vmatpush1.xpose.msra.mxu0 %v733
    %740 = vmatprep.subr.mxu0 0.0
    %741 = vmatpush1.xpose.msra.mxu0 %v736
    %742 = vmatprep.subr.mxu0 0.0
    %743 = vmatpush1.xpose.msra.mxu0 0.0
    %744 = vmatprep.subr.mxu0 0.0
    %745 = vmatpush1.xpose.msra.mxu0 0.0
    %746 = vmatprep.subr.mxu0 0.0
    %747 = vmatpush1.xpose.msra.mxu0 0.0
    %748 = vmatprep.subr.mxu0 0.0
    %749 = vmatpush1.xpose.msra.mxu0 0.0
    %750 = vmatprep.subr.mxu0 0.0
    %751 = vmatpush1.xpose.msra.mxu0 0.0
    %752 = vmatprep.subr.mxu0 0.0
    %753 = vmatpush1.xpose.msra.mxu0 0.0
    %754 = vmatprep.subr.mxu0 0.0
    %755 = vmatpush1.xpose.msra.mxu0 0.0
    %756 = vmatprep.subr.mxu0 0.0
    %757 = vmatpush1.xpose.msra.mxu0 0.0
    %758 = vmatprep.subr.mxu0 0.0
    %759 = vmatpush1.xpose.msra.mxu0 0.0
    %760 = vmatprep.subr.mxu0 0.0
    %761 = vmatpush1.xpose.msra.mxu0 0.0
    %762 = vmatprep.subr.mxu0 0.0
    %763 = vmatpush1.xpose.msra.mxu0 0.0
    %764 = vmatprep.subr.mxu0 0.0
    %765 = vmatpush1.xpose.msra.mxu0 0.0
    %766 = vmatprep.subr.mxu0 0.0
    %767 = vmatpush1.xpose.msra.mxu0 0.0
    %768 = vmatprep.subr.mxu0 0.0
    %769 = vmatpush1.xpose.msra.mxu0 0.0
    %770 = vmatprep.subr.mxu0 0.0
    %771 = vmatpush1.xpose.msra.mxu0 0.0
    %772 = vmatprep.subr.mxu0 0.0
    %773 = vmatpush1.xpose.msra.mxu0 0.0
    %774 = vmatprep.subr.mxu0 0.0
    %775 = vmatpush1.xpose.msra.mxu0 0.0
    %776 = vmatprep.subr.mxu0 0.0
    %777 = vmatpush1.xpose.msra.mxu0 0.0
    %778 = vmatprep.subr.mxu0 0.0
    %779 = vmatpush1.xpose.msra.mxu0 0.0
    %780 = vmatprep.subr.mxu0 0.0
    %781 = vmatpush1.xpose.msra.mxu0 0.0
    %782 = vmatprep.subr.mxu0 0.0
    %783 = vmatpush1.xpose.msra.mxu0 0.0
    %784 = vmatprep.subr.mxu0 0.0
    %785 = vmatpush1.xpose.msra.mxu0 0.0
    %786 = vmatprep.subr.mxu0 0.0
    %787 = vmatpush1.xpose.msra.mxu0 0.0
    %788 = vmatprep.subr.mxu0 0.0
    %789 = vmatpush1.xpose.msra.mxu0 0.0
    %790 = vmatprep.subr.mxu0 0.0
    %791 = vmatpush1.xpose.msra.mxu0 0.0
    %792 = vmatprep.subr.mxu0 0.0
    %793 = vmatpush1.xpose.msra.mxu0 0.0
    %794 = vmatprep.subr.mxu0 0.0
    %795 = vmatpush1.xpose.msra.mxu0 0.0
    %796 = vmatprep.subr.mxu0 0.0
    %797 = vmatpush1.xpose.msra.mxu0 0.0
    %798 = vmatprep.subr.mxu0 0.0
    %799 = vmatpush1.xpose.msra.mxu0 0.0
    %800 = vmatprep.subr.mxu0 0.0
    %801 = vmatpush1.xpose.msra.mxu0 0.0
    %802 = vmatprep.mubr.f32.mxu0 0.0
    %803 = vmatmul.mubr.f32.gmra.mrb[0].mxu0 %v484
    %v804 = vpop.f32.mrb[0].mxu0
    %v805 = vadd.f32 0.0, %v804
    %v806 = vpop.f32.mrb[0].mxu0
    %807 = vmatprep.mubr.f32.mxu0 0.0
    %808 = vmatmul.mubr.f32.gmra.mrb[0].mxu0 %v487
    %v809 = vpop.f32.mrb[0].mxu0
    %v810 = vadd.f32 0.0, %v809
    %v811 = vpop.f32.mrb[0].mxu0
    %812 = vdwg.mxu0
    %v813 = vmul.f32 %v562, 0.35355338
    %v814 = vmul.f32 %v567, 0.35355338
    %v815 = vmul.f32 %v643, 0.35355338
    %v816 = vmul.f32 %v648, 0.35355338
    %v817 = vmul.f32 %v724, 0.35355338
    %v818 = vmul.f32 %v729, 0.35355338
    %v819 = vmul.f32 %v805, 0.35355338
    %v820 = vmul.f32 %v810, 0.35355338
    %v821 = vadd.f32 %v813, %v176
    %v822 = vadd.f32 %v814, %v177
    %v823 = vadd.f32 %v815, %v176
    %v824 = vadd.f32 %v816, %v177
    %v825 = vadd.f32 %v817, %v176
    %v826 = vadd.f32 %v818, %v177
    %v827 = vadd.f32 %v819, %v176
    %v828 = vadd.f32 %v820, %v177
    %vm829 = vcmask 130048
    %v830 = vsel %vm829, %v821, -inf
    %831 = vmax.xlane.f32.xlu0 %v830
    %v832 = vpop.xlane.xlu0 %831
    %v833 = vsel %vm829, %v822, -inf
    %834 = vmax.xlane.f32.xlu0 %v833
    %v835 = vpop.xlane.xlu0 %834
    %v836 = vsel %vm829, %v823, -inf
    %837 = vmax.xlane.f32.xlu0 %v836
    %v838 = vpop.xlane.xlu0 %837
    %v839 = vsel %vm829, %v824, -inf
    %840 = vmax.xlane.f32.xlu0 %v839
    %v841 = vpop.xlane.xlu0 %840
    %v842 = vsel %vm829, %v825, -inf
    %843 = vmax.xlane.f32.xlu0 %v842
    %v844 = vpop.xlane.xlu0 %843
    %v845 = vsel %vm829, %v826, -inf
    %846 = vmax.xlane.f32.xlu0 %v845
    %v847 = vpop.xlane.xlu0 %846
    %v848 = vsel %vm829, %v827, -inf
    %849 = vmax.xlane.f32.xlu0 %v848
    %v850 = vpop.xlane.xlu0 %849
    %v851 = vsel %vm829, %v828, -inf
    %852 = vmax.xlane.f32.xlu0 %v851
    %v853 = vpop.xlane.xlu0 %852
    %v854 = vsub.f32 %v821, %v832
    %v855 = vsub.f32 %v822, %v835
    %v856 = vsub.f32 %v823, %v838
    %v857 = vsub.f32 %v824, %v841
    %v858 = vsub.f32 %v825, %v844
    %v859 = vsub.f32 %v826, %v847
    %v860 = vsub.f32 %v827, %v850
    %v861 = vsub.f32 %v828, %v853
    %v862 = vmul.f32 %v854, 1.442695
    %v863 = vpow.pop %v862
    %v864 = vmul.f32 %v855, 1.442695
    %v865 = vpow.pop %v864
    %v866 = vmul.f32 %v856, 1.442695
    %v867 = vpow.pop %v866
    %v868 = vmul.f32 %v857, 1.442695
    %v869 = vpow.pop %v868
    %v870 = vmul.f32 %v858, 1.442695
    %v871 = vpow.pop %v870
    %v872 = vmul.f32 %v859, 1.442695
    %v873 = vpow.pop %v872
    %v874 = vmul.f32 %v860, 1.442695
    %v875 = vpow.pop %v874
    %v876 = vmul.f32 %v861, 1.442695
    %v877 = vpow.pop %v876
    %v878 = vsel %vm829, %v863, 0.0
    %879 = vadd.xlane.f32.xlu0 %v878
    %v880 = vpop.xlane.xlu0 %879
    %v881 = vsel %vm829, %v865, 0.0
    %882 = vadd.xlane.f32.xlu0 %v881
    %v883 = vpop.xlane.xlu0 %882
    %v884 = vsel %vm829, %v867, 0.0
    %885 = vadd.xlane.f32.xlu0 %v884
    %v886 = vpop.xlane.xlu0 %885
    %v887 = vsel %vm829, %v869, 0.0
    %888 = vadd.xlane.f32.xlu0 %v887
    %v889 = vpop.xlane.xlu0 %888
    %v890 = vsel %vm829, %v871, 0.0
    %891 = vadd.xlane.f32.xlu0 %v890
    %v892 = vpop.xlane.xlu0 %891
    %v893 = vsel %vm829, %v873, 0.0
    %894 = vadd.xlane.f32.xlu0 %v893
    %v895 = vpop.xlane.xlu0 %894
    %v896 = vsel %vm829, %v875, 0.0
    %897 = vadd.xlane.f32.xlu0 %v896
    %v898 = vpop.xlane.xlu0 %897
    %v899 = vsel %vm829, %v877, 0.0
    %900 = vadd.xlane.f32.xlu0 %v899
    %v901 = vpop.xlane.xlu0 %900
    %v902 = vrcp.pop %v880
    %v903 = vrcp.pop %v883
    %v904 = vrcp.pop %v886
    %v905 = vrcp.pop %v889
    %v906 = vrcp.pop %v892
    %v907 = vrcp.pop %v895
    %v908 = vrcp.pop %v898
    %v909 = vrcp.pop %v901
    %v910 = vmul.f32 %v863, %v902
    %v911 = vmul.f32 %v865, %v903
    %v912 = vmul.f32 %v867, %v904
    %v913 = vmul.f32 %v869, %v905
    %v914 = vmul.f32 %v871, %v906
    %v915 = vmul.f32 %v873, %v907
    %v916 = vmul.f32 %v875, %v908
    %v917 = vmul.f32 %v877, %v909
    %v919 = vsel %vm829, %v910, 0
    %v922 = vsel %vm829, %v911, 0
    %924 = vmatprep.subr.mxu0 0.0
    %925 = vmatpush1.msra.mxu0 %v475
    %926 = vmatprep.subr.mxu0 0.0
    %927 = vmatpush1.msra.mxu0 %v476
    %928 = vmatprep.subr.mxu0 0.0
    %929 = vmatpush1.msra.mxu0 0.0
    %930 = vmatprep.subr.mxu0 0.0
    %931 = vmatpush1.msra.mxu0 0.0
    %932 = vmatprep.subr.mxu0 0.0
    %933 = vmatpush1.msra.mxu0 0.0
    %934 = vmatprep.subr.mxu0 0.0
    %935 = vmatpush1.msra.mxu0 0.0
    %936 = vmatprep.subr.mxu0 0.0
    %937 = vmatpush1.msra.mxu0 0.0
    %938 = vmatprep.subr.mxu0 0.0
    %939 = vmatpush1.msra.mxu0 0.0
    %940 = vmatprep.subr.mxu0 0.0
    %941 = vmatpush1.msra.mxu0 0.0
    %942 = vmatprep.subr.mxu0 0.0
    %943 = vmatpush1.msra.mxu0 0.0
    %944 = vmatprep.subr.mxu0 0.0
    %945 = vmatpush1.msra.mxu0 0.0
    %946 = vmatprep.subr.mxu0 0.0
    %947 = vmatpush1.msra.mxu0 0.0
    %948 = vmatprep.subr.mxu0 0.0
    %949 = vmatpush1.msra.mxu0 0.0
    %950 = vmatprep.subr.mxu0 0.0
    %951 = vmatpush1.msra.mxu0 0.0
    %952 = vmatprep.subr.mxu0 0.0
    %953 = vmatpush1.msra.mxu0 0.0
    %954 = vmatprep.subr.mxu0 0.0
    %955 = vmatpush1.msra.mxu0 0.0
    %956 = vmatprep.subr.mxu0 0.0
    %957 = vmatpush1.msra.mxu0 0.0
    %958 = vmatprep.subr.mxu0 0.0
    %959 = vmatpush1.msra.mxu0 0.0
    %960 = vmatprep.subr.mxu0 0.0
    %961 = vmatpush1.msra.mxu0 0.0
    %962 = vmatprep.subr.mxu0 0.0
    %963 = vmatpush1.msra.mxu0 0.0
    %964 = vmatprep.subr.mxu0 0.0
    %965 = vmatpush1.msra.mxu0 0.0
    %966 = vmatprep.subr.mxu0 0.0
    %967 = vmatpush1.msra.mxu0 0.0
    %968 = vmatprep.subr.mxu0 0.0
    %969 = vmatpush1.msra.mxu0 0.0
    %970 = vmatprep.subr.mxu0 0.0
    %971 = vmatpush1.msra.mxu0 0.0
    %972 = vmatprep.subr.mxu0 0.0
    %973 = vmatpush1.msra.mxu0 0.0
    %974 = vmatprep.subr.mxu0 0.0
    %975 = vmatpush1.msra.mxu0 0.0
    %976 = vmatprep.subr.mxu0 0.0
    %977 = vmatpush1.msra.mxu0 0.0
    %978 = vmatprep.subr.mxu0 0.0
    %979 = vmatpush1.msra.mxu0 0.0
    %980 = vmatprep.subr.mxu0 0.0
    %981 = vmatpush1.msra.mxu0 0.0
    %982 = vmatprep.subr.mxu0 0.0
    %983 = vmatpush1.msra.mxu0 0.0
    %984 = vmatprep.subr.mxu0 0.0
    %985 = vmatpush1.msra.mxu0 0.0
    %986 = vmatprep.subr.mxu0 0.0
    %987 = vmatpush1.msra.mxu0 0.0
    %988 = vmatprep.mubr.f32.mxu0 0.0
    %989 = vmatmul.mubr.f32.gmra.mrb[0].mxu0 %v919
    %v990 = vpop.f32.mrb[0].mxu0
    %v991 = vadd.f32 0.0, %v990
    %v992 = vpop.f32.mrb[0].mxu0
    %993 = vmatprep.mubr.f32.mxu0 0.0
    %994 = vmatmul.mubr.f32.gmra.mrb[0].mxu0 %v922
    %v995 = vpop.f32.mrb[0].mxu0
    %v996 = vadd.f32 0.0, %v995
    %v997 = vpop.f32.mrb[0].mxu0
    %998 = vdwg.mxu0
    %v1000 = vsel %vm829, %v912, 0
    %v1003 = vsel %vm829, %v913, 0
    %1005 = vmatprep.subr.mxu0 0.0
    %1006 = vmatpush1.msra.mxu0 %v477
    %1007 = vmatprep.subr.mxu0 0.0
    %1008 = vmatpush1.msra.mxu0 %v478
    %1009 = vmatprep.subr.mxu0 0.0
    %1010 = vmatpush1.msra.mxu0 0.0
    %1011 = vmatprep.subr.mxu0 0.0
    %1012 = vmatpush1.msra.mxu0 0.0
    %1013 = vmatprep.subr.mxu0 0.0
    %1014 = vmatpush1.msra.mxu0 0.0
    %1015 = vmatprep.subr.mxu0 0.0
    %1016 = vmatpush1.msra.mxu0 0.0
    %1017 = vmatprep.subr.mxu0 0.0
    %1018 = vmatpush1.msra.mxu0 0.0
    %1019 = vmatprep.subr.mxu0 0.0
    %1020 = vmatpush1.msra.mxu0 0.0
    %1021 = vmatprep.subr.mxu0 0.0
    %1022 = vmatpush1.msra.mxu0 0.0
    %1023 = vmatprep.subr.mxu0 0.0
    %1024 = vmatpush1.msra.mxu0 0.0
    %1025 = vmatprep.subr.mxu0 0.0
    %1026 = vmatpush1.msra.mxu0 0.0
    %1027 = vmatprep.subr.mxu0 0.0
    %1028 = vmatpush1.msra.mxu0 0.0
    %1029 = vmatprep.subr.mxu0 0.0
    %1030 = vmatpush1.msra.mxu0 0.0
    %1031 = vmatprep.subr.mxu0 0.0
    %1032 = vmatpush1.msra.mxu0 0.0
    %1033 = vmatprep.subr.mxu0 0.0
    %1034 = vmatpush1.msra.mxu0 0.0
    %1035 = vmatprep.subr.mxu0 0.0
    %1036 = vmatpush1.msra.mxu0 0.0
    %1037 = vmatprep.subr.mxu0 0.0
    %1038 = vmatpush1.msra.mxu0 0.0
    %1039 = vmatprep.subr.mxu0 0.0
    %1040 = vmatpush1.msra.mxu0 0.0
    %1041 = vmatprep.subr.mxu0 0.0
    %1042 = vmatpush1.msra.mxu0 0.0
    %1043 = vmatprep.subr.mxu0 0.0
    %1044 = vmatpush1.msra.mxu0 0.0
    %1045 = vmatprep.subr.mxu0 0.0
    %1046 = vmatpush1.msra.mxu0 0.0
    %1047 = vmatprep.subr.mxu0 0.0
    %1048 = vmatpush1.msra.mxu0 0.0
    %1049 = vmatprep.subr.mxu0 0.0
    %1050 = vmatpush1.msra.mxu0 0.0
    %1051 = vmatprep.subr.mxu0 0.0
    %1052 = vmatpush1.msra.mxu0 0.0
    %1053 = vmatprep.subr.mxu0 0.0
    %1054 = vmatpush1.msra.mxu0 0.0
    %1055 = vmatprep.subr.mxu0 0.0
    %1056 = vmatpush1.msra.mxu0 0.0
    %1057 = vmatprep.subr.mxu0 0.0
    %1058 = vmatpush1.msra.mxu0 0.0
    %1059 = vmatprep.subr.mxu0 0.0
    %1060 = vmatpush1.msra.mxu0 0.0
    %1061 = vmatprep.subr.mxu0 0.0
    %1062 = vmatpush1.msra.mxu0 0.0
    %1063 = vmatprep.subr.mxu0 0.0
    %1064 = vmatpush1.msra.mxu0 0.0
    %1065 = vmatprep.subr.mxu0 0.0
    %1066 = vmatpush1.msra.mxu0 0.0
    %1067 = vmatprep.subr.mxu0 0.0
    %1068 = vmatpush1.msra.mxu0 0.0
    %1069 = vmatprep.mubr.f32.mxu0 0.0
    %1070 = vmatmul.mubr.f32.gmra.mrb[0].mxu0 %v1000
    %v1071 = vpop.f32.mrb[0].mxu0
    %v1072 = vadd.f32 0.0, %v1071
    %v1073 = vpop.f32.mrb[0].mxu0
    %1074 = vmatprep.mubr.f32.mxu0 0.0
    %1075 = vmatmul.mubr.f32.gmra.mrb[0].mxu0 %v1003
    %v1076 = vpop.f32.mrb[0].mxu0
    %v1077 = vadd.f32 0.0, %v1076
    %v1078 = vpop.f32.mrb[0].mxu0
    %1079 = vdwg.mxu0
    %v1081 = vsel %vm829, %v914, 0
    %v1084 = vsel %vm829, %v915, 0
    %1086 = vmatprep.subr.mxu0 0.0
    %1087 = vmatpush1.msra.mxu0 %v479
    %1088 = vmatprep.subr.mxu0 0.0
    %1089 = vmatpush1.msra.mxu0 %v480
    %1090 = vmatprep.subr.mxu0 0.0
    %1091 = vmatpush1.msra.mxu0 0.0
    %1092 = vmatprep.subr.mxu0 0.0
    %1093 = vmatpush1.msra.mxu0 0.0
    %1094 = vmatprep.subr.mxu0 0.0
    %1095 = vmatpush1.msra.mxu0 0.0
    %1096 = vmatprep.subr.mxu0 0.0
    %1097 = vmatpush1.msra.mxu0 0.0
    %1098 = vmatprep.subr.mxu0 0.0
    %1099 = vmatpush1.msra.mxu0 0.0
    %1100 = vmatprep.subr.mxu0 0.0
    %1101 = vmatpush1.msra.mxu0 0.0
    %1102 = vmatprep.subr.mxu0 0.0
    %1103 = vmatpush1.msra.mxu0 0.0
    %1104 = vmatprep.subr.mxu0 0.0
    %1105 = vmatpush1.msra.mxu0 0.0
    %1106 = vmatprep.subr.mxu0 0.0
    %1107 = vmatpush1.msra.mxu0 0.0
    %1108 = vmatprep.subr.mxu0 0.0
    %1109 = vmatpush1.msra.mxu0 0.0
    %1110 = vmatprep.subr.mxu0 0.0
    %1111 = vmatpush1.msra.mxu0 0.0
    %1112 = vmatprep.subr.mxu0 0.0
    %1113 = vmatpush1.msra.mxu0 0.0
    %1114 = vmatprep.subr.mxu0 0.0
    %1115 = vmatpush1.msra.mxu0 0.0
    %1116 = vmatprep.subr.mxu0 0.0
    %1117 = vmatpush1.msra.mxu0 0.0
    %1118 = vmatprep.subr.mxu0 0.0
    %1119 = vmatpush1.msra.mxu0 0.0
    %1120 = vmatprep.subr.mxu0 0.0
    %1121 = vmatpush1.msra.mxu0 0.0
    %1122 = vmatprep.subr.mxu0 0.0
    %1123 = vmatpush1.msra.mxu0 0.0
    %1124 = vmatprep.subr.mxu0 0.0
    %1125 = vmatpush1.msra.mxu0 0.0
    %1126 = vmatprep.subr.mxu0 0.0
    %1127 = vmatpush1.msra.mxu0 0.0
    %1128 = vmatprep.subr.mxu0 0.0
    %1129 = vmatpush1.msra.mxu0 0.0
    %1130 = vmatprep.subr.mxu0 0.0
    %1131 = vmatpush1.msra.mxu0 0.0
    %1132 = vmatprep.subr.mxu0 0.0
    %1133 = vmatpush1.msra.mxu0 0.0
    %1134 = vmatprep.subr.mxu0 0.0
    %1135 = vmatpush1.msra.mxu0 0.0
    %1136 = vmatprep.subr.mxu0 0.0
    %1137 = vmatpush1.msra.mxu0 0.0
    %1138 = vmatprep.subr.mxu0 0.0
    %1139 = vmatpush1.msra.mxu0 0.0
    %1140 = vmatprep.subr.mxu0 0.0
    %1141 = vmatpush1.msra.mxu0 0.0
    %1142 = vmatprep.subr.mxu0 0.0
    %1143 = vmatpush1.msra.mxu0 0.0
    %1144 = vmatprep.subr.mxu0 0.0
    %1145 = vmatpush1.msra.mxu0 0.0
    %1146 = vmatprep.subr.mxu0 0.0
    %1147 = vmatpush1.msra.mxu0 0.0
    %1148 = vmatprep.subr.mxu0 0.0
    %1149 = vmatpush1.msra.mxu0 0.0
    %1150 = vmatprep.mubr.f32.mxu0 0.0
    %1151 = vmatmul.mubr.f32.gmra.mrb[0].mxu0 %v1081
    %v1152 = vpop.f32.mrb[0].mxu0
    %v1153 = vadd.f32 0.0, %v1152
    %v1154 = vpop.f32.mrb[0].mxu0
    %1155 = vmatprep.mubr.f32.mxu0 0.0
    %1156 = vmatmul.mubr.f32.gmra.mrb[0].mxu0 %v1084
    %v1157 = vpop.f32.mrb[0].mxu0
    %v1158 = vadd.f32 0.0, %v1157
    %v1159 = vpop.f32.mrb[0].mxu0
    %1160 = vdwg.mxu0
    %v1162 = vsel %vm829, %v916, 0
    %v1165 = vsel %vm829, %v917, 0
    %1167 = vmatprep.subr.mxu0 0.0
    %1168 = vmatpush1.msra.mxu0 %v481
    %1169 = vmatprep.subr.mxu0 0.0
    %1170 = vmatpush1.msra.mxu0 %v482
    %1171 = vmatprep.subr.mxu0 0.0
    %1172 = vmatpush1.msra.mxu0 0.0
    %1173 = vmatprep.subr.mxu0 0.0
    %1174 = vmatpush1.msra.mxu0 0.0
    %1175 = vmatprep.subr.mxu0 0.0
    %1176 = vmatpush1.msra.mxu0 0.0
    %1177 = vmatprep.subr.mxu0 0.0
    %1178 = vmatpush1.msra.mxu0 0.0
    %1179 = vmatprep.subr.mxu0 0.0
    %1180 = vmatpush1.msra.mxu0 0.0
    %1181 = vmatprep.subr.mxu0 0.0
    %1182 = vmatpush1.msra.mxu0 0.0
    %1183 = vmatprep.subr.mxu0 0.0
    %1184 = vmatpush1.msra.mxu0 0.0
    %1185 = vmatprep.subr.mxu0 0.0
    %1186 = vmatpush1.msra.mxu0 0.0
    %1187 = vmatprep.subr.mxu0 0.0
    %1188 = vmatpush1.msra.mxu0 0.0
    %1189 = vmatprep.subr.mxu0 0.0
    %1190 = vmatpush1.msra.mxu0 0.0
    %1191 = vmatprep.subr.mxu0 0.0
    %1192 = vmatpush1.msra.mxu0 0.0
    %1193 = vmatprep.subr.mxu0 0.0
    %1194 = vmatpush1.msra.mxu0 0.0
    %1195 = vmatprep.subr.mxu0 0.0
    %1196 = vmatpush1.msra.mxu0 0.0
    %1197 = vmatprep.subr.mxu0 0.0
    %1198 = vmatpush1.msra.mxu0 0.0
    %1199 = vmatprep.subr.mxu0 0.0
    %1200 = vmatpush1.msra.mxu0 0.0
    %1201 = vmatprep.subr.mxu0 0.0
    %1202 = vmatpush1.msra.mxu0 0.0
    %1203 = vmatprep.subr.mxu0 0.0
    %1204 = vmatpush1.msra.mxu0 0.0
    %1205 = vmatprep.subr.mxu0 0.0
    %1206 = vmatpush1.msra.mxu0 0.0
    %1207 = vmatprep.subr.mxu0 0.0
    %1208 = vmatpush1.msra.mxu0 0.0
    %1209 = vmatprep.subr.mxu0 0.0
    %1210 = vmatpush1.msra.mxu0 0.0
    %1211 = vmatprep.subr.mxu0 0.0
    %1212 = vmatpush1.msra.mxu0 0.0
    %1213 = vmatprep.subr.mxu0 0.0
    %1214 = vmatpush1.msra.mxu0 0.0
    %1215 = vmatprep.subr.mxu0 0.0
    %1216 = vmatpush1.msra.mxu0 0.0
    %1217 = vmatprep.subr.mxu0 0.0
    %1218 = vmatpush1.msra.mxu0 0.0
    %1219 = vmatprep.subr.mxu0 0.0
    %1220 = vmatpush1.msra.mxu0 0.0
    %1221 = vmatprep.subr.mxu0 0.0
    %1222 = vmatpush1.msra.mxu0 0.0
    %1223 = vmatprep.subr.mxu0 0.0
    %1224 = vmatpush1.msra.mxu0 0.0
    %1225 = vmatprep.subr.mxu0 0.0
    %1226 = vmatpush1.msra.mxu0 0.0
    %1227 = vmatprep.subr.mxu0 0.0
    %1228 = vmatpush1.msra.mxu0 0.0
    %1229 = vmatprep.subr.mxu0 0.0
    %1230 = vmatpush1.msra.mxu0 0.0
    %1231 = vmatprep.mubr.f32.mxu0 0.0
    %1232 = vmatmul.mubr.f32.gmra.mrb[0].mxu0 %v1162
    %v1233 = vpop.f32.mrb[0].mxu0
    %v1234 = vadd.f32 0.0, %v1233
    %v1235 = vpop.f32.mrb[0].mxu0
    %1236 = vmatprep.mubr.f32.mxu0 0.0
    %1237 = vmatmul.mubr.f32.gmra.mrb[0].mxu0 %v1165
    %v1238 = vpop.f32.mrb[0].mxu0
    %v1239 = vadd.f32 0.0, %v1238
    %v1240 = vpop.f32.mrb[0].mxu0
    %1241 = vdwg.mxu0
    %v1242 = vsel %vm189, %v991, 0.0
    %v1243 = vsel %vm189, %v1072, 0.0
    %v1244 = vadd.f32 %v1242, %v1243
    %v1245 = vsel %vm189, %v1153, 0.0
    %v1246 = vadd.f32 %v1244, %v1245
    %v1247 = vsel %vm189, %v1234, 0.0
    %v1248 = vadd.f32 %v1246, %v1247
    %v1249 = vsel %vm189, %v996, 0.0
    %v1250 = vsel %vm189, %v1077, 0.0
    %v1251 = vadd.f32 %v1249, %v1250
    %v1252 = vsel %vm189, %v1158, 0.0
    %v1253 = vadd.f32 %v1251, %v1252
    %v1254 = vsel %vm189, %v1239, 0.0
    %v1255 = vadd.f32 %v1253, %v1254
    %v1256 = vld [vmem:[%s19] sm:$0xff]
    %v1257 = vld [vmem:[%s19 + $0x8] sm:$0xff]
    %v1258 = vld [vmem:[%s19 + $0x10] sm:$0xff]
    %v1259 = vld [vmem:[%s19 + $0x18] sm:$0xff]
    %v1260 = vld [vmem:[%s21] sm:$0x1]
    %v1262 = vlaneseq
    %v1263 = vshrl.u32 %v1262, 7
    %v1264 = vsub.s32 0, %v1263
    %v1265 = vrot.slane %v1260, %v1264
    %v1268 = vsel %vm189, %v1248, 0
    %v1271 = vsel %vm189, %v1255, 0
    %1273 = vmatprep.subr.mxu0 0.0
    %1274 = vmatpush1.msra.mxu0 %v1256
    %1275 = vmatprep.subr.mxu0 0.0
    %1276 = vmatpush1.msra.mxu0 %v1257
    %1277 = vmatprep.subr.mxu0 0.0
    %1278 = vmatpush1.msra.mxu0 %v1258
    %1279 = vmatprep.subr.mxu0 0.0
    %1280 = vmatpush1.msra.mxu0 %v1259
    %1281 = vmatprep.subr.mxu0 0.0
    %1282 = vmatpush1.msra.mxu0 0.0
    %1283 = vmatprep.subr.mxu0 0.0
    %1284 = vmatpush1.msra.mxu0 0.0
    %1285 = vmatprep.subr.mxu0 0.0
    %1286 = vmatpush1.msra.mxu0 0.0
    %1287 = vmatprep.subr.mxu0 0.0
    %1288 = vmatpush1.msra.mxu0 0.0
    %1289 = vmatprep.subr.mxu0 0.0
    %1290 = vmatpush1.msra.mxu0 0.0
    %1291 = vmatprep.subr.mxu0 0.0
    %1292 = vmatpush1.msra.mxu0 0.0
    %1293 = vmatprep.subr.mxu0 0.0
    %1294 = vmatpush1.msra.mxu0 0.0
    %1295 = vmatprep.subr.mxu0 0.0
    %1296 = vmatpush1.msra.mxu0 0.0
    %1297 = vmatprep.subr.mxu0 0.0
    %1298 = vmatpush1.msra.mxu0 0.0
    %1299 = vmatprep.subr.mxu0 0.0
    %1300 = vmatpush1.msra.mxu0 0.0
    %1301 = vmatprep.subr.mxu0 0.0
    %1302 = vmatpush1.msra.mxu0 0.0
    %1303 = vmatprep.subr.mxu0 0.0
    %1304 = vmatpush1.msra.mxu0 0.0
    %1305 = vmatprep.subr.mxu0 0.0
    %1306 = vmatpush1.msra.mxu0 0.0
    %1307 = vmatprep.subr.mxu0 0.0
    %1308 = vmatpush1.msra.mxu0 0.0
    %1309 = vmatprep.subr.mxu0 0.0
    %1310 = vmatpush1.msra.mxu0 0.0
    %1311 = vmatprep.subr.mxu0 0.0
    %1312 = vmatpush1.msra.mxu0 0.0
    %1313 = vmatprep.subr.mxu0 0.0
    %1314 = vmatpush1.msra.mxu0 0.0
    %1315 = vmatprep.subr.mxu0 0.0
    %1316 = vmatpush1.msra.mxu0 0.0
    %1317 = vmatprep.subr.mxu0 0.0
    %1318 = vmatpush1.msra.mxu0 0.0
    %1319 = vmatprep.subr.mxu0 0.0
    %1320 = vmatpush1.msra.mxu0 0.0
    %1321 = vmatprep.subr.mxu0 0.0
    %1322 = vmatpush1.msra.mxu0 0.0
    %1323 = vmatprep.subr.mxu0 0.0
    %1324 = vmatpush1.msra.mxu0 0.0
    %1325 = vmatprep.subr.mxu0 0.0
    %1326 = vmatpush1.msra.mxu0 0.0
    %1327 = vmatprep.subr.mxu0 0.0
    %1328 = vmatpush1.msra.mxu0 0.0
    %1329 = vmatprep.subr.mxu0 0.0
    %1330 = vmatpush1.msra.mxu0 0.0
    %1331 = vmatprep.subr.mxu0 0.0
    %1332 = vmatpush1.msra.mxu0 0.0
    %1333 = vmatprep.subr.mxu0 0.0
    %1334 = vmatpush1.msra.mxu0 0.0
    %1335 = vmatprep.subr.mxu0 0.0
    %1336 = vmatpush1.msra.mxu0 0.0
    %1337 = vmatprep.mubr.f32.mxu0 0.0
    %1338 = vmatmul.mubr.f32.gmra.mrb[0].mxu0 %v1268
    %v1339 = vpop.f32.mrb[0].mxu0
    %v1340 = vadd.f32 %v1265, %v1339
    %v1341 = vpop.f32.mrb[0].mxu0
    %1342 = vmatprep.mubr.f32.mxu0 0.0
    %1343 = vmatmul.mubr.f32.gmra.mrb[0].mxu0 %v1271
    %v1344 = vpop.f32.mrb[0].mxu0
    %v1345 = vadd.f32 %v1265, %v1344
    %v1346 = vpop.f32.mrb[0].mxu0
    %1347 = vdwg.mxu0
    %v1348 = vadd.f32 %v123, %v1340
    %v1349 = vadd.f32 %v124, %v1345
    %v1350 = vld [vmem:[%s39] sm:$0x1]
    %v1351 = vld [vmem:[%s41] sm:$0x1]
    %v1352 = vsel %vm189, %v1348, 0.0
    %1353 = vadd.xlane.f32.xlu0 %v1352
    %v1354 = vpop.xlane.xlu0 %1353
    %v1355 = vsel %vm189, %v1349, 0.0
    %1356 = vadd.xlane.f32.xlu0 %v1355
    %v1357 = vpop.xlane.xlu0 %1356
    %v1358 = vrcp.pop 32.0
    %v1359 = vmul.f32 %v1354, %v1358
    %v1360 = vmul.f32 %v1357, %v1358
    %v1361 = vsub.f32 %v1348, %v1359
    %v1362 = vsub.f32 %v1349, %v1360
    %v1363 = vmul.f32 %v1361, %v1361
    %v1364 = vmul.f32 %v1362, %v1362
    %v1365 = vsel %vm189, %v1363, 0.0
    %1366 = vadd.xlane.f32.xlu0 %v1365
    %v1367 = vpop.xlane.xlu0 %1366
    %v1368 = vsel %vm189, %v1364, 0.0
    %1369 = vadd.xlane.f32.xlu0 %v1368
    %v1370 = vpop.xlane.xlu0 %1369
    %v1371 = vmul.f32 %v1367, %v1358
    %v1372 = vmul.f32 %v1370, %v1358
    %v1373 = vadd.f32 %v1371, 1e-05
    %v1374 = vadd.f32 %v1372, 1e-05
    %v1375 = vrsqrt.pop %v1373
    %v1376 = vrsqrt.pop %v1374
    %v1377 = vmul.f32 %v1361, %v1375
    %v1378 = vmul.f32 %v1362, %v1376
    %v1380 = vlaneseq
    %v1381 = vshrl.u32 %v1380, 7
    %v1382 = vsub.s32 0, %v1381
    %v1383 = vrot.slane %v1350, %v1382
    %v1385 = vmul.f32 %v1377, %v1383
    %v1386 = vmul.f32 %v1378, %v1383
    %v1388 = vlaneseq
    %v1389 = vshrl.u32 %v1388, 7
    %v1390 = vsub.s32 0, %v1389
    %v1391 = vrot.slane %v1351, %v1390
    %v1393 = vadd.f32 %v1385, %v1391
    %v1394 = vadd.f32 %v1386, %v1391
    %v1395 = vld [vmem:[%s23] sm:$0xff]
    %v1396 = vld [vmem:[%s23 + $0x8] sm:$0xff]
    %v1397 = vld [vmem:[%s23 + $0x10] sm:$0xff]
    %v1398 = vld [vmem:[%s23 + $0x18] sm:$0xff]
    %v1399 = vld [vmem:[%s29] sm:$0x1]
    %v1401 = vlaneseq
    %v1402 = vshrl.u32 %v1401, 7
    %v1403 = vsub.s32 0, %v1402
    %v1404 = vrot.slane %v1399, %v1403
    %v1407 = vsel %vm189, %v1393, 0
    %v1410 = vsel %vm189, %v1394, 0
    %1412 = vmatprep.subr.mxu0 0.0
    %1413 = vmatpush1.msra.mxu0 %v1395
    %1414 = vmatprep.subr.mxu0 0.0
    %1415 = vmatpush1.msra.mxu0 %v1396
    %1416 = vmatprep.subr.mxu0 0.0
    %1417 = vmatpush1.msra.mxu0 %v1397
    %1418 = vmatprep.subr.mxu0 0.0
    %1419 = vmatpush1.msra.mxu0 %v1398
    %1420 = vmatprep.subr.mxu0 0.0
    %1421 = vmatpush1.msra.mxu0 0.0
    %1422 = vmatprep.subr.mxu0 0.0
    %1423 = vmatpush1.msra.mxu0 0.0
    %1424 = vmatprep.subr.mxu0 0.0
    %1425 = vmatpush1.msra.mxu0 0.0
    %1426 = vmatprep.subr.mxu0 0.0
    %1427 = vmatpush1.msra.mxu0 0.0
    %1428 = vmatprep.subr.mxu0 0.0
    %1429 = vmatpush1.msra.mxu0 0.0
    %1430 = vmatprep.subr.mxu0 0.0
    %1431 = vmatpush1.msra.mxu0 0.0
    %1432 = vmatprep.subr.mxu0 0.0
    %1433 = vmatpush1.msra.mxu0 0.0
    %1434 = vmatprep.subr.mxu0 0.0
    %1435 = vmatpush1.msra.mxu0 0.0
    %1436 = vmatprep.subr.mxu0 0.0
    %1437 = vmatpush1.msra.mxu0 0.0
    %1438 = vmatprep.subr.mxu0 0.0
    %1439 = vmatpush1.msra.mxu0 0.0
    %1440 = vmatprep.subr.mxu0 0.0
    %1441 = vmatpush1.msra.mxu0 0.0
    %1442 = vmatprep.subr.mxu0 0.0
    %1443 = vmatpush1.msra.mxu0 0.0
    %1444 = vmatprep.subr.mxu0 0.0
    %1445 = vmatpush1.msra.mxu0 0.0
    %1446 = vmatprep.subr.mxu0 0.0
    %1447 = vmatpush1.msra.mxu0 0.0
    %1448 = vmatprep.subr.mxu0 0.0
    %1449 = vmatpush1.msra.mxu0 0.0
    %1450 = vmatprep.subr.mxu0 0.0
    %1451 = vmatpush1.msra.mxu0 0.0
    %1452 = vmatprep.subr.mxu0 0.0
    %1453 = vmatpush1.msra.mxu0 0.0
    %1454 = vmatprep.subr.mxu0 0.0
    %1455 = vmatpush1.msra.mxu0 0.0
    %1456 = vmatprep.subr.mxu0 0.0
    %1457 = vmatpush1.msra.mxu0 0.0
    %1458 = vmatprep.subr.mxu0 0.0
    %1459 = vmatpush1.msra.mxu0 0.0
    %1460 = vmatprep.subr.mxu0 0.0
    %1461 = vmatpush1.msra.mxu0 0.0
    %1462 = vmatprep.subr.mxu0 0.0
    %1463 = vmatpush1.msra.mxu0 0.0
    %1464 = vmatprep.subr.mxu0 0.0
    %1465 = vmatpush1.msra.mxu0 0.0
    %1466 = vmatprep.subr.mxu0 0.0
    %1467 = vmatpush1.msra.mxu0 0.0
    %1468 = vmatprep.subr.mxu0 0.0
    %1469 = vmatpush1.msra.mxu0 0.0
    %1470 = vmatprep.subr.mxu0 0.0
    %1471 = vmatpush1.msra.mxu0 0.0
    %1472 = vmatprep.subr.mxu0 0.0
    %1473 = vmatpush1.msra.mxu0 0.0
    %1474 = vmatprep.subr.mxu0 0.0
    %1475 = vmatpush1.msra.mxu0 0.0
    %1476 = vmatprep.mubr.f32.mxu0 0.0
    %1477 = vmatmul.mubr.f32.gmra.mrb[0].mxu0 %v1407
    %v1478 = vpop.f32.mrb[0].mxu0
    %v1479 = vadd.f32 %v1404, %v1478
    %v1480 = vpop.f32.mrb[0].mxu0
    %1481 = vmatprep.mubr.f32.mxu0 0.0
    %1482 = vmatmul.mubr.f32.gmra.mrb[0].mxu0 %v1410
    %v1483 = vpop.f32.mrb[0].mxu0
    %v1484 = vadd.f32 %v1404, %v1483
    %v1485 = vpop.f32.mrb[0].mxu0
    %1486 = vdwg.mxu0
    %v1487 = vld [vmem:[%s25] sm:$0xff]
    %v1488 = vld [vmem:[%s25 + $0x8] sm:$0xff]
    %v1489 = vld [vmem:[%s25 + $0x10] sm:$0xff]
    %v1490 = vld [vmem:[%s25 + $0x18] sm:$0xff]
    %v1491 = vld [vmem:[%s31] sm:$0x1]
    %v1493 = vlaneseq
    %v1494 = vshrl.u32 %v1493, 7
    %v1495 = vsub.s32 0, %v1494
    %v1496 = vrot.slane %v1491, %v1495
    %v1499 = vsel %vm189, %v125, 0
    %v1502 = vsel %vm189, %v126, 0
    %v1505 = vsel %vm189, %v127, 0
    %v1508 = vsel %vm189, %v128, 0
    %1510 = vmatprep.subr.mxu0 0.0
    %1511 = vmatpush1.msra.mxu0 %v1487
    %1512 = vmatprep.subr.mxu0 0.0
    %1513 = vmatpush1.msra.mxu0 %v1488
    %1514 = vmatprep.subr.mxu0 0.0
    %1515 = vmatpush1.msra.mxu0 %v1489
    %1516 = vmatprep.subr.mxu0 0.0
    %1517 = vmatpush1.msra.mxu0 %v1490
    %1518 = vmatprep.subr.mxu0 0.0
    %1519 = vmatpush1.msra.mxu0 0.0
    %1520 = vmatprep.subr.mxu0 0.0
    %1521 = vmatpush1.msra.mxu0 0.0
    %1522 = vmatprep.subr.mxu0 0.0
    %1523 = vmatpush1.msra.mxu0 0.0
    %1524 = vmatprep.subr.mxu0 0.0
    %1525 = vmatpush1.msra.mxu0 0.0
    %1526 = vmatprep.subr.mxu0 0.0
    %1527 = vmatpush1.msra.mxu0 0.0
    %1528 = vmatprep.subr.mxu0 0.0
    %1529 = vmatpush1.msra.mxu0 0.0
    %1530 = vmatprep.subr.mxu0 0.0
    %1531 = vmatpush1.msra.mxu0 0.0
    %1532 = vmatprep.subr.mxu0 0.0
    %1533 = vmatpush1.msra.mxu0 0.0
    %1534 = vmatprep.subr.mxu0 0.0
    %1535 = vmatpush1.msra.mxu0 0.0
    %1536 = vmatprep.subr.mxu0 0.0
    %1537 = vmatpush1.msra.mxu0 0.0
    %1538 = vmatprep.subr.mxu0 0.0
    %1539 = vmatpush1.msra.mxu0 0.0
    %1540 = vmatprep.subr.mxu0 0.0
    %1541 = vmatpush1.msra.mxu0 0.0
    %1542 = vmatprep.subr.mxu0 0.0
    %1543 = vmatpush1.msra.mxu0 0.0
    %1544 = vmatprep.subr.mxu0 0.0
    %1545 = vmatpush1.msra.mxu0 0.0
    %1546 = vmatprep.subr.mxu0 0.0
    %1547 = vmatpush1.msra.mxu0 0.0
    %1548 = vmatprep.subr.mxu0 0.0
    %1549 = vmatpush1.msra.mxu0 0.0
    %1550 = vmatprep.subr.mxu0 0.0
    %1551 = vmatpush1.msra.mxu0 0.0
    %1552 = vmatprep.subr.mxu0 0.0
    %1553 = vmatpush1.msra.mxu0 0.0
    %1554 = vmatprep.subr.mxu0 0.0
    %1555 = vmatpush1.msra.mxu0 0.0
    %1556 = vmatprep.subr.mxu0 0.0
    %1557 = vmatpush1.msra.mxu0 0.0
    %1558 = vmatprep.subr.mxu0 0.0
    %1559 = vmatpush1.msra.mxu0 0.0
    %1560 = vmatprep.subr.mxu0 0.0
    %1561 = vmatpush1.msra.mxu0 0.0
    %1562 = vmatprep.subr.mxu0 0.0
    %1563 = vmatpush1.msra.mxu0 0.0
    %1564 = vmatprep.subr.mxu0 0.0
    %1565 = vmatpush1.msra.mxu0 0.0
    %1566 = vmatprep.subr.mxu0 0.0
    %1567 = vmatpush1.msra.mxu0 0.0
    %1568 = vmatprep.subr.mxu0 0.0
    %1569 = vmatpush1.msra.mxu0 0.0
    %1570 = vmatprep.subr.mxu0 0.0
    %1571 = vmatpush1.msra.mxu0 0.0
    %1572 = vmatprep.subr.mxu0 0.0
    %1573 = vmatpush1.msra.mxu0 0.0
    %1574 = vmatprep.mubr.f32.mxu0 0.0
    %1575 = vmatmul.mubr.f32.gmra.mrb[0].mxu0 %v1499
    %v1576 = vpop.f32.mrb[0].mxu0
    %v1577 = vadd.f32 %v1496, %v1576
    %v1578 = vpop.f32.mrb[0].mxu0
    %1579 = vmatprep.mubr.f32.mxu0 0.0
    %1580 = vmatmul.mubr.f32.gmra.mrb[0].mxu0 %v1502
    %v1581 = vpop.f32.mrb[0].mxu0
    %v1582 = vadd.f32 %v1496, %v1581
    %v1583 = vpop.f32.mrb[0].mxu0
    %1584 = vmatprep.mubr.f32.mxu0 0.0
    %1585 = vmatmul.mubr.f32.gmra.mrb[0].mxu0 %v1505
    %v1586 = vpop.f32.mrb[0].mxu0
    %v1587 = vadd.f32 %v1496, %v1586
    %v1588 = vpop.f32.mrb[0].mxu0
    %1589 = vmatprep.mubr.f32.mxu0 0.0
    %1590 = vmatmul.mubr.f32.gmra.mrb[0].mxu0 %v1508
    %v1591 = vpop.f32.mrb[0].mxu0
    %v1592 = vadd.f32 %v1496, %v1591
    %v1593 = vpop.f32.mrb[0].mxu0
    %1594 = vdwg.mxu0
    %v1595 = vld [vmem:[%s27] sm:$0xff]
    %v1596 = vld [vmem:[%s27 + $0x8] sm:$0xff]
    %v1597 = vld [vmem:[%s27 + $0x10] sm:$0xff]
    %v1598 = vld [vmem:[%s27 + $0x18] sm:$0xff]
    %v1599 = vld [vmem:[%s33] sm:$0x1]
    %v1601 = vlaneseq
    %v1602 = vshrl.u32 %v1601, 7
    %v1603 = vsub.s32 0, %v1602
    %v1604 = vrot.slane %v1599, %v1603
    %1606 = vmatprep.subr.mxu0 0.0
    %1607 = vmatpush1.msra.mxu0 %v1595
    %1608 = vmatprep.subr.mxu0 0.0
    %1609 = vmatpush1.msra.mxu0 %v1596
    %1610 = vmatprep.subr.mxu0 0.0
    %1611 = vmatpush1.msra.mxu0 %v1597
    %1612 = vmatprep.subr.mxu0 0.0
    %1613 = vmatpush1.msra.mxu0 %v1598
    %1614 = vmatprep.subr.mxu0 0.0
    %1615 = vmatpush1.msra.mxu0 0.0
    %1616 = vmatprep.subr.mxu0 0.0
    %1617 = vmatpush1.msra.mxu0 0.0
    %1618 = vmatprep.subr.mxu0 0.0
    %1619 = vmatpush1.msra.mxu0 0.0
    %1620 = vmatprep.subr.mxu0 0.0
    %1621 = vmatpush1.msra.mxu0 0.0
    %1622 = vmatprep.subr.mxu0 0.0
    %1623 = vmatpush1.msra.mxu0 0.0
    %1624 = vmatprep.subr.mxu0 0.0
    %1625 = vmatpush1.msra.mxu0 0.0
    %1626 = vmatprep.subr.mxu0 0.0
    %1627 = vmatpush1.msra.mxu0 0.0
    %1628 = vmatprep.subr.mxu0 0.0
    %1629 = vmatpush1.msra.mxu0 0.0
    %1630 = vmatprep.subr.mxu0 0.0
    %1631 = vmatpush1.msra.mxu0 0.0
    %1632 = vmatprep.subr.mxu0 0.0
    %1633 = vmatpush1.msra.mxu0 0.0
    %1634 = vmatprep.subr.mxu0 0.0
    %1635 = vmatpush1.msra.mxu0 0.0
    %1636 = vmatprep.subr.mxu0 0.0
    %1637 = vmatpush1.msra.mxu0 0.0
    %1638 = vmatprep.subr.mxu0 0.0
    %1639 = vmatpush1.msra.mxu0 0.0
    %1640 = vmatprep.subr.mxu0 0.0
    %1641 = vmatpush1.msra.mxu0 0.0
    %1642 = vmatprep.subr.mxu0 0.0
    %1643 = vmatpush1.msra.mxu0 0.0
    %1644 = vmatprep.subr.mxu0 0.0
    %1645 = vmatpush1.msra.mxu0 0.0
    %1646 = vmatprep.subr.mxu0 0.0
    %1647 = vmatpush1.msra.mxu0 0.0
    %1648 = vmatprep.subr.mxu0 0.0
    %1649 = vmatpush1.msra.mxu0 0.0
    %1650 = vmatprep.subr.mxu0 0.0
    %1651 = vmatpush1.msra.mxu0 0.0
    %1652 = vmatprep.subr.mxu0 0.0
    %1653 = vmatpush1.msra.mxu0 0.0
    %1654 = vmatprep.subr.mxu0 0.0
    %1655 = vmatpush1.msra.mxu0 0.0
    %1656 = vmatprep.subr.mxu0 0.0
    %1657 = vmatpush1.msra.mxu0 0.0
    %1658 = vmatprep.subr.mxu0 0.0
    %1659 = vmatpush1.msra.mxu0 0.0
    %1660 = vmatprep.subr.mxu0 0.0
    %1661 = vmatpush1.msra.mxu0 0.0
    %1662 = vmatprep.subr.mxu0 0.0
    %1663 = vmatpush1.msra.mxu0 0.0
    %1664 = vmatprep.subr.mxu0 0.0
    %1665 = vmatpush1.msra.mxu0 0.0
    %1666 = vmatprep.subr.mxu0 0.0
    %1667 = vmatpush1.msra.mxu0 0.0
    %1668 = vmatprep.subr.mxu0 0.0
    %1669 = vmatpush1.msra.mxu0 0.0
    %1670 = vmatprep.mubr.f32.mxu0 0.0
    %1671 = vmatmul.mubr.f32.gmra.mrb[0].mxu0 %v1499
    %v1672 = vpop.f32.mrb[0].mxu0
    %v1673 = vadd.f32 %v1604, %v1672
    %v1674 = vpop.f32.mrb[0].mxu0
    %1675 = vmatprep.mubr.f32.mxu0 0.0
    %1676 = vmatmul.mubr.f32.gmra.mrb[0].mxu0 %v1502
    %v1677 = vpop.f32.mrb[0].mxu0
    %v1678 = vadd.f32 %v1604, %v1677
    %v1679 = vpop.f32.mrb[0].mxu0
    %1680 = vmatprep.mubr.f32.mxu0 0.0
    %1681 = vmatmul.mubr.f32.gmra.mrb[0].mxu0 %v1505
    %v1682 = vpop.f32.mrb[0].mxu0
    %v1683 = vadd.f32 %v1604, %v1682
    %v1684 = vpop.f32.mrb[0].mxu0
    %1685 = vmatprep.mubr.f32.mxu0 0.0
    %1686 = vmatmul.mubr.f32.gmra.mrb[0].mxu0 %v1508
    %v1687 = vpop.f32.mrb[0].mxu0
    %v1688 = vadd.f32 %v1604, %v1687
    %v1689 = vpop.f32.mrb[0].mxu0
    %1690 = vdwg.mxu0
    %v1691 = vmul.f32 %v1577, %v450
    %v1692 = vmul.f32 %v1582, %v450
    %v1693 = vmul.f32 %v1587, %v450
    %v1694 = vmul.f32 %v1592, %v450
    %v1695 = vmul.f32 %v1577, %v454
    %v1696 = vmul.f32 %v1582, %v454
    %v1697 = vmul.f32 %v1587, %v454
    %v1698 = vmul.f32 %v1592, %v454
    %v1699 = vmul.f32 %v1577, %v458
    %v1700 = vmul.f32 %v1582, %v458
    %v1701 = vmul.f32 %v1587, %v458
    %v1702 = vmul.f32 %v1592, %v458
    %v1703 = vmul.f32 %v1577, %v462
    %v1704 = vmul.f32 %v1582, %v462
    %v1705 = vmul.f32 %v1587, %v462
    %v1706 = vmul.f32 %v1592, %v462
    %v1707 = vmul.f32 %v1673, %v450
    %v1708 = vmul.f32 %v1678, %v450
    %v1709 = vmul.f32 %v1683, %v450
    %v1710 = vmul.f32 %v1688, %v450
    %v1711 = vmul.f32 %v1673, %v454
    %v1712 = vmul.f32 %v1678, %v454
    %v1713 = vmul.f32 %v1683, %v454
    %v1714 = vmul.f32 %v1688, %v454
    %v1715 = vmul.f32 %v1673, %v458
    %v1716 = vmul.f32 %v1678, %v458
    %v1717 = vmul.f32 %v1683, %v458
    %v1718 = vmul.f32 %v1688, %v458
    %v1719 = vmul.f32 %v1673, %v462
    %v1720 = vmul.f32 %v1678, %v462
    %v1721 = vmul.f32 %v1683, %v462
    %v1722 = vmul.f32 %v1688, %v462
    %v1724 = vsel %vm189, %v1479, 0
    %v1727 = vsel %vm189, %v1484, 0
    %v1730 = vsel %vm189, %v1691, 0
    %v1733 = vsel %vm189, %v1692, 0
    %v1736 = vsel %vm189, %v1693, 0
    %v1739 = vsel %vm189, %v1694, 0
    %1741 = vmatprep.subr.mxu0 0.0
    %1742 = vmatpush1.xpose.msra.mxu0 %v1730
    %1743 = vmatprep.subr.mxu0 0.0
    %1744 = vmatpush1.xpose.msra.mxu0 %v1733
    %1745 = vmatprep.subr.mxu0 0.0
    %1746 = vmatpush1.xpose.msra.mxu0 %v1736
    %1747 = vmatprep.subr.mxu0 0.0
    %1748 = vmatpush1.xpose.msra.mxu0 %v1739
    %1749 = vmatprep.subr.mxu0 0.0
    %1750 = vmatpush1.xpose.msra.mxu0 0.0
    %1751 = vmatprep.subr.mxu0 0.0
    %1752 = vmatpush1.xpose.msra.mxu0 0.0
    %1753 = vmatprep.subr.mxu0 0.0
    %1754 = vmatpush1.xpose.msra.mxu0 0.0
    %1755 = vmatprep.subr.mxu0 0.0
    %1756 = vmatpush1.xpose.msra.mxu0 0.0
    %1757 = vmatprep.subr.mxu0 0.0
    %1758 = vmatpush1.xpose.msra.mxu0 0.0
    %1759 = vmatprep.subr.mxu0 0.0
    %1760 = vmatpush1.xpose.msra.mxu0 0.0
    %1761 = vmatprep.subr.mxu0 0.0
    %1762 = vmatpush1.xpose.msra.mxu0 0.0
    %1763 = vmatprep.subr.mxu0 0.0
    %1764 = vmatpush1.xpose.msra.mxu0 0.0
    %1765 = vmatprep.subr.mxu0 0.0
    %1766 = vmatpush1.xpose.msra.mxu0 0.0
    %1767 = vmatprep.subr.mxu0 0.0
    %1768 = vmatpush1.xpose.msra.mxu0 0.0
    %1769 = vmatprep.subr.mxu0 0.0
    %1770 = vmatpush1.xpose.msra.mxu0 0.0
    %1771 = vmatprep.subr.mxu0 0.0
    %1772 = vmatpush1.xpose.msra.mxu0 0.0
    %1773 = vmatprep.subr.mxu0 0.0
    %1774 = vmatpush1.xpose.msra.mxu0 0.0
    %1775 = vmatprep.subr.mxu0 0.0
    %1776 = vmatpush1.xpose.msra.mxu0 0.0
    %1777 = vmatprep.subr.mxu0 0.0
    %1778 = vmatpush1.xpose.msra.mxu0 0.0
    %1779 = vmatprep.subr.mxu0 0.0
    %1780 = vmatpush1.xpose.msra.mxu0 0.0
    %1781 = vmatprep.subr.mxu0 0.0
    %1782 = vmatpush1.xpose.msra.mxu0 0.0
    %1783 = vmatprep.subr.mxu0 0.0
    %1784 = vmatpush1.xpose.msra.mxu0 0.0
    %1785 = vmatprep.subr.mxu0 0.0
    %1786 = vmatpush1.xpose.msra.mxu0 0.0
    %1787 = vmatprep.subr.mxu0 0.0
    %1788 = vmatpush1.xpose.msra.mxu0 0.0
    %1789 = vmatprep.subr.mxu0 0.0
    %1790 = vmatpush1.xpose.msra.mxu0 0.0
    %1791 = vmatprep.subr.mxu0 0.0
    %1792 = vmatpush1.xpose.msra.mxu0 0.0
    %1793 = vmatprep.subr.mxu0 0.0
    %1794 = vmatpush1.xpose.msra.mxu0 0.0
    %1795 = vmatprep.subr.mxu0 0.0
    %1796 = vmatpush1.xpose.msra.mxu0 0.0
    %1797 = vmatprep.subr.mxu0 0.0
    %1798 = vmatpush1.xpose.msra.mxu0 0.0
    %1799 = vmatprep.subr.mxu0 0.0
    %1800 = vmatpush1.xpose.msra.mxu0 0.0
    %1801 = vmatprep.subr.mxu0 0.0
    %1802 = vmatpush1.xpose.msra.mxu0 0.0
    %1803 = vmatprep.subr.mxu0 0.0
    %1804 = vmatpush1.xpose.msra.mxu0 0.0
    %1805 = vmatprep.mubr.f32.mxu0 0.0
    %1806 = vmatmul.mubr.f32.gmra.mrb[0].mxu0 %v1724
    %v1807 = vpop.f32.mrb[0].mxu0
    %v1808 = vadd.f32 0.0, %v1807
    %v1809 = vpop.f32.mrb[0].mxu0
    %1810 = vmatprep.mubr.f32.mxu0 0.0
    %1811 = vmatmul.mubr.f32.gmra.mrb[0].mxu0 %v1727
    %v1812 = vpop.f32.mrb[0].mxu0
    %v1813 = vadd.f32 0.0, %v1812
    %v1814 = vpop.f32.mrb[0].mxu0
    %1815 = vdwg.mxu0
    %v1817 = vsel %vm189, %v1695, 0
    %v1820 = vsel %vm189, %v1696, 0
    %v1823 = vsel %vm189, %v1697, 0
    %v1826 = vsel %vm189, %v1698, 0
    %1828 = vmatprep.subr.mxu0 0.0
    %1829 = vmatpush1.xpose.msra.mxu0 %v1817
    %1830 = vmatprep.subr.mxu0 0.0
    %1831 = vmatpush1.xpose.msra.mxu0 %v1820
    %1832 = vmatprep.subr.mxu0 0.0
    %1833 = vmatpush1.xpose.msra.mxu0 %v1823
    %1834 = vmatprep.subr.mxu0 0.0
    %1835 = vmatpush1.xpose.msra.mxu0 %v1826
    %1836 = vmatprep.subr.mxu0 0.0
    %1837 = vmatpush1.xpose.msra.mxu0 0.0
    %1838 = vmatprep.subr.mxu0 0.0
    %1839 = vmatpush1.xpose.msra.mxu0 0.0
    %1840 = vmatprep.subr.mxu0 0.0
    %1841 = vmatpush1.xpose.msra.mxu0 0.0
    %1842 = vmatprep.subr.mxu0 0.0
    %1843 = vmatpush1.xpose.msra.mxu0 0.0
    %1844 = vmatprep.subr.mxu0 0.0
    %1845 = vmatpush1.xpose.msra.mxu0 0.0
    %1846 = vmatprep.subr.mxu0 0.0
    %1847 = vmatpush1.xpose.msra.mxu0 0.0
    %1848 = vmatprep.subr.mxu0 0.0
    %1849 = vmatpush1.xpose.msra.mxu0 0.0
    %1850 = vmatprep.subr.mxu0 0.0
    %1851 = vmatpush1.xpose.msra.mxu0 0.0
    %1852 = vmatprep.subr.mxu0 0.0
    %1853 = vmatpush1.xpose.msra.mxu0 0.0
    %1854 = vmatprep.subr.mxu0 0.0
    %1855 = vmatpush1.xpose.msra.mxu0 0.0
    %1856 = vmatprep.subr.mxu0 0.0
    %1857 = vmatpush1.xpose.msra.mxu0 0.0
    %1858 = vmatprep.subr.mxu0 0.0
    %1859 = vmatpush1.xpose.msra.mxu0 0.0
    %1860 = vmatprep.subr.mxu0 0.0
    %1861 = vmatpush1.xpose.msra.mxu0 0.0
    %1862 = vmatprep.subr.mxu0 0.0
    %1863 = vmatpush1.xpose.msra.mxu0 0.0
    %1864 = vmatprep.subr.mxu0 0.0
    %1865 = vmatpush1.xpose.msra.mxu0 0.0
    %1866 = vmatprep.subr.mxu0 0.0
    %1867 = vmatpush1.xpose.msra.mxu0 0.0
    %1868 = vmatprep.subr.mxu0 0.0
    %1869 = vmatpush1.xpose.msra.mxu0 0.0
    %1870 = vmatprep.subr.mxu0 0.0
    %1871 = vmatpush1.xpose.msra.mxu0 0.0
    %1872 = vmatprep.subr.mxu0 0.0
    %1873 = vmatpush1.xpose.msra.mxu0 0.0
    %1874 = vmatprep.subr.mxu0 0.0
    %1875 = vmatpush1.xpose.msra.mxu0 0.0
    %1876 = vmatprep.subr.mxu0 0.0
    %1877 = vmatpush1.xpose.msra.mxu0 0.0
    %1878 = vmatprep.subr.mxu0 0.0
    %1879 = vmatpush1.xpose.msra.mxu0 0.0
    %1880 = vmatprep.subr.mxu0 0.0
    %1881 = vmatpush1.xpose.msra.mxu0 0.0
    %1882 = vmatprep.subr.mxu0 0.0
    %1883 = vmatpush1.xpose.msra.mxu0 0.0
    %1884 = vmatprep.subr.mxu0 0.0
    %1885 = vmatpush1.xpose.msra.mxu0 0.0
    %1886 = vmatprep.subr.mxu0 0.0
    %1887 = vmatpush1.xpose.msra.mxu0 0.0
    %1888 = vmatprep.subr.mxu0 0.0
    %1889 = vmatpush1.xpose.msra.mxu0 0.0
    %1890 = vmatprep.subr.mxu0 0.0
    %1891 = vmatpush1.xpose.msra.mxu0 0.0
    %1892 = vmatprep.mubr.f32.mxu0 0.0
    %1893 = vmatmul.mubr.f32.gmra.mrb[0].mxu0 %v1724
    %v1894 = vpop.f32.mrb[0].mxu0
    %v1895 = vadd.f32 0.0, %v1894
    %v1896 = vpop.f32.mrb[0].mxu0
    %1897 = vmatprep.mubr.f32.mxu0 0.0
    %1898 = vmatmul.mubr.f32.gmra.mrb[0].mxu0 %v1727
    %v1899 = vpop.f32.mrb[0].mxu0
    %v1900 = vadd.f32 0.0, %v1899
    %v1901 = vpop.f32.mrb[0].mxu0
    %1902 = vdwg.mxu0
    %v1904 = vsel %vm189, %v1699, 0
    %v1907 = vsel %vm189, %v1700, 0
    %v1910 = vsel %vm189, %v1701, 0
    %v1913 = vsel %vm189, %v1702, 0
    %1915 = vmatprep.subr.mxu0 0.0
    %1916 = vmatpush1.xpose.msra.mxu0 %v1904
    %1917 = vmatprep.subr.mxu0 0.0
    %1918 = vmatpush1.xpose.msra.mxu0 %v1907
    %1919 = vmatprep.subr.mxu0 0.0
    %1920 = vmatpush1.xpose.msra.mxu0 %v1910
    %1921 = vmatprep.subr.mxu0 0.0
    %1922 = vmatpush1.xpose.msra.mxu0 %v1913
    %1923 = vmatprep.subr.mxu0 0.0
    %1924 = vmatpush1.xpose.msra.mxu0 0.0
    %1925 = vmatprep.subr.mxu0 0.0
    %1926 = vmatpush1.xpose.msra.mxu0 0.0
    %1927 = vmatprep.subr.mxu0 0.0
    %1928 = vmatpush1.xpose.msra.mxu0 0.0
    %1929 = vmatprep.subr.mxu0 0.0
    %1930 = vmatpush1.xpose.msra.mxu0 0.0
    %1931 = vmatprep.subr.mxu0 0.0
    %1932 = vmatpush1.xpose.msra.mxu0 0.0
    %1933 = vmatprep.subr.mxu0 0.0
    %1934 = vmatpush1.xpose.msra.mxu0 0.0
    %1935 = vmatprep.subr.mxu0 0.0
    %1936 = vmatpush1.xpose.msra.mxu0 0.0
    %1937 = vmatprep.subr.mxu0 0.0
    %1938 = vmatpush1.xpose.msra.mxu0 0.0
    %1939 = vmatprep.subr.mxu0 0.0
    %1940 = vmatpush1.xpose.msra.mxu0 0.0
    %1941 = vmatprep.subr.mxu0 0.0
    %1942 = vmatpush1.xpose.msra.mxu0 0.0
    %1943 = vmatprep.subr.mxu0 0.0
    %1944 = vmatpush1.xpose.msra.mxu0 0.0
    %1945 = vmatprep.subr.mxu0 0.0
    %1946 = vmatpush1.xpose.msra.mxu0 0.0
    %1947 = vmatprep.subr.mxu0 0.0
    %1948 = vmatpush1.xpose.msra.mxu0 0.0
    %1949 = vmatprep.subr.mxu0 0.0
    %1950 = vmatpush1.xpose.msra.mxu0 0.0
    %1951 = vmatprep.subr.mxu0 0.0
    %1952 = vmatpush1.xpose.msra.mxu0 0.0
    %1953 = vmatprep.subr.mxu0 0.0
    %1954 = vmatpush1.xpose.msra.mxu0 0.0
    %1955 = vmatprep.subr.mxu0 0.0
    %1956 = vmatpush1.xpose.msra.mxu0 0.0
    %1957 = vmatprep.subr.mxu0 0.0
    %1958 = vmatpush1.xpose.msra.mxu0 0.0
    %1959 = vmatprep.subr.mxu0 0.0
    %1960 = vmatpush1.xpose.msra.mxu0 0.0
    %1961 = vmatprep.subr.mxu0 0.0
    %1962 = vmatpush1.xpose.msra.mxu0 0.0
    %1963 = vmatprep.subr.mxu0 0.0
    %1964 = vmatpush1.xpose.msra.mxu0 0.0
    %1965 = vmatprep.subr.mxu0 0.0
    %1966 = vmatpush1.xpose.msra.mxu0 0.0
    %1967 = vmatprep.subr.mxu0 0.0
    %1968 = vmatpush1.xpose.msra.mxu0 0.0
    %1969 = vmatprep.subr.mxu0 0.0
    %1970 = vmatpush1.xpose.msra.mxu0 0.0
    %1971 = vmatprep.subr.mxu0 0.0
    %1972 = vmatpush1.xpose.msra.mxu0 0.0
    %1973 = vmatprep.subr.mxu0 0.0
    %1974 = vmatpush1.xpose.msra.mxu0 0.0
    %1975 = vmatprep.subr.mxu0 0.0
    %1976 = vmatpush1.xpose.msra.mxu0 0.0
    %1977 = vmatprep.subr.mxu0 0.0
    %1978 = vmatpush1.xpose.msra.mxu0 0.0
    %1979 = vmatprep.mubr.f32.mxu0 0.0
    %1980 = vmatmul.mubr.f32.gmra.mrb[0].mxu0 %v1724
    %v1981 = vpop.f32.mrb[0].mxu0
    %v1982 = vadd.f32 0.0, %v1981
    %v1983 = vpop.f32.mrb[0].mxu0
    %1984 = vmatprep.mubr.f32.mxu0 0.0
    %1985 = vmatmul.mubr.f32.gmra.mrb[0].mxu0 %v1727
    %v1986 = vpop.f32.mrb[0].mxu0
    %v1987 = vadd.f32 0.0, %v1986
    %v1988 = vpop.f32.mrb[0].mxu0
    %1989 = vdwg.mxu0
    %v1991 = vsel %vm189, %v1703, 0
    %v1994 = vsel %vm189, %v1704, 0
    %v1997 = vsel %vm189, %v1705, 0
    %v2000 = vsel %vm189, %v1706, 0
    %2002 = vmatprep.subr.mxu0 0.0
    %2003 = vmatpush1.xpose.msra.mxu0 %v1991
    %2004 = vmatprep.subr.mxu0 0.0
    %2005 = vmatpush1.xpose.msra.mxu0 %v1994
    %2006 = vmatprep.subr.mxu0 0.0
    %2007 = vmatpush1.xpose.msra.mxu0 %v1997
    %2008 = vmatprep.subr.mxu0 0.0
    %2009 = vmatpush1.xpose.msra.mxu0 %v2000
    %2010 = vmatprep.subr.mxu0 0.0
    %2011 = vmatpush1.xpose.msra.mxu0 0.0
    %2012 = vmatprep.subr.mxu0 0.0
    %2013 = vmatpush1.xpose.msra.mxu0 0.0
    %2014 = vmatprep.subr.mxu0 0.0
    %2015 = vmatpush1.xpose.msra.mxu0 0.0
    %2016 = vmatprep.subr.mxu0 0.0
    %2017 = vmatpush1.xpose.msra.mxu0 0.0
    %2018 = vmatprep.subr.mxu0 0.0
    %2019 = vmatpush1.xpose.msra.mxu0 0.0
    %2020 = vmatprep.subr.mxu0 0.0
    %2021 = vmatpush1.xpose.msra.mxu0 0.0
    %2022 = vmatprep.subr.mxu0 0.0
    %2023 = vmatpush1.xpose.msra.mxu0 0.0
    %2024 = vmatprep.subr.mxu0 0.0
    %2025 = vmatpush1.xpose.msra.mxu0 0.0
    %2026 = vmatprep.subr.mxu0 0.0
    %2027 = vmatpush1.xpose.msra.mxu0 0.0
    %2028 = vmatprep.subr.mxu0 0.0
    %2029 = vmatpush1.xpose.msra.mxu0 0.0
    %2030 = vmatprep.subr.mxu0 0.0
    %2031 = vmatpush1.xpose.msra.mxu0 0.0
    %2032 = vmatprep.subr.mxu0 0.0
    %2033 = vmatpush1.xpose.msra.mxu0 0.0
    %2034 = vmatprep.subr.mxu0 0.0
    %2035 = vmatpush1.xpose.msra.mxu0 0.0
    %2036 = vmatprep.subr.mxu0 0.0
    %2037 = vmatpush1.xpose.msra.mxu0 0.0
    %2038 = vmatprep.subr.mxu0 0.0
    %2039 = vmatpush1.xpose.msra.mxu0 0.0
    %2040 = vmatprep.subr.mxu0 0.0
    %2041 = vmatpush1.xpose.msra.mxu0 0.0
    %2042 = vmatprep.subr.mxu0 0.0
    %2043 = vmatpush1.xpose.msra.mxu0 0.0
    %2044 = vmatprep.subr.mxu0 0.0
    %2045 = vmatpush1.xpose.msra.mxu0 0.0
    %2046 = vmatprep.subr.mxu0 0.0
    %2047 = vmatpush1.xpose.msra.mxu0 0.0
    %2048 = vmatprep.subr.mxu0 0.0
    %2049 = vmatpush1.xpose.msra.mxu0 0.0
    %2050 = vmatprep.subr.mxu0 0.0
    %2051 = vmatpush1.xpose.msra.mxu0 0.0
    %2052 = vmatprep.subr.mxu0 0.0
    %2053 = vmatpush1.xpose.msra.mxu0 0.0
    %2054 = vmatprep.subr.mxu0 0.0
    %2055 = vmatpush1.xpose.msra.mxu0 0.0
    %2056 = vmatprep.subr.mxu0 0.0
    %2057 = vmatpush1.xpose.msra.mxu0 0.0
    %2058 = vmatprep.subr.mxu0 0.0
    %2059 = vmatpush1.xpose.msra.mxu0 0.0
    %2060 = vmatprep.subr.mxu0 0.0
    %2061 = vmatpush1.xpose.msra.mxu0 0.0
    %2062 = vmatprep.subr.mxu0 0.0
    %2063 = vmatpush1.xpose.msra.mxu0 0.0
    %2064 = vmatprep.subr.mxu0 0.0
    %2065 = vmatpush1.xpose.msra.mxu0 0.0
    %2066 = vmatprep.mubr.f32.mxu0 0.0
    %2067 = vmatmul.mubr.f32.gmra.mrb[0].mxu0 %v1724
    %v2068 = vpop.f32.mrb[0].mxu0
    %v2069 = vadd.f32 0.0, %v2068
    %v2070 = vpop.f32.mrb[0].mxu0
    %2071 = vmatprep.mubr.f32.mxu0 0.0
    %2072 = vmatmul.mubr.f32.gmra.mrb[0].mxu0 %v1727
    %v2073 = vpop.f32.mrb[0].mxu0
    %v2074 = vadd.f32 0.0, %v2073
    %v2075 = vpop.f32.mrb[0].mxu0
    %2076 = vdwg.mxu0
    %v2077 = vmul.f32 %v1808, 0.35355338
    %v2078 = vmul.f32 %v1813, 0.35355338
    %v2079 = vmul.f32 %v1895, 0.35355338
    %v2080 = vmul.f32 %v1900, 0.35355338
    %v2081 = vmul.f32 %v1982, 0.35355338
    %v2082 = vmul.f32 %v1987, 0.35355338
    %v2083 = vmul.f32 %v2069, 0.35355338
    %v2084 = vmul.f32 %v2074, 0.35355338
    %v2085 = vadd.f32 %v2077, %v176
    %v2086 = vadd.f32 %v2078, %v177
    %v2087 = vadd.f32 %v2079, %v176
    %v2088 = vadd.f32 %v2080, %v177
    %v2089 = vadd.f32 %v2081, %v176
    %v2090 = vadd.f32 %v2082, %v177
    %v2091 = vadd.f32 %v2083, %v176
    %v2092 = vadd.f32 %v2084, %v177
    %v2093 = vsel %vm189, %v2085, -inf
    %2094 = vmax.xlane.f32.xlu0 %v2093
    %v2095 = vpop.xlane.xlu0 %2094
    %v2096 = vsel %vm189, %v2086, -inf
    %2097 = vmax.xlane.f32.xlu0 %v2096
    %v2098 = vpop.xlane.xlu0 %2097
    %v2099 = vsel %vm189, %v2087, -inf
    %2100 = vmax.xlane.f32.xlu0 %v2099
    %v2101 = vpop.xlane.xlu0 %2100
    %v2102 = vsel %vm189, %v2088, -inf
    %2103 = vmax.xlane.f32.xlu0 %v2102
    %v2104 = vpop.xlane.xlu0 %2103
    %v2105 = vsel %vm189, %v2089, -inf
    %2106 = vmax.xlane.f32.xlu0 %v2105
    %v2107 = vpop.xlane.xlu0 %2106
    %v2108 = vsel %vm189, %v2090, -inf
    %2109 = vmax.xlane.f32.xlu0 %v2108
    %v2110 = vpop.xlane.xlu0 %2109
    %v2111 = vsel %vm189, %v2091, -inf
    %2112 = vmax.xlane.f32.xlu0 %v2111
    %v2113 = vpop.xlane.xlu0 %2112
    %v2114 = vsel %vm189, %v2092, -inf
    %2115 = vmax.xlane.f32.xlu0 %v2114
    %v2116 = vpop.xlane.xlu0 %2115
    %v2117 = vsub.f32 %v2085, %v2095
    %v2118 = vsub.f32 %v2086, %v2098
    %v2119 = vsub.f32 %v2087, %v2101
    %v2120 = vsub.f32 %v2088, %v2104
    %v2121 = vsub.f32 %v2089, %v2107
    %v2122 = vsub.f32 %v2090, %v2110
    %v2123 = vsub.f32 %v2091, %v2113
    %v2124 = vsub.f32 %v2092, %v2116
    %v2125 = vmul.f32 %v2117, 1.442695
    %v2126 = vpow.pop %v2125
    %v2127 = vmul.f32 %v2118, 1.442695
    %v2128 = vpow.pop %v2127
    %v2129 = vmul.f32 %v2119, 1.442695
    %v2130 = vpow.pop %v2129
    %v2131 = vmul.f32 %v2120, 1.442695
    %v2132 = vpow.pop %v2131
    %v2133 = vmul.f32 %v2121, 1.442695
    %v2134 = vpow.pop %v2133
    %v2135 = vmul.f32 %v2122, 1.442695
    %v2136 = vpow.pop %v2135
    %v2137 = vmul.f32 %v2123, 1.442695
    %v2138 = vpow.pop %v2137
    %v2139 = vmul.f32 %v2124, 1.442695
    %v2140 = vpow.pop %v2139
    %v2141 = vsel %vm189, %v2126, 0.0
    %2142 = vadd.xlane.f32.xlu0 %v2141
    %v2143 = vpop.xlane.xlu0 %2142
    %v2144 = vsel %vm189, %v2128, 0.0
    %2145 = vadd.xlane.f32.xlu0 %v2144
    %v2146 = vpop.xlane.xlu0 %2145
    %v2147 = vsel %vm189, %v2130, 0.0
    %2148 = vadd.xlane.f32.xlu0 %v2147
    %v2149 = vpop.xlane.xlu0 %2148
    %v2150 = vsel %vm189, %v2132, 0.0
    %2151 = vadd.xlane.f32.xlu0 %v2150
    %v2152 = vpop.xlane.xlu0 %2151
    %v2153 = vsel %vm189, %v2134, 0.0
    %2154 = vadd.xlane.f32.xlu0 %v2153
    %v2155 = vpop.xlane.xlu0 %2154
    %v2156 = vsel %vm189, %v2136, 0.0
    %2157 = vadd.xlane.f32.xlu0 %v2156
    %v2158 = vpop.xlane.xlu0 %2157
    %v2159 = vsel %vm189, %v2138, 0.0
    %2160 = vadd.xlane.f32.xlu0 %v2159
    %v2161 = vpop.xlane.xlu0 %2160
    %v2162 = vsel %vm189, %v2140, 0.0
    %2163 = vadd.xlane.f32.xlu0 %v2162
    %v2164 = vpop.xlane.xlu0 %2163
    %v2165 = vrcp.pop %v2143
    %v2166 = vrcp.pop %v2146
    %v2167 = vrcp.pop %v2149
    %v2168 = vrcp.pop %v2152
    %v2169 = vrcp.pop %v2155
    %v2170 = vrcp.pop %v2158
    %v2171 = vrcp.pop %v2161
    %v2172 = vrcp.pop %v2164
    %v2173 = vmul.f32 %v2126, %v2165
    %v2174 = vmul.f32 %v2128, %v2166
    %v2175 = vmul.f32 %v2130, %v2167
    %v2176 = vmul.f32 %v2132, %v2168
    %v2177 = vmul.f32 %v2134, %v2169
    %v2178 = vmul.f32 %v2136, %v2170
    %v2179 = vmul.f32 %v2138, %v2171
    %v2180 = vmul.f32 %v2140, %v2172
    %v2182 = vsel %vm189, %v2173, 0
    %v2185 = vsel %vm189, %v2174, 0
    %2187 = vmatprep.subr.mxu0 0.0
    %2188 = vmatpush1.msra.mxu0 %v1707
    %2189 = vmatprep.subr.mxu0 0.0
    %2190 = vmatpush1.msra.mxu0 %v1708
    %2191 = vmatprep.subr.mxu0 0.0
    %2192 = vmatpush1.msra.mxu0 %v1709
    %2193 = vmatprep.subr.mxu0 0.0
    %2194 = vmatpush1.msra.mxu0 %v1710
    %2195 = vmatprep.subr.mxu0 0.0
    %2196 = vmatpush1.msra.mxu0 0.0
    %2197 = vmatprep.subr.mxu0 0.0
    %2198 = vmatpush1.msra.mxu0 0.0
    %2199 = vmatprep.subr.mxu0 0.0
    %2200 = vmatpush1.msra.mxu0 0.0
    %2201 = vmatprep.subr.mxu0 0.0
    %2202 = vmatpush1.msra.mxu0 0.0
    %2203 = vmatprep.subr.mxu0 0.0
    %2204 = vmatpush1.msra.mxu0 0.0
    %2205 = vmatprep.subr.mxu0 0.0
    %2206 = vmatpush1.msra.mxu0 0.0
    %2207 = vmatprep.subr.mxu0 0.0
    %2208 = vmatpush1.msra.mxu0 0.0
    %2209 = vmatprep.subr.mxu0 0.0
    %2210 = vmatpush1.msra.mxu0 0.0
    %2211 = vmatprep.subr.mxu0 0.0
    %2212 = vmatpush1.msra.mxu0 0.0
    %2213 = vmatprep.subr.mxu0 0.0
    %2214 = vmatpush1.msra.mxu0 0.0
    %2215 = vmatprep.subr.mxu0 0.0
    %2216 = vmatpush1.msra.mxu0 0.0
    %2217 = vmatprep.subr.mxu0 0.0
    %2218 = vmatpush1.msra.mxu0 0.0
    %2219 = vmatprep.subr.mxu0 0.0
    %2220 = vmatpush1.msra.mxu0 0.0
    %2221 = vmatprep.subr.mxu0 0.0
    %2222 = vmatpush1.msra.mxu0 0.0
    %2223 = vmatprep.subr.mxu0 0.0
    %2224 = vmatpush1.msra.mxu0 0.0
    %2225 = vmatprep.subr.mxu0 0.0
    %2226 = vmatpush1.msra.mxu0 0.0
    %2227 = vmatprep.subr.mxu0 0.0
    %2228 = vmatpush1.msra.mxu0 0.0
    %2229 = vmatprep.subr.mxu0 0.0
    %2230 = vmatpush1.msra.mxu0 0.0
    %2231 = vmatprep.subr.mxu0 0.0
    %2232 = vmatpush1.msra.mxu0 0.0
    %2233 = vmatprep.subr.mxu0 0.0
    %2234 = vmatpush1.msra.mxu0 0.0
    %2235 = vmatprep.subr.mxu0 0.0
    %2236 = vmatpush1.msra.mxu0 0.0
    %2237 = vmatprep.subr.mxu0 0.0
    %2238 = vmatpush1.msra.mxu0 0.0
    %2239 = vmatprep.subr.mxu0 0.0
    %2240 = vmatpush1.msra.mxu0 0.0
    %2241 = vmatprep.subr.mxu0 0.0
    %2242 = vmatpush1.msra.mxu0 0.0
    %2243 = vmatprep.subr.mxu0 0.0
    %2244 = vmatpush1.msra.mxu0 0.0
    %2245 = vmatprep.subr.mxu0 0.0
    %2246 = vmatpush1.msra.mxu0 0.0
    %2247 = vmatprep.subr.mxu0 0.0
    %2248 = vmatpush1.msra.mxu0 0.0
    %2249 = vmatprep.subr.mxu0 0.0
    %2250 = vmatpush1.msra.mxu0 0.0
    %2251 = vmatprep.mubr.f32.mxu0 0.0
    %2252 = vmatmul.mubr.f32.gmra.mrb[0].mxu0 %v2182
    %v2253 = vpop.f32.mrb[0].mxu0
    %v2254 = vadd.f32 0.0, %v2253
    %v2255 = vpop.f32.mrb[0].mxu0
    %2256 = vmatprep.mubr.f32.mxu0 0.0
    %2257 = vmatmul.mubr.f32.gmra.mrb[0].mxu0 %v2185
    %v2258 = vpop.f32.mrb[0].mxu0
    %v2259 = vadd.f32 0.0, %v2258
    %v2260 = vpop.f32.mrb[0].mxu0
    %2261 = vdwg.mxu0
    %v2263 = vsel %vm189, %v2175, 0
    %v2266 = vsel %vm189, %v2176, 0
    %2268 = vmatprep.subr.mxu0 0.0
    %2269 = vmatpush1.msra.mxu0 %v1711
    %2270 = vmatprep.subr.mxu0 0.0
    %2271 = vmatpush1.msra.mxu0 %v1712
    %2272 = vmatprep.subr.mxu0 0.0
    %2273 = vmatpush1.msra.mxu0 %v1713
    %2274 = vmatprep.subr.mxu0 0.0
    %2275 = vmatpush1.msra.mxu0 %v1714
    %2276 = vmatprep.subr.mxu0 0.0
    %2277 = vmatpush1.msra.mxu0 0.0
    %2278 = vmatprep.subr.mxu0 0.0
    %2279 = vmatpush1.msra.mxu0 0.0
    %2280 = vmatprep.subr.mxu0 0.0
    %2281 = vmatpush1.msra.mxu0 0.0
    %2282 = vmatprep.subr.mxu0 0.0
    %2283 = vmatpush1.msra.mxu0 0.0
    %2284 = vmatprep.subr.mxu0 0.0
    %2285 = vmatpush1.msra.mxu0 0.0
    %2286 = vmatprep.subr.mxu0 0.0
    %2287 = vmatpush1.msra.mxu0 0.0
    %2288 = vmatprep.subr.mxu0 0.0
    %2289 = vmatpush1.msra.mxu0 0.0
    %2290 = vmatprep.subr.mxu0 0.0
    %2291 = vmatpush1.msra.mxu0 0.0
    %2292 = vmatprep.subr.mxu0 0.0
    %2293 = vmatpush1.msra.mxu0 0.0
    %2294 = vmatprep.subr.mxu0 0.0
    %2295 = vmatpush1.msra.mxu0 0.0
    %2296 = vmatprep.subr.mxu0 0.0
    %2297 = vmatpush1.msra.mxu0 0.0
    %2298 = vmatprep.subr.mxu0 0.0
    %2299 = vmatpush1.msra.mxu0 0.0
    %2300 = vmatprep.subr.mxu0 0.0
    %2301 = vmatpush1.msra.mxu0 0.0
    %2302 = vmatprep.subr.mxu0 0.0
    %2303 = vmatpush1.msra.mxu0 0.0
    %2304 = vmatprep.subr.mxu0 0.0
    %2305 = vmatpush1.msra.mxu0 0.0
    %2306 = vmatprep.subr.mxu0 0.0
    %2307 = vmatpush1.msra.mxu0 0.0
    %2308 = vmatprep.subr.mxu0 0.0
    %2309 = vmatpush1.msra.mxu0 0.0
    %2310 = vmatprep.subr.mxu0 0.0
    %2311 = vmatpush1.msra.mxu0 0.0
    %2312 = vmatprep.subr.mxu0 0.0
    %2313 = vmatpush1.msra.mxu0 0.0
    %2314 = vmatprep.subr.mxu0 0.0
    %2315 = vmatpush1.msra.mxu0 0.0
    %2316 = vmatprep.subr.mxu0 0.0
    %2317 = vmatpush1.msra.mxu0 0.0
    %2318 = vmatprep.subr.mxu0 0.0
    %2319 = vmatpush1.msra.mxu0 0.0
    %2320 = vmatprep.subr.mxu0 0.0
    %2321 = vmatpush1.msra.mxu0 0.0
    %2322 = vmatprep.subr.mxu0 0.0
    %2323 = vmatpush1.msra.mxu0 0.0
    %2324 = vmatprep.subr.mxu0 0.0
    %2325 = vmatpush1.msra.mxu0 0.0
    %2326 = vmatprep.subr.mxu0 0.0
    %2327 = vmatpush1.msra.mxu0 0.0
    %2328 = vmatprep.subr.mxu0 0.0
    %2329 = vmatpush1.msra.mxu0 0.0
    %2330 = vmatprep.subr.mxu0 0.0
    %2331 = vmatpush1.msra.mxu0 0.0
    %2332 = vmatprep.mubr.f32.mxu0 0.0
    %2333 = vmatmul.mubr.f32.gmra.mrb[0].mxu0 %v2263
    %v2334 = vpop.f32.mrb[0].mxu0
    %v2335 = vadd.f32 0.0, %v2334
    %v2336 = vpop.f32.mrb[0].mxu0
    %2337 = vmatprep.mubr.f32.mxu0 0.0
    %2338 = vmatmul.mubr.f32.gmra.mrb[0].mxu0 %v2266
    %v2339 = vpop.f32.mrb[0].mxu0
    %v2340 = vadd.f32 0.0, %v2339
    %v2341 = vpop.f32.mrb[0].mxu0
    %2342 = vdwg.mxu0
    %v2344 = vsel %vm189, %v2177, 0
    %v2347 = vsel %vm189, %v2178, 0
    %2349 = vmatprep.subr.mxu0 0.0
    %2350 = vmatpush1.msra.mxu0 %v1715
    %2351 = vmatprep.subr.mxu0 0.0
    %2352 = vmatpush1.msra.mxu0 %v1716
    %2353 = vmatprep.subr.mxu0 0.0
    %2354 = vmatpush1.msra.mxu0 %v1717
    %2355 = vmatprep.subr.mxu0 0.0
    %2356 = vmatpush1.msra.mxu0 %v1718
    %2357 = vmatprep.subr.mxu0 0.0
    %2358 = vmatpush1.msra.mxu0 0.0
    %2359 = vmatprep.subr.mxu0 0.0
    %2360 = vmatpush1.msra.mxu0 0.0
    %2361 = vmatprep.subr.mxu0 0.0
    %2362 = vmatpush1.msra.mxu0 0.0
    %2363 = vmatprep.subr.mxu0 0.0
    %2364 = vmatpush1.msra.mxu0 0.0
    %2365 = vmatprep.subr.mxu0 0.0
    %2366 = vmatpush1.msra.mxu0 0.0
    %2367 = vmatprep.subr.mxu0 0.0
    %2368 = vmatpush1.msra.mxu0 0.0
    %2369 = vmatprep.subr.mxu0 0.0
    %2370 = vmatpush1.msra.mxu0 0.0
    %2371 = vmatprep.subr.mxu0 0.0
    %2372 = vmatpush1.msra.mxu0 0.0
    %2373 = vmatprep.subr.mxu0 0.0
    %2374 = vmatpush1.msra.mxu0 0.0
    %2375 = vmatprep.subr.mxu0 0.0
    %2376 = vmatpush1.msra.mxu0 0.0
    %2377 = vmatprep.subr.mxu0 0.0
    %2378 = vmatpush1.msra.mxu0 0.0
    %2379 = vmatprep.subr.mxu0 0.0
    %2380 = vmatpush1.msra.mxu0 0.0
    %2381 = vmatprep.subr.mxu0 0.0
    %2382 = vmatpush1.msra.mxu0 0.0
    %2383 = vmatprep.subr.mxu0 0.0
    %2384 = vmatpush1.msra.mxu0 0.0
    %2385 = vmatprep.subr.mxu0 0.0
    %2386 = vmatpush1.msra.mxu0 0.0
    %2387 = vmatprep.subr.mxu0 0.0
    %2388 = vmatpush1.msra.mxu0 0.0
    %2389 = vmatprep.subr.mxu0 0.0
    %2390 = vmatpush1.msra.mxu0 0.0
    %2391 = vmatprep.subr.mxu0 0.0
    %2392 = vmatpush1.msra.mxu0 0.0
    %2393 = vmatprep.subr.mxu0 0.0
    %2394 = vmatpush1.msra.mxu0 0.0
    %2395 = vmatprep.subr.mxu0 0.0
    %2396 = vmatpush1.msra.mxu0 0.0
    %2397 = vmatprep.subr.mxu0 0.0
    %2398 = vmatpush1.msra.mxu0 0.0
    %2399 = vmatprep.subr.mxu0 0.0
    %2400 = vmatpush1.msra.mxu0 0.0
    %2401 = vmatprep.subr.mxu0 0.0
    %2402 = vmatpush1.msra.mxu0 0.0
    %2403 = vmatprep.subr.mxu0 0.0
    %2404 = vmatpush1.msra.mxu0 0.0
    %2405 = vmatprep.subr.mxu0 0.0
    %2406 = vmatpush1.msra.mxu0 0.0
    %2407 = vmatprep.subr.mxu0 0.0
    %2408 = vmatpush1.msra.mxu0 0.0
    %2409 = vmatprep.subr.mxu0 0.0
    %2410 = vmatpush1.msra.mxu0 0.0
    %2411 = vmatprep.subr.mxu0 0.0
    %2412 = vmatpush1.msra.mxu0 0.0
    %2413 = vmatprep.mubr.f32.mxu0 0.0
    %2414 = vmatmul.mubr.f32.gmra.mrb[0].mxu0 %v2344
    %v2415 = vpop.f32.mrb[0].mxu0
    %v2416 = vadd.f32 0.0, %v2415
    %v2417 = vpop.f32.mrb[0].mxu0
    %2418 = vmatprep.mubr.f32.mxu0 0.0
    %2419 = vmatmul.mubr.f32.gmra.mrb[0].mxu0 %v2347
    %v2420 = vpop.f32.mrb[0].mxu0
    %v2421 = vadd.f32 0.0, %v2420
    %v2422 = vpop.f32.mrb[0].mxu0
    %2423 = vdwg.mxu0
    %v2425 = vsel %vm189, %v2179, 0
    %v2428 = vsel %vm189, %v2180, 0
    %2430 = vmatprep.subr.mxu0 0.0
    %2431 = vmatpush1.msra.mxu0 %v1719
    %2432 = vmatprep.subr.mxu0 0.0
    %2433 = vmatpush1.msra.mxu0 %v1720
    %2434 = vmatprep.subr.mxu0 0.0
    %2435 = vmatpush1.msra.mxu0 %v1721
    %2436 = vmatprep.subr.mxu0 0.0
    %2437 = vmatpush1.msra.mxu0 %v1722
    %2438 = vmatprep.subr.mxu0 0.0
    %2439 = vmatpush1.msra.mxu0 0.0
    %2440 = vmatprep.subr.mxu0 0.0
    %2441 = vmatpush1.msra.mxu0 0.0
    %2442 = vmatprep.subr.mxu0 0.0
    %2443 = vmatpush1.msra.mxu0 0.0
    %2444 = vmatprep.subr.mxu0 0.0
    %2445 = vmatpush1.msra.mxu0 0.0
    %2446 = vmatprep.subr.mxu0 0.0
    %2447 = vmatpush1.msra.mxu0 0.0
    %2448 = vmatprep.subr.mxu0 0.0
    %2449 = vmatpush1.msra.mxu0 0.0
    %2450 = vmatprep.subr.mxu0 0.0
    %2451 = vmatpush1.msra.mxu0 0.0
    %2452 = vmatprep.subr.mxu0 0.0
    %2453 = vmatpush1.msra.mxu0 0.0
    %2454 = vmatprep.subr.mxu0 0.0
    %2455 = vmatpush1.msra.mxu0 0.0
    %2456 = vmatprep.subr.mxu0 0.0
    %2457 = vmatpush1.msra.mxu0 0.0
    %2458 = vmatprep.subr.mxu0 0.0
    %2459 = vmatpush1.msra.mxu0 0.0
    %2460 = vmatprep.subr.mxu0 0.0
    %2461 = vmatpush1.msra.mxu0 0.0
    %2462 = vmatprep.subr.mxu0 0.0
    %2463 = vmatpush1.msra.mxu0 0.0
    %2464 = vmatprep.subr.mxu0 0.0
    %2465 = vmatpush1.msra.mxu0 0.0
    %2466 = vmatprep.subr.mxu0 0.0
    %2467 = vmatpush1.msra.mxu0 0.0
    %2468 = vmatprep.subr.mxu0 0.0
    %2469 = vmatpush1.msra.mxu0 0.0
    %2470 = vmatprep.subr.mxu0 0.0
    %2471 = vmatpush1.msra.mxu0 0.0
    %2472 = vmatprep.subr.mxu0 0.0
    %2473 = vmatpush1.msra.mxu0 0.0
    %2474 = vmatprep.subr.mxu0 0.0
    %2475 = vmatpush1.msra.mxu0 0.0
    %2476 = vmatprep.subr.mxu0 0.0
    %2477 = vmatpush1.msra.mxu0 0.0
    %2478 = vmatprep.subr.mxu0 0.0
    %2479 = vmatpush1.msra.mxu0 0.0
    %2480 = vmatprep.subr.mxu0 0.0
    %2481 = vmatpush1.msra.mxu0 0.0
    %2482 = vmatprep.subr.mxu0 0.0
    %2483 = vmatpush1.msra.mxu0 0.0
    %2484 = vmatprep.subr.mxu0 0.0
    %2485 = vmatpush1.msra.mxu0 0.0
    %2486 = vmatprep.subr.mxu0 0.0
    %2487 = vmatpush1.msra.mxu0 0.0
    %2488 = vmatprep.subr.mxu0 0.0
    %2489 = vmatpush1.msra.mxu0 0.0
    %2490 = vmatprep.subr.mxu0 0.0
    %2491 = vmatpush1.msra.mxu0 0.0
    %2492 = vmatprep.subr.mxu0 0.0
    %2493 = vmatpush1.msra.mxu0 0.0
    %2494 = vmatprep.mubr.f32.mxu0 0.0
    %2495 = vmatmul.mubr.f32.gmra.mrb[0].mxu0 %v2425
    %v2496 = vpop.f32.mrb[0].mxu0
    %v2497 = vadd.f32 0.0, %v2496
    %v2498 = vpop.f32.mrb[0].mxu0
    %2499 = vmatprep.mubr.f32.mxu0 0.0
    %2500 = vmatmul.mubr.f32.gmra.mrb[0].mxu0 %v2428
    %v2501 = vpop.f32.mrb[0].mxu0
    %v2502 = vadd.f32 0.0, %v2501
    %v2503 = vpop.f32.mrb[0].mxu0
    %2504 = vdwg.mxu0
    %v2505 = vsel %vm189, %v2254, 0.0
    %v2506 = vsel %vm189, %v2335, 0.0
    %v2507 = vadd.f32 %v2505, %v2506
    %v2508 = vsel %vm189, %v2416, 0.0
    %v2509 = vadd.f32 %v2507, %v2508
    %v2510 = vsel %vm189, %v2497, 0.0
    %v2511 = vadd.f32 %v2509, %v2510
    %v2512 = vsel %vm189, %v2259, 0.0
    %v2513 = vsel %vm189, %v2340, 0.0
    %v2514 = vadd.f32 %v2512, %v2513
    %v2515 = vsel %vm189, %v2421, 0.0
    %v2516 = vadd.f32 %v2514, %v2515
    %v2517 = vsel %vm189, %v2502, 0.0
    %v2518 = vadd.f32 %v2516, %v2517
    %v2519 = vld [vmem:[%s35] sm:$0xff]
    %v2520 = vld [vmem:[%s35 + $0x8] sm:$0xff]
    %v2521 = vld [vmem:[%s35 + $0x10] sm:$0xff]
    %v2522 = vld [vmem:[%s35 + $0x18] sm:$0xff]
    %v2523 = vld [vmem:[%s37] sm:$0x1]
    %v2525 = vlaneseq
    %v2526 = vshrl.u32 %v2525, 7
    %v2527 = vsub.s32 0, %v2526
    %v2528 = vrot.slane %v2523, %v2527
    %v2531 = vsel %vm189, %v2511, 0
    %v2534 = vsel %vm189, %v2518, 0
    %2536 = vmatprep.subr.mxu0 0.0
    %2537 = vmatpush1.msra.mxu0 %v2519
    %2538 = vmatprep.subr.mxu0 0.0
    %2539 = vmatpush1.msra.mxu0 %v2520
    %2540 = vmatprep.subr.mxu0 0.0
    %2541 = vmatpush1.msra.mxu0 %v2521
    %2542 = vmatprep.subr.mxu0 0.0
    %2543 = vmatpush1.msra.mxu0 %v2522
    %2544 = vmatprep.subr.mxu0 0.0
    %2545 = vmatpush1.msra.mxu0 0.0
    %2546 = vmatprep.subr.mxu0 0.0
    %2547 = vmatpush1.msra.mxu0 0.0
    %2548 = vmatprep.subr.mxu0 0.0
    %2549 = vmatpush1.msra.mxu0 0.0
    %2550 = vmatprep.subr.mxu0 0.0
    %2551 = vmatpush1.msra.mxu0 0.0
    %2552 = vmatprep.subr.mxu0 0.0
    %2553 = vmatpush1.msra.mxu0 0.0
    %2554 = vmatprep.subr.mxu0 0.0
    %2555 = vmatpush1.msra.mxu0 0.0
    %2556 = vmatprep.subr.mxu0 0.0
    %2557 = vmatpush1.msra.mxu0 0.0
    %2558 = vmatprep.subr.mxu0 0.0
    %2559 = vmatpush1.msra.mxu0 0.0
    %2560 = vmatprep.subr.mxu0 0.0
    %2561 = vmatpush1.msra.mxu0 0.0
    %2562 = vmatprep.subr.mxu0 0.0
    %2563 = vmatpush1.msra.mxu0 0.0
    %2564 = vmatprep.subr.mxu0 0.0
    %2565 = vmatpush1.msra.mxu0 0.0
    %2566 = vmatprep.subr.mxu0 0.0
    %2567 = vmatpush1.msra.mxu0 0.0
    %2568 = vmatprep.subr.mxu0 0.0
    %2569 = vmatpush1.msra.mxu0 0.0
    %2570 = vmatprep.subr.mxu0 0.0
    %2571 = vmatpush1.msra.mxu0 0.0
    %2572 = vmatprep.subr.mxu0 0.0
    %2573 = vmatpush1.msra.mxu0 0.0
    %2574 = vmatprep.subr.mxu0 0.0
    %2575 = vmatpush1.msra.mxu0 0.0
    %2576 = vmatprep.subr.mxu0 0.0
    %2577 = vmatpush1.msra.mxu0 0.0
    %2578 = vmatprep.subr.mxu0 0.0
    %2579 = vmatpush1.msra.mxu0 0.0
    %2580 = vmatprep.subr.mxu0 0.0
    %2581 = vmatpush1.msra.mxu0 0.0
    %2582 = vmatprep.subr.mxu0 0.0
    %2583 = vmatpush1.msra.mxu0 0.0
    %2584 = vmatprep.subr.mxu0 0.0
    %2585 = vmatpush1.msra.mxu0 0.0
    %2586 = vmatprep.subr.mxu0 0.0
    %2587 = vmatpush1.msra.mxu0 0.0
    %2588 = vmatprep.subr.mxu0 0.0
    %2589 = vmatpush1.msra.mxu0 0.0
    %2590 = vmatprep.subr.mxu0 0.0
    %2591 = vmatpush1.msra.mxu0 0.0
    %2592 = vmatprep.subr.mxu0 0.0
    %2593 = vmatpush1.msra.mxu0 0.0
    %2594 = vmatprep.subr.mxu0 0.0
    %2595 = vmatpush1.msra.mxu0 0.0
    %2596 = vmatprep.subr.mxu0 0.0
    %2597 = vmatpush1.msra.mxu0 0.0
    %2598 = vmatprep.subr.mxu0 0.0
    %2599 = vmatpush1.msra.mxu0 0.0
    %2600 = vmatprep.mubr.f32.mxu0 0.0
    %2601 = vmatmul.mubr.f32.gmra.mrb[0].mxu0 %v2531
    %v2602 = vpop.f32.mrb[0].mxu0
    %v2603 = vadd.f32 %v2528, %v2602
    %v2604 = vpop.f32.mrb[0].mxu0
    %2605 = vmatprep.mubr.f32.mxu0 0.0
    %2606 = vmatmul.mubr.f32.gmra.mrb[0].mxu0 %v2534
    %v2607 = vpop.f32.mrb[0].mxu0
    %v2608 = vadd.f32 %v2528, %v2607
    %v2609 = vpop.f32.mrb[0].mxu0
    %2610 = vdwg.mxu0
    %v2611 = vadd.f32 %v1393, %v2603
    %v2612 = vadd.f32 %v1394, %v2608
    %v2613 = vld [vmem:[%s43] sm:$0x1]
    %v2614 = vld [vmem:[%s45] sm:$0x1]
    %v2615 = vsel %vm189, %v2611, 0.0
    %2616 = vadd.xlane.f32.xlu0 %v2615
    %v2617 = vpop.xlane.xlu0 %2616
    %v2618 = vsel %vm189, %v2612, 0.0
    %2619 = vadd.xlane.f32.xlu0 %v2618
    %v2620 = vpop.xlane.xlu0 %2619
    %v2621 = vmul.f32 %v2617, %v1358
    %v2622 = vmul.f32 %v2620, %v1358
    %v2623 = vsub.f32 %v2611, %v2621
    %v2624 = vsub.f32 %v2612, %v2622
    %v2625 = vmul.f32 %v2623, %v2623
    %v2626 = vmul.f32 %v2624, %v2624
    %v2627 = vsel %vm189, %v2625, 0.0
    %2628 = vadd.xlane.f32.xlu0 %v2627
    %v2629 = vpop.xlane.xlu0 %2628
    %v2630 = vsel %vm189, %v2626, 0.0
    %2631 = vadd.xlane.f32.xlu0 %v2630
    %v2632 = vpop.xlane.xlu0 %2631
    %v2633 = vmul.f32 %v2629, %v1358
    %v2634 = vmul.f32 %v2632, %v1358
    %v2635 = vadd.f32 %v2633, 1e-05
    %v2636 = vadd.f32 %v2634, 1e-05
    %v2637 = vrsqrt.pop %v2635
    %v2638 = vrsqrt.pop %v2636
    %v2639 = vmul.f32 %v2623, %v2637
    %v2640 = vmul.f32 %v2624, %v2638
    %v2642 = vlaneseq
    %v2643 = vshrl.u32 %v2642, 7
    %v2644 = vsub.s32 0, %v2643
    %v2645 = vrot.slane %v2613, %v2644
    %v2647 = vmul.f32 %v2639, %v2645
    %v2648 = vmul.f32 %v2640, %v2645
    %v2650 = vlaneseq
    %v2651 = vshrl.u32 %v2650, 7
    %v2652 = vsub.s32 0, %v2651
    %v2653 = vrot.slane %v2614, %v2652
    %v2655 = vadd.f32 %v2647, %v2653
    %v2656 = vadd.f32 %v2648, %v2653
    %v2657 = vld [vmem:[%s51] sm:$0xff]
    %v2658 = vld [vmem:[%s51 + $0x8] sm:$0xff]
    %v2659 = vld [vmem:[%s51 + $0x10] sm:$0xff]
    %v2660 = vld [vmem:[%s51 + $0x18] sm:$0xff]
    %v2661 = vld [vmem:[%s51 + $0x20] sm:$0xff]
    %v2662 = vld [vmem:[%s51 + $0x28] sm:$0xff]
    %v2663 = vld [vmem:[%s51 + $0x30] sm:$0xff]
    %v2664 = vld [vmem:[%s51 + $0x38] sm:$0xff]
    %v2665 = vld [vmem:[%s51 + $0x40] sm:$0xff]
    %v2666 = vld [vmem:[%s51 + $0x48] sm:$0xff]
    %v2667 = vld [vmem:[%s51 + $0x50] sm:$0xff]
    %v2668 = vld [vmem:[%s51 + $0x58] sm:$0xff]
    %v2669 = vld [vmem:[%s51 + $0x60] sm:$0xff]
    %v2670 = vld [vmem:[%s51 + $0x68] sm:$0xff]
    %v2671 = vld [vmem:[%s51 + $0x70] sm:$0xff]
    %v2672 = vld [vmem:[%s51 + $0x78] sm:$0xff]
    %v2673 = vld [vmem:[%s51 + $0x80] sm:$0xff]
    %v2674 = vld [vmem:[%s51 + $0x88] sm:$0xff]
    %v2675 = vld [vmem:[%s51 + $0x90] sm:$0xff]
    %v2676 = vld [vmem:[%s51 + $0x98] sm:$0xff]
    %v2677 = vld [vmem:[%s51 + $0xa0] sm:$0xff]
    %v2678 = vld [vmem:[%s51 + $0xa8] sm:$0xff]
    %v2679 = vld [vmem:[%s51 + $0xb0] sm:$0xff]
    %v2680 = vld [vmem:[%s51 + $0xb8] sm:$0xff]
    %v2681 = vld [vmem:[%s51 + $0xc0] sm:$0xff]
    %v2682 = vld [vmem:[%s51 + $0xc8] sm:$0xff]
    %v2683 = vld [vmem:[%s51 + $0xd0] sm:$0xff]
    %v2684 = vld [vmem:[%s51 + $0xd8] sm:$0xff]
    %v2685 = vld [vmem:[%s51 + $0xe0] sm:$0xff]
    %v2686 = vld [vmem:[%s51 + $0xe8] sm:$0xff]
    %v2687 = vld [vmem:[%s51 + $0xf0] sm:$0xff]
    %v2688 = vld [vmem:[%s51 + $0xf8] sm:$0xff]
    %v2689 = vld [vmem:[%s51 + $0x100] sm:$0xff]
    %v2690 = vld [vmem:[%s51 + $0x108] sm:$0xff]
    %v2691 = vld [vmem:[%s51 + $0x110] sm:$0xff]
    %v2692 = vld [vmem:[%s51 + $0x118] sm:$0xff]
    %v2693 = vld [vmem:[%s51 + $0x120] sm:$0xff]
    %v2694 = vld [vmem:[%s51 + $0x128] sm:$0xff]
    %v2695 = vld [vmem:[%s51 + $0x130] sm:$0xff]
    %v2696 = vld [vmem:[%s51 + $0x138] sm:$0xff]
    %v2697 = vld [vmem:[%s51 + $0x140] sm:$0xff]
    %v2698 = vld [vmem:[%s51 + $0x148] sm:$0xff]
    %v2699 = vld [vmem:[%s51 + $0x150] sm:$0xff]
    %v2700 = vld [vmem:[%s51 + $0x158] sm:$0xff]
    %v2701 = vld [vmem:[%s51 + $0x160] sm:$0xff]
    %v2702 = vld [vmem:[%s51 + $0x168] sm:$0xff]
    %v2703 = vld [vmem:[%s51 + $0x170] sm:$0xff]
    %v2704 = vld [vmem:[%s51 + $0x178] sm:$0xff]
    %v2705 = vld [vmem:[%s51 + $0x180] sm:$0xff]
    %v2706 = vld [vmem:[%s51 + $0x188] sm:$0xff]
    %v2707 = vld [vmem:[%s51 + $0x190] sm:$0xff]
    %v2708 = vld [vmem:[%s51 + $0x198] sm:$0xff]
    %v2709 = vld [vmem:[%s51 + $0x1a0] sm:$0xff]
    %v2710 = vld [vmem:[%s51 + $0x1a8] sm:$0xff]
    %v2711 = vld [vmem:[%s51 + $0x1b0] sm:$0xff]
    %v2712 = vld [vmem:[%s51 + $0x1b8] sm:$0xff]
    %v2713 = vld [vmem:[%s51 + $0x1c0] sm:$0xff]
    %v2714 = vld [vmem:[%s51 + $0x1c8] sm:$0xff]
    %v2715 = vld [vmem:[%s51 + $0x1d0] sm:$0xff]
    %v2716 = vld [vmem:[%s51 + $0x1d8] sm:$0xff]
    %v2717 = vld [vmem:[%s51 + $0x1e0] sm:$0xff]
    %v2718 = vld [vmem:[%s51 + $0x1e8] sm:$0xff]
    %v2719 = vld [vmem:[%s51 + $0x1f0] sm:$0xff]
    %v2720 = vld [vmem:[%s51 + $0x1f8] sm:$0xff]
    %v2721 = vld [vmem:[%s53] sm:$0xff]
    %v2722 = vld [vmem:[%s53 + $0x8] sm:$0xff]
    %v2725 = vlaneseq
    %v2726 = vshrl.u32 %v2725, 7
    %v2727 = vsub.s32 0, %v2726
    %v2728 = vrot.slane %v2721, %v2727
    %v2729 = vlaneseq
    %v2730 = vshrl.u32 %v2729, 7
    %v2731 = vsub.s32 1, %v2730
    %v2732 = vrot.slane %v2721, %v2731
    %v2733 = vlaneseq
    %v2734 = vshrl.u32 %v2733, 7
    %v2735 = vsub.s32 2, %v2734
    %v2736 = vrot.slane %v2721, %v2735
    %v2737 = vlaneseq
    %v2738 = vshrl.u32 %v2737, 7
    %v2739 = vsub.s32 3, %v2738
    %v2740 = vrot.slane %v2721, %v2739
    %v2741 = vlaneseq
    %v2742 = vshrl.u32 %v2741, 7
    %v2743 = vsub.s32 4, %v2742
    %v2744 = vrot.slane %v2721, %v2743
    %v2745 = vlaneseq
    %v2746 = vshrl.u32 %v2745, 7
    %v2747 = vsub.s32 5, %v2746
    %v2748 = vrot.slane %v2721, %v2747
    %v2749 = vlaneseq
    %v2750 = vshrl.u32 %v2749, 7
    %v2751 = vsub.s32 6, %v2750
    %v2752 = vrot.slane %v2721, %v2751
    %v2753 = vlaneseq
    %v2754 = vshrl.u32 %v2753, 7
    %v2755 = vsub.s32 7, %v2754
    %v2756 = vrot.slane %v2721, %v2755
    %v2757 = vlaneseq
    %v2758 = vshrl.u32 %v2757, 7
    %v2759 = vsub.s32 0, %v2758
    %v2760 = vrot.slane %v2722, %v2759
    %v2761 = vlaneseq
    %v2762 = vshrl.u32 %v2761, 7
    %v2763 = vsub.s32 1, %v2762
    %v2764 = vrot.slane %v2722, %v2763
    %v2765 = vlaneseq
    %v2766 = vshrl.u32 %v2765, 7
    %v2767 = vsub.s32 2, %v2766
    %v2768 = vrot.slane %v2722, %v2767
    %v2769 = vlaneseq
    %v2770 = vshrl.u32 %v2769, 7
    %v2771 = vsub.s32 3, %v2770
    %v2772 = vrot.slane %v2722, %v2771
    %v2773 = vlaneseq
    %v2774 = vshrl.u32 %v2773, 7
    %v2775 = vsub.s32 4, %v2774
    %v2776 = vrot.slane %v2722, %v2775
    %v2777 = vlaneseq
    %v2778 = vshrl.u32 %v2777, 7
    %v2779 = vsub.s32 5, %v2778
    %v2780 = vrot.slane %v2722, %v2779
    %v2781 = vlaneseq
    %v2782 = vshrl.u32 %v2781, 7
    %v2783 = vsub.s32 6, %v2782
    %v2784 = vrot.slane %v2722, %v2783
    %v2785 = vlaneseq
    %v2786 = vshrl.u32 %v2785, 7
    %v2787 = vsub.s32 7, %v2786
    %v2788 = vrot.slane %v2722, %v2787
    %v2806 = vsel %vm189, %v2655, 0
    %v2809 = vsel %vm189, %v2656, 0
    %2811 = vmatprep.subr.mxu0 %v2658
    %2812 = vmatpush1.msra.mxu0 %v2657
    %2813 = vmatprep.subr.mxu0 %v2674
    %2814 = vmatpush1.msra.mxu0 %v2673
    %2815 = vmatprep.subr.mxu0 %v2690
    %2816 = vmatpush1.msra.mxu0 %v2689
    %2817 = vmatprep.subr.mxu0 %v2706
    %2818 = vmatpush1.msra.mxu0 %v2705
    %2819 = vmatprep.subr.mxu0 0.0
    %2820 = vmatpush1.msra.mxu0 0.0
    %2821 = vmatprep.subr.mxu0 0.0
    %2822 = vmatpush1.msra.mxu0 0.0
    %2823 = vmatprep.subr.mxu0 0.0
    %2824 = vmatpush1.msra.mxu0 0.0
    %2825 = vmatprep.subr.mxu0 0.0
    %2826 = vmatpush1.msra.mxu0 0.0
    %2827 = vmatprep.subr.mxu0 0.0
    %2828 = vmatpush1.msra.mxu0 0.0
    %2829 = vmatprep.subr.mxu0 0.0
    %2830 = vmatpush1.msra.mxu0 0.0
    %2831 = vmatprep.subr.mxu0 0.0
    %2832 = vmatpush1.msra.mxu0 0.0
    %2833 = vmatprep.subr.mxu0 0.0
    %2834 = vmatpush1.msra.mxu0 0.0
    %2835 = vmatprep.subr.mxu0 0.0
    %2836 = vmatpush1.msra.mxu0 0.0
    %2837 = vmatprep.subr.mxu0 0.0
    %2838 = vmatpush1.msra.mxu0 0.0
    %2839 = vmatprep.subr.mxu0 0.0
    %2840 = vmatpush1.msra.mxu0 0.0
    %2841 = vmatprep.subr.mxu0 0.0
    %2842 = vmatpush1.msra.mxu0 0.0
    %2843 = vmatprep.subr.mxu0 0.0
    %2844 = vmatpush1.msra.mxu0 0.0
    %2845 = vmatprep.subr.mxu0 0.0
    %2846 = vmatpush1.msra.mxu0 0.0
    %2847 = vmatprep.subr.mxu0 0.0
    %2848 = vmatpush1.msra.mxu0 0.0
    %2849 = vmatprep.subr.mxu0 0.0
    %2850 = vmatpush1.msra.mxu0 0.0
    %2851 = vmatprep.subr.mxu0 0.0
    %2852 = vmatpush1.msra.mxu0 0.0
    %2853 = vmatprep.subr.mxu0 0.0
    %2854 = vmatpush1.msra.mxu0 0.0
    %2855 = vmatprep.subr.mxu0 0.0
    %2856 = vmatpush1.msra.mxu0 0.0
    %2857 = vmatprep.subr.mxu0 0.0
    %2858 = vmatpush1.msra.mxu0 0.0
    %2859 = vmatprep.subr.mxu0 0.0
    %2860 = vmatpush1.msra.mxu0 0.0
    %2861 = vmatprep.subr.mxu0 0.0
    %2862 = vmatpush1.msra.mxu0 0.0
    %2863 = vmatprep.subr.mxu0 0.0
    %2864 = vmatpush1.msra.mxu0 0.0
    %2865 = vmatprep.subr.mxu0 0.0
    %2866 = vmatpush1.msra.mxu0 0.0
    %2867 = vmatprep.subr.mxu0 0.0
    %2868 = vmatpush1.msra.mxu0 0.0
    %2869 = vmatprep.subr.mxu0 0.0
    %2870 = vmatpush1.msra.mxu0 0.0
    %2871 = vmatprep.subr.mxu0 0.0
    %2872 = vmatpush1.msra.mxu0 0.0
    %2873 = vmatprep.subr.mxu0 0.0
    %2874 = vmatpush1.msra.mxu0 0.0
    %2875 = vmatprep.mubr.f32.mxu0 0.0
    %2876 = vmatmul.mubr.f32.gmra.mrb[0].mxu0 %v2806
    %v2877 = vpop.f32.mrb[0].mxu0
    %v2878 = vadd.f32 %v2728, %v2877
    %v2879 = vpop.f32.mrb[0].mxu0
    %v2880 = vadd.f32 %v2732, %v2879
    %2881 = vmatprep.mubr.f32.mxu0 0.0
    %2882 = vmatmul.mubr.f32.gmra.mrb[0].mxu0 %v2809
    %v2883 = vpop.f32.mrb[0].mxu0
    %v2884 = vadd.f32 %v2728, %v2883
    %v2885 = vpop.f32.mrb[0].mxu0
    %v2886 = vadd.f32 %v2732, %v2885
    %2887 = vdwg.mxu0
    %2888 = vmatprep.subr.mxu0 %v2660
    %2889 = vmatpush1.msra.mxu0 %v2659
    %2890 = vmatprep.subr.mxu0 %v2676
    %2891 = vmatpush1.msra.mxu0 %v2675
    %2892 = vmatprep.subr.mxu0 %v2692
    %2893 = vmatpush1.msra.mxu0 %v2691
    %2894 = vmatprep.subr.mxu0 %v2708
    %2895 = vmatpush1.msra.mxu0 %v2707
    %2896 = vmatprep.subr.mxu0 0.0
    %2897 = vmatpush1.msra.mxu0 0.0
    %2898 = vmatprep.subr.mxu0 0.0
    %2899 = vmatpush1.msra.mxu0 0.0
    %2900 = vmatprep.subr.mxu0 0.0
    %2901 = vmatpush1.msra.mxu0 0.0
    %2902 = vmatprep.subr.mxu0 0.0
    %2903 = vmatpush1.msra.mxu0 0.0
    %2904 = vmatprep.subr.mxu0 0.0
    %2905 = vmatpush1.msra.mxu0 0.0
    %2906 = vmatprep.subr.mxu0 0.0
    %2907 = vmatpush1.msra.mxu0 0.0
    %2908 = vmatprep.subr.mxu0 0.0
    %2909 = vmatpush1.msra.mxu0 0.0
    %2910 = vmatprep.subr.mxu0 0.0
    %2911 = vmatpush1.msra.mxu0 0.0
    %2912 = vmatprep.subr.mxu0 0.0
    %2913 = vmatpush1.msra.mxu0 0.0
    %2914 = vmatprep.subr.mxu0 0.0
    %2915 = vmatpush1.msra.mxu0 0.0
    %2916 = vmatprep.subr.mxu0 0.0
    %2917 = vmatpush1.msra.mxu0 0.0
    %2918 = vmatprep.subr.mxu0 0.0
    %2919 = vmatpush1.msra.mxu0 0.0
    %2920 = vmatprep.subr.mxu0 0.0
    %2921 = vmatpush1.msra.mxu0 0.0
    %2922 = vmatprep.subr.mxu0 0.0
    %2923 = vmatpush1.msra.mxu0 0.0
    %2924 = vmatprep.subr.mxu0 0.0
    %2925 = vmatpush1.msra.mxu0 0.0
    %2926 = vmatprep.subr.mxu0 0.0
    %2927 = vmatpush1.msra.mxu0 0.0
    %2928 = vmatprep.subr.mxu0 0.0
    %2929 = vmatpush1.msra.mxu0 0.0
    %2930 = vmatprep.subr.mxu0 0.0
    %2931 = vmatpush1.msra.mxu0 0.0
    %2932 = vmatprep.subr.mxu0 0.0
    %2933 = vmatpush1.msra.mxu0 0.0
    %2934 = vmatprep.subr.mxu0 0.0
    %2935 = vmatpush1.msra.mxu0 0.0
    %2936 = vmatprep.subr.mxu0 0.0
    %2937 = vmatpush1.msra.mxu0 0.0
    %2938 = vmatprep.subr.mxu0 0.0
    %2939 = vmatpush1.msra.mxu0 0.0
    %2940 = vmatprep.subr.mxu0 0.0
    %2941 = vmatpush1.msra.mxu0 0.0
    %2942 = vmatprep.subr.mxu0 0.0
    %2943 = vmatpush1.msra.mxu0 0.0
    %2944 = vmatprep.subr.mxu0 0.0
    %2945 = vmatpush1.msra.mxu0 0.0
    %2946 = vmatprep.subr.mxu0 0.0
    %2947 = vmatpush1.msra.mxu0 0.0
    %2948 = vmatprep.subr.mxu0 0.0
    %2949 = vmatpush1.msra.mxu0 0.0
    %2950 = vmatprep.subr.mxu0 0.0
    %2951 = vmatpush1.msra.mxu0 0.0
    %2952 = vmatprep.mubr.f32.mxu0 0.0
    %2953 = vmatmul.mubr.f32.gmra.mrb[0].mxu0 %v2806
    %v2954 = vpop.f32.mrb[0].mxu0
    %v2955 = vadd.f32 %v2736, %v2954
    %v2956 = vpop.f32.mrb[0].mxu0
    %v2957 = vadd.f32 %v2740, %v2956
    %2958 = vmatprep.mubr.f32.mxu0 0.0
    %2959 = vmatmul.mubr.f32.gmra.mrb[0].mxu0 %v2809
    %v2960 = vpop.f32.mrb[0].mxu0
    %v2961 = vadd.f32 %v2736, %v2960
    %v2962 = vpop.f32.mrb[0].mxu0
    %v2963 = vadd.f32 %v2740, %v2962
    %2964 = vdwg.mxu0
    %2965 = vmatprep.subr.mxu0 %v2662
    %2966 = vmatpush1.msra.mxu0 %v2661
    %2967 = vmatprep.subr.mxu0 %v2678
    %2968 = vmatpush1.msra.mxu0 %v2677
    %2969 = vmatprep.subr.mxu0 %v2694
    %2970 = vmatpush1.msra.mxu0 %v2693
    %2971 = vmatprep.subr.mxu0 %v2710
    %2972 = vmatpush1.msra.mxu0 %v2709
    %2973 = vmatprep.subr.mxu0 0.0
    %2974 = vmatpush1.msra.mxu0 0.0
    %2975 = vmatprep.subr.mxu0 0.0
    %2976 = vmatpush1.msra.mxu0 0.0
    %2977 = vmatprep.subr.mxu0 0.0
    %2978 = vmatpush1.msra.mxu0 0.0
    %2979 = vmatprep.subr.mxu0 0.0
    %2980 = vmatpush1.msra.mxu0 0.0
    %2981 = vmatprep.subr.mxu0 0.0
    %2982 = vmatpush1.msra.mxu0 0.0
    %2983 = vmatprep.subr.mxu0 0.0
    %2984 = vmatpush1.msra.mxu0 0.0
    %2985 = vmatprep.subr.mxu0 0.0
    %2986 = vmatpush1.msra.mxu0 0.0
    %2987 = vmatprep.subr.mxu0 0.0
    %2988 = vmatpush1.msra.mxu0 0.0
    %2989 = vmatprep.subr.mxu0 0.0
    %2990 = vmatpush1.msra.mxu0 0.0
    %2991 = vmatprep.subr.mxu0 0.0
    %2992 = vmatpush1.msra.mxu0 0.0
    %2993 = vmatprep.subr.mxu0 0.0
    %2994 = vmatpush1.msra.mxu0 0.0
    %2995 = vmatprep.subr.mxu0 0.0
    %2996 = vmatpush1.msra.mxu0 0.0
    %2997 = vmatprep.subr.mxu0 0.0
    %2998 = vmatpush1.msra.mxu0 0.0
    %2999 = vmatprep.subr.mxu0 0.0
    %3000 = vmatpush1.msra.mxu0 0.0
    %3001 = vmatprep.subr.mxu0 0.0
    %3002 = vmatpush1.msra.mxu0 0.0
    %3003 = vmatprep.subr.mxu0 0.0
    %3004 = vmatpush1.msra.mxu0 0.0
    %3005 = vmatprep.subr.mxu0 0.0
    %3006 = vmatpush1.msra.mxu0 0.0
    %3007 = vmatprep.subr.mxu0 0.0
    %3008 = vmatpush1.msra.mxu0 0.0
    %3009 = vmatprep.subr.mxu0 0.0
    %3010 = vmatpush1.msra.mxu0 0.0
    %3011 = vmatprep.subr.mxu0 0.0
    %3012 = vmatpush1.msra.mxu0 0.0
    %3013 = vmatprep.subr.mxu0 0.0
    %3014 = vmatpush1.msra.mxu0 0.0
    %3015 = vmatprep.subr.mxu0 0.0
    %3016 = vmatpush1.msra.mxu0 0.0
    %3017 = vmatprep.subr.mxu0 0.0
    %3018 = vmatpush1.msra.mxu0 0.0
    %3019 = vmatprep.subr.mxu0 0.0
    %3020 = vmatpush1.msra.mxu0 0.0
    %3021 = vmatprep.subr.mxu0 0.0
    %3022 = vmatpush1.msra.mxu0 0.0
    %3023 = vmatprep.subr.mxu0 0.0
    %3024 = vmatpush1.msra.mxu0 0.0
    %3025 = vmatprep.subr.mxu0 0.0
    %3026 = vmatpush1.msra.mxu0 0.0
    %3027 = vmatprep.subr.mxu0 0.0
    %3028 = vmatpush1.msra.mxu0 0.0
    %3029 = vmatprep.mubr.f32.mxu0 0.0
    %3030 = vmatmul.mubr.f32.gmra.mrb[0].mxu0 %v2806
    %v3031 = vpop.f32.mrb[0].mxu0
    %v3032 = vadd.f32 %v2744, %v3031
    %v3033 = vpop.f32.mrb[0].mxu0
    %v3034 = vadd.f32 %v2748, %v3033
    %3035 = vmatprep.mubr.f32.mxu0 0.0
    %3036 = vmatmul.mubr.f32.gmra.mrb[0].mxu0 %v2809
    %v3037 = vpop.f32.mrb[0].mxu0
    %v3038 = vadd.f32 %v2744, %v3037
    %v3039 = vpop.f32.mrb[0].mxu0
    %v3040 = vadd.f32 %v2748, %v3039
    %3041 = vdwg.mxu0
    %3042 = vmatprep.subr.mxu0 %v2664
    %3043 = vmatpush1.msra.mxu0 %v2663
    %3044 = vmatprep.subr.mxu0 %v2680
    %3045 = vmatpush1.msra.mxu0 %v2679
    %3046 = vmatprep.subr.mxu0 %v2696
    %3047 = vmatpush1.msra.mxu0 %v2695
    %3048 = vmatprep.subr.mxu0 %v2712
    %3049 = vmatpush1.msra.mxu0 %v2711
    %3050 = vmatprep.subr.mxu0 0.0
    %3051 = vmatpush1.msra.mxu0 0.0
    %3052 = vmatprep.subr.mxu0 0.0
    %3053 = vmatpush1.msra.mxu0 0.0
    %3054 = vmatprep.subr.mxu0 0.0
    %3055 = vmatpush1.msra.mxu0 0.0
    %3056 = vmatprep.subr.mxu0 0.0
    %3057 = vmatpush1.msra.mxu0 0.0
    %3058 = vmatprep.subr.mxu0 0.0
    %3059 = vmatpush1.msra.mxu0 0.0
    %3060 = vmatprep.subr.mxu0 0.0
    %3061 = vmatpush1.msra.mxu0 0.0
    %3062 = vmatprep.subr.mxu0 0.0
    %3063 = vmatpush1.msra.mxu0 0.0
    %3064 = vmatprep.subr.mxu0 0.0
    %3065 = vmatpush1.msra.mxu0 0.0
    %3066 = vmatprep.subr.mxu0 0.0
    %3067 = vmatpush1.msra.mxu0 0.0
    %3068 = vmatprep.subr.mxu0 0.0
    %3069 = vmatpush1.msra.mxu0 0.0
    %3070 = vmatprep.subr.mxu0 0.0
    %3071 = vmatpush1.msra.mxu0 0.0
    %3072 = vmatprep.subr.mxu0 0.0
    %3073 = vmatpush1.msra.mxu0 0.0
    %3074 = vmatprep.subr.mxu0 0.0
    %3075 = vmatpush1.msra.mxu0 0.0
    %3076 = vmatprep.subr.mxu0 0.0
    %3077 = vmatpush1.msra.mxu0 0.0
    %3078 = vmatprep.subr.mxu0 0.0
    %3079 = vmatpush1.msra.mxu0 0.0
    %3080 = vmatprep.subr.mxu0 0.0
    %3081 = vmatpush1.msra.mxu0 0.0
    %3082 = vmatprep.subr.mxu0 0.0
    %3083 = vmatpush1.msra.mxu0 0.0
    %3084 = vmatprep.subr.mxu0 0.0
    %3085 = vmatpush1.msra.mxu0 0.0
    %3086 = vmatprep.subr.mxu0 0.0
    %3087 = vmatpush1.msra.mxu0 0.0
    %3088 = vmatprep.subr.mxu0 0.0
    %3089 = vmatpush1.msra.mxu0 0.0
    %3090 = vmatprep.subr.mxu0 0.0
    %3091 = vmatpush1.msra.mxu0 0.0
    %3092 = vmatprep.subr.mxu0 0.0
    %3093 = vmatpush1.msra.mxu0 0.0
    %3094 = vmatprep.subr.mxu0 0.0
    %3095 = vmatpush1.msra.mxu0 0.0
    %3096 = vmatprep.subr.mxu0 0.0
    %3097 = vmatpush1.msra.mxu0 0.0
    %3098 = vmatprep.subr.mxu0 0.0
    %3099 = vmatpush1.msra.mxu0 0.0
    %3100 = vmatprep.subr.mxu0 0.0
    %3101 = vmatpush1.msra.mxu0 0.0
    %3102 = vmatprep.subr.mxu0 0.0
    %3103 = vmatpush1.msra.mxu0 0.0
    %3104 = vmatprep.subr.mxu0 0.0
    %3105 = vmatpush1.msra.mxu0 0.0
    %3106 = vmatprep.mubr.f32.mxu0 0.0
    %3107 = vmatmul.mubr.f32.gmra.mrb[0].mxu0 %v2806
    %v3108 = vpop.f32.mrb[0].mxu0
    %v3109 = vadd.f32 %v2752, %v3108
    %v3110 = vpop.f32.mrb[0].mxu0
    %v3111 = vadd.f32 %v2756, %v3110
    %3112 = vmatprep.mubr.f32.mxu0 0.0
    %3113 = vmatmul.mubr.f32.gmra.mrb[0].mxu0 %v2809
    %v3114 = vpop.f32.mrb[0].mxu0
    %v3115 = vadd.f32 %v2752, %v3114
    %v3116 = vpop.f32.mrb[0].mxu0
    %v3117 = vadd.f32 %v2756, %v3116
    %3118 = vdwg.mxu0
    %3119 = vmatprep.subr.mxu0 %v2666
    %3120 = vmatpush1.msra.mxu0 %v2665
    %3121 = vmatprep.subr.mxu0 %v2682
    %3122 = vmatpush1.msra.mxu0 %v2681
    %3123 = vmatprep.subr.mxu0 %v2698
    %3124 = vmatpush1.msra.mxu0 %v2697
    %3125 = vmatprep.subr.mxu0 %v2714
    %3126 = vmatpush1.msra.mxu0 %v2713
    %3127 = vmatprep.subr.mxu0 0.0
    %3128 = vmatpush1.msra.mxu0 0.0
    %3129 = vmatprep.subr.mxu0 0.0
    %3130 = vmatpush1.msra.mxu0 0.0
    %3131 = vmatprep.subr.mxu0 0.0
    %3132 = vmatpush1.msra.mxu0 0.0
    %3133 = vmatprep.subr.mxu0 0.0
    %3134 = vmatpush1.msra.mxu0 0.0
    %3135 = vmatprep.subr.mxu0 0.0
    %3136 = vmatpush1.msra.mxu0 0.0
    %3137 = vmatprep.subr.mxu0 0.0
    %3138 = vmatpush1.msra.mxu0 0.0
    %3139 = vmatprep.subr.mxu0 0.0
    %3140 = vmatpush1.msra.mxu0 0.0
    %3141 = vmatprep.subr.mxu0 0.0
    %3142 = vmatpush1.msra.mxu0 0.0
    %3143 = vmatprep.subr.mxu0 0.0
    %3144 = vmatpush1.msra.mxu0 0.0
    %3145 = vmatprep.subr.mxu0 0.0
    %3146 = vmatpush1.msra.mxu0 0.0
    %3147 = vmatprep.subr.mxu0 0.0
    %3148 = vmatpush1.msra.mxu0 0.0
    %3149 = vmatprep.subr.mxu0 0.0
    %3150 = vmatpush1.msra.mxu0 0.0
    %3151 = vmatprep.subr.mxu0 0.0
    %3152 = vmatpush1.msra.mxu0 0.0
    %3153 = vmatprep.subr.mxu0 0.0
    %3154 = vmatpush1.msra.mxu0 0.0
    %3155 = vmatprep.subr.mxu0 0.0
    %3156 = vmatpush1.msra.mxu0 0.0
    %3157 = vmatprep.subr.mxu0 0.0
    %3158 = vmatpush1.msra.mxu0 0.0
    %3159 = vmatprep.subr.mxu0 0.0
    %3160 = vmatpush1.msra.mxu0 0.0
    %3161 = vmatprep.subr.mxu0 0.0
    %3162 = vmatpush1.msra.mxu0 0.0
    %3163 = vmatprep.subr.mxu0 0.0
    %3164 = vmatpush1.msra.mxu0 0.0
    %3165 = vmatprep.subr.mxu0 0.0
    %3166 = vmatpush1.msra.mxu0 0.0
    %3167 = vmatprep.subr.mxu0 0.0
    %3168 = vmatpush1.msra.mxu0 0.0
    %3169 = vmatprep.subr.mxu0 0.0
    %3170 = vmatpush1.msra.mxu0 0.0
    %3171 = vmatprep.subr.mxu0 0.0
    %3172 = vmatpush1.msra.mxu0 0.0
    %3173 = vmatprep.subr.mxu0 0.0
    %3174 = vmatpush1.msra.mxu0 0.0
    %3175 = vmatprep.subr.mxu0 0.0
    %3176 = vmatpush1.msra.mxu0 0.0
    %3177 = vmatprep.subr.mxu0 0.0
    %3178 = vmatpush1.msra.mxu0 0.0
    %3179 = vmatprep.subr.mxu0 0.0
    %3180 = vmatpush1.msra.mxu0 0.0
    %3181 = vmatprep.subr.mxu0 0.0
    %3182 = vmatpush1.msra.mxu0 0.0
    %3183 = vmatprep.mubr.f32.mxu0 0.0
    %3184 = vmatmul.mubr.f32.gmra.mrb[0].mxu0 %v2806
    %v3185 = vpop.f32.mrb[0].mxu0
    %v3186 = vadd.f32 %v2760, %v3185
    %v3187 = vpop.f32.mrb[0].mxu0
    %v3188 = vadd.f32 %v2764, %v3187
    %3189 = vmatprep.mubr.f32.mxu0 0.0
    %3190 = vmatmul.mubr.f32.gmra.mrb[0].mxu0 %v2809
    %v3191 = vpop.f32.mrb[0].mxu0
    %v3192 = vadd.f32 %v2760, %v3191
    %v3193 = vpop.f32.mrb[0].mxu0
    %v3194 = vadd.f32 %v2764, %v3193
    %3195 = vdwg.mxu0
    %3196 = vmatprep.subr.mxu0 %v2668
    %3197 = vmatpush1.msra.mxu0 %v2667
    %3198 = vmatprep.subr.mxu0 %v2684
    %3199 = vmatpush1.msra.mxu0 %v2683
    %3200 = vmatprep.subr.mxu0 %v2700
    %3201 = vmatpush1.msra.mxu0 %v2699
    %3202 = vmatprep.subr.mxu0 %v2716
    %3203 = vmatpush1.msra.mxu0 %v2715
    %3204 = vmatprep.subr.mxu0 0.0
    %3205 = vmatpush1.msra.mxu0 0.0
    %3206 = vmatprep.subr.mxu0 0.0
    %3207 = vmatpush1.msra.mxu0 0.0
    %3208 = vmatprep.subr.mxu0 0.0
    %3209 = vmatpush1.msra.mxu0 0.0
    %3210 = vmatprep.subr.mxu0 0.0
    %3211 = vmatpush1.msra.mxu0 0.0
    %3212 = vmatprep.subr.mxu0 0.0
    %3213 = vmatpush1.msra.mxu0 0.0
    %3214 = vmatprep.subr.mxu0 0.0
    %3215 = vmatpush1.msra.mxu0 0.0
    %3216 = vmatprep.subr.mxu0 0.0
    %3217 = vmatpush1.msra.mxu0 0.0
    %3218 = vmatprep.subr.mxu0 0.0
    %3219 = vmatpush1.msra.mxu0 0.0
    %3220 = vmatprep.subr.mxu0 0.0
    %3221 = vmatpush1.msra.mxu0 0.0
    %3222 = vmatprep.subr.mxu0 0.0
    %3223 = vmatpush1.msra.mxu0 0.0
    %3224 = vmatprep.subr.mxu0 0.0
    %3225 = vmatpush1.msra.mxu0 0.0
    %3226 = vmatprep.subr.mxu0 0.0
    %3227 = vmatpush1.msra.mxu0 0.0
    %3228 = vmatprep.subr.mxu0 0.0
    %3229 = vmatpush1.msra.mxu0 0.0
    %3230 = vmatprep.subr.mxu0 0.0
    %3231 = vmatpush1.msra.mxu0 0.0
    %3232 = vmatprep.subr.mxu0 0.0
    %3233 = vmatpush1.msra.mxu0 0.0
    %3234 = vmatprep.subr.mxu0 0.0
    %3235 = vmatpush1.msra.mxu0 0.0
    %3236 = vmatprep.subr.mxu0 0.0
    %3237 = vmatpush1.msra.mxu0 0.0
    %3238 = vmatprep.subr.mxu0 0.0
    %3239 = vmatpush1.msra.mxu0 0.0
    %3240 = vmatprep.subr.mxu0 0.0
    %3241 = vmatpush1.msra.mxu0 0.0
    %3242 = vmatprep.subr.mxu0 0.0
    %3243 = vmatpush1.msra.mxu0 0.0
    %3244 = vmatprep.subr.mxu0 0.0
    %3245 = vmatpush1.msra.mxu0 0.0
    %3246 = vmatprep.subr.mxu0 0.0
    %3247 = vmatpush1.msra.mxu0 0.0
    %3248 = vmatprep.subr.mxu0 0.0
    %3249 = vmatpush1.msra.mxu0 0.0
    %3250 = vmatprep.subr.mxu0 0.0
    %3251 = vmatpush1.msra.mxu0 0.0
    %3252 = vmatprep.subr.mxu0 0.0
    %3253 = vmatpush1.msra.mxu0 0.0
    %3254 = vmatprep.subr.mxu0 0.0
    %3255 = vmatpush1.msra.mxu0 0.0
    %3256 = vmatprep.subr.mxu0 0.0
    %3257 = vmatpush1.msra.mxu0 0.0
    %3258 = vmatprep.subr.mxu0 0.0
    %3259 = vmatpush1.msra.mxu0 0.0
    %3260 = vmatprep.mubr.f32.mxu0 0.0
    %3261 = vmatmul.mubr.f32.gmra.mrb[0].mxu0 %v2806
    %v3262 = vpop.f32.mrb[0].mxu0
    %v3263 = vadd.f32 %v2768, %v3262
    %v3264 = vpop.f32.mrb[0].mxu0
    %v3265 = vadd.f32 %v2772, %v3264
    %3266 = vmatprep.mubr.f32.mxu0 0.0
    %3267 = vmatmul.mubr.f32.gmra.mrb[0].mxu0 %v2809
    %v3268 = vpop.f32.mrb[0].mxu0
    %v3269 = vadd.f32 %v2768, %v3268
    %v3270 = vpop.f32.mrb[0].mxu0
    %v3271 = vadd.f32 %v2772, %v3270
    %3272 = vdwg.mxu0
    %3273 = vmatprep.subr.mxu0 %v2670
    %3274 = vmatpush1.msra.mxu0 %v2669
    %3275 = vmatprep.subr.mxu0 %v2686
    %3276 = vmatpush1.msra.mxu0 %v2685
    %3277 = vmatprep.subr.mxu0 %v2702
    %3278 = vmatpush1.msra.mxu0 %v2701
    %3279 = vmatprep.subr.mxu0 %v2718
    %3280 = vmatpush1.msra.mxu0 %v2717
    %3281 = vmatprep.subr.mxu0 0.0
    %3282 = vmatpush1.msra.mxu0 0.0
    %3283 = vmatprep.subr.mxu0 0.0
    %3284 = vmatpush1.msra.mxu0 0.0
    %3285 = vmatprep.subr.mxu0 0.0
    %3286 = vmatpush1.msra.mxu0 0.0
    %3287 = vmatprep.subr.mxu0 0.0
    %3288 = vmatpush1.msra.mxu0 0.0
    %3289 = vmatprep.subr.mxu0 0.0
    %3290 = vmatpush1.msra.mxu0 0.0
    %3291 = vmatprep.subr.mxu0 0.0
    %3292 = vmatpush1.msra.mxu0 0.0
    %3293 = vmatprep.subr.mxu0 0.0
    %3294 = vmatpush1.msra.mxu0 0.0
    %3295 = vmatprep.subr.mxu0 0.0
    %3296 = vmatpush1.msra.mxu0 0.0
    %3297 = vmatprep.subr.mxu0 0.0
    %3298 = vmatpush1.msra.mxu0 0.0
    %3299 = vmatprep.subr.mxu0 0.0
    %3300 = vmatpush1.msra.mxu0 0.0
    %3301 = vmatprep.subr.mxu0 0.0
    %3302 = vmatpush1.msra.mxu0 0.0
    %3303 = vmatprep.subr.mxu0 0.0
    %3304 = vmatpush1.msra.mxu0 0.0
    %3305 = vmatprep.subr.mxu0 0.0
    %3306 = vmatpush1.msra.mxu0 0.0
    %3307 = vmatprep.subr.mxu0 0.0
    %3308 = vmatpush1.msra.mxu0 0.0
    %3309 = vmatprep.subr.mxu0 0.0
    %3310 = vmatpush1.msra.mxu0 0.0
    %3311 = vmatprep.subr.mxu0 0.0
    %3312 = vmatpush1.msra.mxu0 0.0
    %3313 = vmatprep.subr.mxu0 0.0
    %3314 = vmatpush1.msra.mxu0 0.0
    %3315 = vmatprep.subr.mxu0 0.0
    %3316 = vmatpush1.msra.mxu0 0.0
    %3317 = vmatprep.subr.mxu0 0.0
    %3318 = vmatpush1.msra.mxu0 0.0
    %3319 = vmatprep.subr.mxu0 0.0
    %3320 = vmatpush1.msra.mxu0 0.0
    %3321 = vmatprep.subr.mxu0 0.0
    %3322 = vmatpush1.msra.mxu0 0.0
    %3323 = vmatprep.subr.mxu0 0.0
    %3324 = vmatpush1.msra.mxu0 0.0
    %3325 = vmatprep.subr.mxu0 0.0
    %3326 = vmatpush1.msra.mxu0 0.0
    %3327 = vmatprep.subr.mxu0 0.0
    %3328 = vmatpush1.msra.mxu0 0.0
    %3329 = vmatprep.subr.mxu0 0.0
    %3330 = vmatpush1.msra.mxu0 0.0
    %3331 = vmatprep.subr.mxu0 0.0
    %3332 = vmatpush1.msra.mxu0 0.0
    %3333 = vmatprep.subr.mxu0 0.0
    %3334 = vmatpush1.msra.mxu0 0.0
    %3335 = vmatprep.subr.mxu0 0.0
    %3336 = vmatpush1.msra.mxu0 0.0
    %3337 = vmatprep.mubr.f32.mxu0 0.0
    %3338 = vmatmul.mubr.f32.gmra.mrb[0].mxu0 %v2806
    %v3339 = vpop.f32.mrb[0].mxu0
    %v3340 = vadd.f32 %v2776, %v3339
    %v3341 = vpop.f32.mrb[0].mxu0
    %v3342 = vadd.f32 %v2780, %v3341
    %3343 = vmatprep.mubr.f32.mxu0 0.0
    %3344 = vmatmul.mubr.f32.gmra.mrb[0].mxu0 %v2809
    %v3345 = vpop.f32.mrb[0].mxu0
    %v3346 = vadd.f32 %v2776, %v3345
    %v3347 = vpop.f32.mrb[0].mxu0
    %v3348 = vadd.f32 %v2780, %v3347
    %3349 = vdwg.mxu0
    %3350 = vmatprep.subr.mxu0 %v2672
    %3351 = vmatpush1.msra.mxu0 %v2671
    %3352 = vmatprep.subr.mxu0 %v2688
    %3353 = vmatpush1.msra.mxu0 %v2687
    %3354 = vmatprep.subr.mxu0 %v2704
    %3355 = vmatpush1.msra.mxu0 %v2703
    %3356 = vmatprep.subr.mxu0 %v2720
    %3357 = vmatpush1.msra.mxu0 %v2719
    %3358 = vmatprep.subr.mxu0 0.0
    %3359 = vmatpush1.msra.mxu0 0.0
    %3360 = vmatprep.subr.mxu0 0.0
    %3361 = vmatpush1.msra.mxu0 0.0
    %3362 = vmatprep.subr.mxu0 0.0
    %3363 = vmatpush1.msra.mxu0 0.0
    %3364 = vmatprep.subr.mxu0 0.0
    %3365 = vmatpush1.msra.mxu0 0.0
    %3366 = vmatprep.subr.mxu0 0.0
    %3367 = vmatpush1.msra.mxu0 0.0
    %3368 = vmatprep.subr.mxu0 0.0
    %3369 = vmatpush1.msra.mxu0 0.0
    %3370 = vmatprep.subr.mxu0 0.0
    %3371 = vmatpush1.msra.mxu0 0.0
    %3372 = vmatprep.subr.mxu0 0.0
    %3373 = vmatpush1.msra.mxu0 0.0
    %3374 = vmatprep.subr.mxu0 0.0
    %3375 = vmatpush1.msra.mxu0 0.0
    %3376 = vmatprep.subr.mxu0 0.0
    %3377 = vmatpush1.msra.mxu0 0.0
    %3378 = vmatprep.subr.mxu0 0.0
    %3379 = vmatpush1.msra.mxu0 0.0
    %3380 = vmatprep.subr.mxu0 0.0
    %3381 = vmatpush1.msra.mxu0 0.0
    %3382 = vmatprep.subr.mxu0 0.0
    %3383 = vmatpush1.msra.mxu0 0.0
    %3384 = vmatprep.subr.mxu0 0.0
    %3385 = vmatpush1.msra.mxu0 0.0
    %3386 = vmatprep.subr.mxu0 0.0
    %3387 = vmatpush1.msra.mxu0 0.0
    %3388 = vmatprep.subr.mxu0 0.0
    %3389 = vmatpush1.msra.mxu0 0.0
    %3390 = vmatprep.subr.mxu0 0.0
    %3391 = vmatpush1.msra.mxu0 0.0
    %3392 = vmatprep.subr.mxu0 0.0
    %3393 = vmatpush1.msra.mxu0 0.0
    %3394 = vmatprep.subr.mxu0 0.0
    %3395 = vmatpush1.msra.mxu0 0.0
    %3396 = vmatprep.subr.mxu0 0.0
    %3397 = vmatpush1.msra.mxu0 0.0
    %3398 = vmatprep.subr.mxu0 0.0
    %3399 = vmatpush1.msra.mxu0 0.0
    %3400 = vmatprep.subr.mxu0 0.0
    %3401 = vmatpush1.msra.mxu0 0.0
    %3402 = vmatprep.subr.mxu0 0.0
    %3403 = vmatpush1.msra.mxu0 0.0
    %3404 = vmatprep.subr.mxu0 0.0
    %3405 = vmatpush1.msra.mxu0 0.0
    %3406 = vmatprep.subr.mxu0 0.0
    %3407 = vmatpush1.msra.mxu0 0.0
    %3408 = vmatprep.subr.mxu0 0.0
    %3409 = vmatpush1.msra.mxu0 0.0
    %3410 = vmatprep.subr.mxu0 0.0
    %3411 = vmatpush1.msra.mxu0 0.0
    %3412 = vmatprep.subr.mxu0 0.0
    %3413 = vmatpush1.msra.mxu0 0.0
    %3414 = vmatprep.mubr.f32.mxu0 0.0
    %3415 = vmatmul.mubr.f32.gmra.mrb[0].mxu0 %v2806
    %v3416 = vpop.f32.mrb[0].mxu0
    %v3417 = vadd.f32 %v2784, %v3416
    %v3418 = vpop.f32.mrb[0].mxu0
    %v3419 = vadd.f32 %v2788, %v3418
    %3420 = vmatprep.mubr.f32.mxu0 0.0
    %3421 = vmatmul.mubr.f32.gmra.mrb[0].mxu0 %v2809
    %v3422 = vpop.f32.mrb[0].mxu0
    %v3423 = vadd.f32 %v2784, %v3422
    %v3424 = vpop.f32.mrb[0].mxu0
    %v3425 = vadd.f32 %v2788, %v3424
    %3426 = vdwg.mxu0
    %v3427 = vmax.f32 %v2878, 0.0
    %v3428 = vmax.f32 %v2880, 0.0
    %v3429 = vmax.f32 %v2955, 0.0
    %v3430 = vmax.f32 %v2957, 0.0
    %v3431 = vmax.f32 %v3032, 0.0
    %v3432 = vmax.f32 %v3034, 0.0
    %v3433 = vmax.f32 %v3109, 0.0
    %v3434 = vmax.f32 %v3111, 0.0
    %v3435 = vmax.f32 %v3186, 0.0
    %v3436 = vmax.f32 %v3188, 0.0
    %v3437 = vmax.f32 %v3263, 0.0
    %v3438 = vmax.f32 %v3265, 0.0
    %v3439 = vmax.f32 %v3340, 0.0
    %v3440 = vmax.f32 %v3342, 0.0
    %v3441 = vmax.f32 %v3417, 0.0
    %v3442 = vmax.f32 %v3419, 0.0
    %v3443 = vmax.f32 %v2884, 0.0
    %v3444 = vmax.f32 %v2886, 0.0
    %v3445 = vmax.f32 %v2961, 0.0
    %v3446 = vmax.f32 %v2963, 0.0
    %v3447 = vmax.f32 %v3038, 0.0
    %v3448 = vmax.f32 %v3040, 0.0
    %v3449 = vmax.f32 %v3115, 0.0
    %v3450 = vmax.f32 %v3117, 0.0
    %v3451 = vmax.f32 %v3192, 0.0
    %v3452 = vmax.f32 %v3194, 0.0
    %v3453 = vmax.f32 %v3269, 0.0
    %v3454 = vmax.f32 %v3271, 0.0
    %v3455 = vmax.f32 %v3346, 0.0
    %v3456 = vmax.f32 %v3348, 0.0
    %v3457 = vmax.f32 %v3423, 0.0
    %v3458 = vmax.f32 %v3425, 0.0
    %v3459 = vld [vmem:[%s55] sm:$0xff]
    %v3460 = vld [vmem:[%s55 + $0x8] sm:$0xff]
    %v3461 = vld [vmem:[%s55 + $0x10] sm:$0xff]
    %v3462 = vld [vmem:[%s55 + $0x18] sm:$0xff]
    %v3463 = vld [vmem:[%s55 + $0x20] sm:$0xff]
    %v3464 = vld [vmem:[%s55 + $0x28] sm:$0xff]
    %v3465 = vld [vmem:[%s55 + $0x30] sm:$0xff]
    %v3466 = vld [vmem:[%s55 + $0x38] sm:$0xff]
    %v3467 = vld [vmem:[%s55 + $0x40] sm:$0xff]
    %v3468 = vld [vmem:[%s55 + $0x48] sm:$0xff]
    %v3469 = vld [vmem:[%s55 + $0x50] sm:$0xff]
    %v3470 = vld [vmem:[%s55 + $0x58] sm:$0xff]
    %v3471 = vld [vmem:[%s55 + $0x60] sm:$0xff]
    %v3472 = vld [vmem:[%s55 + $0x68] sm:$0xff]
    %v3473 = vld [vmem:[%s55 + $0x70] sm:$0xff]
    %v3474 = vld [vmem:[%s55 + $0x78] sm:$0xff]
    %v3475 = vld [vmem:[%s55 + $0x80] sm:$0xff]
    %v3476 = vld [vmem:[%s55 + $0x88] sm:$0xff]
    %v3477 = vld [vmem:[%s55 + $0x90] sm:$0xff]
    %v3478 = vld [vmem:[%s55 + $0x98] sm:$0xff]
    %v3479 = vld [vmem:[%s55 + $0xa0] sm:$0xff]
    %v3480 = vld [vmem:[%s55 + $0xa8] sm:$0xff]
    %v3481 = vld [vmem:[%s55 + $0xb0] sm:$0xff]
    %v3482 = vld [vmem:[%s55 + $0xb8] sm:$0xff]
    %v3483 = vld [vmem:[%s55 + $0xc0] sm:$0xff]
    %v3484 = vld [vmem:[%s55 + $0xc8] sm:$0xff]
    %v3485 = vld [vmem:[%s55 + $0xd0] sm:$0xff]
    %v3486 = vld [vmem:[%s55 + $0xd8] sm:$0xff]
    %v3487 = vld [vmem:[%s55 + $0xe0] sm:$0xff]
    %v3488 = vld [vmem:[%s55 + $0xe8] sm:$0xff]
    %v3489 = vld [vmem:[%s55 + $0xf0] sm:$0xff]
    %v3490 = vld [vmem:[%s55 + $0xf8] sm:$0xff]
    %v3491 = vld [vmem:[%s55 + $0x100] sm:$0xff]
    %v3492 = vld [vmem:[%s55 + $0x108] sm:$0xff]
    %v3493 = vld [vmem:[%s55 + $0x110] sm:$0xff]
    %v3494 = vld [vmem:[%s55 + $0x118] sm:$0xff]
    %v3495 = vld [vmem:[%s55 + $0x120] sm:$0xff]
    %v3496 = vld [vmem:[%s55 + $0x128] sm:$0xff]
    %v3497 = vld [vmem:[%s55 + $0x130] sm:$0xff]
    %v3498 = vld [vmem:[%s55 + $0x138] sm:$0xff]
    %v3499 = vld [vmem:[%s55 + $0x140] sm:$0xff]
    %v3500 = vld [vmem:[%s55 + $0x148] sm:$0xff]
    %v3501 = vld [vmem:[%s55 + $0x150] sm:$0xff]
    %v3502 = vld [vmem:[%s55 + $0x158] sm:$0xff]
    %v3503 = vld [vmem:[%s55 + $0x160] sm:$0xff]
    %v3504 = vld [vmem:[%s55 + $0x168] sm:$0xff]
    %v3505 = vld [vmem:[%s55 + $0x170] sm:$0xff]
    %v3506 = vld [vmem:[%s55 + $0x178] sm:$0xff]
    %v3507 = vld [vmem:[%s55 + $0x180] sm:$0xff]
    %v3508 = vld [vmem:[%s55 + $0x188] sm:$0xff]
    %v3509 = vld [vmem:[%s55 + $0x190] sm:$0xff]
    %v3510 = vld [vmem:[%s55 + $0x198] sm:$0xff]
    %v3511 = vld [vmem:[%s55 + $0x1a0] sm:$0xff]
    %v3512 = vld [vmem:[%s55 + $0x1a8] sm:$0xff]
    %v3513 = vld [vmem:[%s55 + $0x1b0] sm:$0xff]
    %v3514 = vld [vmem:[%s55 + $0x1b8] sm:$0xff]
    %v3515 = vld [vmem:[%s55 + $0x1c0] sm:$0xff]
    %v3516 = vld [vmem:[%s55 + $0x1c8] sm:$0xff]
    %v3517 = vld [vmem:[%s55 + $0x1d0] sm:$0xff]
    %v3518 = vld [vmem:[%s55 + $0x1d8] sm:$0xff]
    %v3519 = vld [vmem:[%s55 + $0x1e0] sm:$0xff]
    %v3520 = vld [vmem:[%s55 + $0x1e8] sm:$0xff]
    %v3521 = vld [vmem:[%s55 + $0x1f0] sm:$0xff]
    %v3522 = vld [vmem:[%s55 + $0x1f8] sm:$0xff]
    %v3523 = vld [vmem:[%s55 + $0x200] sm:$0xff]
    %v3524 = vld [vmem:[%s55 + $0x208] sm:$0xff]
    %v3525 = vld [vmem:[%s55 + $0x210] sm:$0xff]
    %v3526 = vld [vmem:[%s55 + $0x218] sm:$0xff]
    %v3527 = vld [vmem:[%s55 + $0x220] sm:$0xff]
    %v3528 = vld [vmem:[%s55 + $0x228] sm:$0xff]
    %v3529 = vld [vmem:[%s55 + $0x230] sm:$0xff]
    %v3530 = vld [vmem:[%s55 + $0x238] sm:$0xff]
    %v3531 = vld [vmem:[%s55 + $0x240] sm:$0xff]
    %v3532 = vld [vmem:[%s55 + $0x248] sm:$0xff]
    %v3533 = vld [vmem:[%s55 + $0x250] sm:$0xff]
    %v3534 = vld [vmem:[%s55 + $0x258] sm:$0xff]
    %v3535 = vld [vmem:[%s55 + $0x260] sm:$0xff]
    %v3536 = vld [vmem:[%s55 + $0x268] sm:$0xff]
    %v3537 = vld [vmem:[%s55 + $0x270] sm:$0xff]
    %v3538 = vld [vmem:[%s55 + $0x278] sm:$0xff]
    %v3539 = vld [vmem:[%s55 + $0x280] sm:$0xff]
    %v3540 = vld [vmem:[%s55 + $0x288] sm:$0xff]
    %v3541 = vld [vmem:[%s55 + $0x290] sm:$0xff]
    %v3542 = vld [vmem:[%s55 + $0x298] sm:$0xff]
    %v3543 = vld [vmem:[%s55 + $0x2a0] sm:$0xff]
    %v3544 = vld [vmem:[%s55 + $0x2a8] sm:$0xff]
    %v3545 = vld [vmem:[%s55 + $0x2b0] sm:$0xff]
    %v3546 = vld [vmem:[%s55 + $0x2b8] sm:$0xff]
    %v3547 = vld [vmem:[%s55 + $0x2c0] sm:$0xff]
    %v3548 = vld [vmem:[%s55 + $0x2c8] sm:$0xff]
    %v3549 = vld [vmem:[%s55 + $0x2d0] sm:$0xff]
    %v3550 = vld [vmem:[%s55 + $0x2d8] sm:$0xff]
    %v3551 = vld [vmem:[%s55 + $0x2e0] sm:$0xff]
    %v3552 = vld [vmem:[%s55 + $0x2e8] sm:$0xff]
    %v3553 = vld [vmem:[%s55 + $0x2f0] sm:$0xff]
    %v3554 = vld [vmem:[%s55 + $0x2f8] sm:$0xff]
    %v3555 = vld [vmem:[%s55 + $0x300] sm:$0xff]
    %v3556 = vld [vmem:[%s55 + $0x308] sm:$0xff]
    %v3557 = vld [vmem:[%s55 + $0x310] sm:$0xff]
    %v3558 = vld [vmem:[%s55 + $0x318] sm:$0xff]
    %v3559 = vld [vmem:[%s55 + $0x320] sm:$0xff]
    %v3560 = vld [vmem:[%s55 + $0x328] sm:$0xff]
    %v3561 = vld [vmem:[%s55 + $0x330] sm:$0xff]
    %v3562 = vld [vmem:[%s55 + $0x338] sm:$0xff]
    %v3563 = vld [vmem:[%s55 + $0x340] sm:$0xff]
    %v3564 = vld [vmem:[%s55 + $0x348] sm:$0xff]
    %v3565 = vld [vmem:[%s55 + $0x350] sm:$0xff]
    %v3566 = vld [vmem:[%s55 + $0x358] sm:$0xff]
    %v3567 = vld [vmem:[%s55 + $0x360] sm:$0xff]
    %v3568 = vld [vmem:[%s55 + $0x368] sm:$0xff]
    %v3569 = vld [vmem:[%s55 + $0x370] sm:$0xff]
    %v3570 = vld [vmem:[%s55 + $0x378] sm:$0xff]
    %v3571 = vld [vmem:[%s55 + $0x380] sm:$0xff]
    %v3572 = vld [vmem:[%s55 + $0x388] sm:$0xff]
    %v3573 = vld [vmem:[%s55 + $0x390] sm:$0xff]
    %v3574 = vld [vmem:[%s55 + $0x398] sm:$0xff]
    %v3575 = vld [vmem:[%s55 + $0x3a0] sm:$0xff]
    %v3576 = vld [vmem:[%s55 + $0x3a8] sm:$0xff]
    %v3577 = vld [vmem:[%s55 + $0x3b0] sm:$0xff]
    %v3578 = vld [vmem:[%s55 + $0x3b8] sm:$0xff]
    %v3579 = vld [vmem:[%s55 + $0x3c0] sm:$0xff]
    %v3580 = vld [vmem:[%s55 + $0x3c8] sm:$0xff]
    %v3581 = vld [vmem:[%s55 + $0x3d0] sm:$0xff]
    %v3582 = vld [vmem:[%s55 + $0x3d8] sm:$0xff]
    %v3583 = vld [vmem:[%s55 + $0x3e0] sm:$0xff]
    %v3584 = vld [vmem:[%s55 + $0x3e8] sm:$0xff]
    %v3585 = vld [vmem:[%s55 + $0x3f0] sm:$0xff]
    %v3586 = vld [vmem:[%s55 + $0x3f8] sm:$0xff]
    %v3587 = vld [vmem:[%s55 + $0x400] sm:$0xff]
    %v3588 = vld [vmem:[%s55 + $0x408] sm:$0xff]
    %v3589 = vld [vmem:[%s55 + $0x410] sm:$0xff]
    %v3590 = vld [vmem:[%s55 + $0x418] sm:$0xff]
    %v3591 = vld [vmem:[%s55 + $0x420] sm:$0xff]
    %v3592 = vld [vmem:[%s55 + $0x428] sm:$0xff]
    %v3593 = vld [vmem:[%s55 + $0x430] sm:$0xff]
    %v3594 = vld [vmem:[%s55 + $0x438] sm:$0xff]
    %v3595 = vld [vmem:[%s55 + $0x440] sm:$0xff]
    %v3596 = vld [vmem:[%s55 + $0x448] sm:$0xff]
    %v3597 = vld [vmem:[%s55 + $0x450] sm:$0xff]
    %v3598 = vld [vmem:[%s55 + $0x458] sm:$0xff]
    %v3599 = vld [vmem:[%s55 + $0x460] sm:$0xff]
    %v3600 = vld [vmem:[%s55 + $0x468] sm:$0xff]
    %v3601 = vld [vmem:[%s55 + $0x470] sm:$0xff]
    %v3602 = vld [vmem:[%s55 + $0x478] sm:$0xff]
    %v3603 = vld [vmem:[%s55 + $0x480] sm:$0xff]
    %v3604 = vld [vmem:[%s55 + $0x488] sm:$0xff]
    %v3605 = vld [vmem:[%s55 + $0x490] sm:$0xff]
    %v3606 = vld [vmem:[%s55 + $0x498] sm:$0xff]
    %v3607 = vld [vmem:[%s55 + $0x4a0] sm:$0xff]
    %v3608 = vld [vmem:[%s55 + $0x4a8] sm:$0xff]
    %v3609 = vld [vmem:[%s55 + $0x4b0] sm:$0xff]
    %v3610 = vld [vmem:[%s55 + $0x4b8] sm:$0xff]
    %v3611 = vld [vmem:[%s55 + $0x4c0] sm:$0xff]
    %v3612 = vld [vmem:[%s55 + $0x4c8] sm:$0xff]
    %v3613 = vld [vmem:[%s55 + $0x4d0] sm:$0xff]
    %v3614 = vld [vmem:[%s55 + $0x4d8] sm:$0xff]
    %v3615 = vld [vmem:[%s55 + $0x4e0] sm:$0xff]
    %v3616 = vld [vmem:[%s55 + $0x4e8] sm:$0xff]
    %v3617 = vld [vmem:[%s55 + $0x4f0] sm:$0xff]
    %v3618 = vld [vmem:[%s55 + $0x4f8] sm:$0xff]
    %v3619 = vld [vmem:[%s55 + $0x500] sm:$0xff]
    %v3620 = vld [vmem:[%s55 + $0x508] sm:$0xff]
    %v3621 = vld [vmem:[%s55 + $0x510] sm:$0xff]
    %v3622 = vld [vmem:[%s55 + $0x518] sm:$0xff]
    %v3623 = vld [vmem:[%s55 + $0x520] sm:$0xff]
    %v3624 = vld [vmem:[%s55 + $0x528] sm:$0xff]
    %v3625 = vld [vmem:[%s55 + $0x530] sm:$0xff]
    %v3626 = vld [vmem:[%s55 + $0x538] sm:$0xff]
    %v3627 = vld [vmem:[%s55 + $0x540] sm:$0xff]
    %v3628 = vld [vmem:[%s55 + $0x548] sm:$0xff]
    %v3629 = vld [vmem:[%s55 + $0x550] sm:$0xff]
    %v3630 = vld [vmem:[%s55 + $0x558] sm:$0xff]
    %v3631 = vld [vmem:[%s55 + $0x560] sm:$0xff]
    %v3632 = vld [vmem:[%s55 + $0x568] sm:$0xff]
    %v3633 = vld [vmem:[%s55 + $0x570] sm:$0xff]
    %v3634 = vld [vmem:[%s55 + $0x578] sm:$0xff]
    %v3635 = vld [vmem:[%s55 + $0x580] sm:$0xff]
    %v3636 = vld [vmem:[%s55 + $0x588] sm:$0xff]
    %v3637 = vld [vmem:[%s55 + $0x590] sm:$0xff]
    %v3638 = vld [vmem:[%s55 + $0x598] sm:$0xff]
    %v3639 = vld [vmem:[%s55 + $0x5a0] sm:$0xff]
    %v3640 = vld [vmem:[%s55 + $0x5a8] sm:$0xff]
    %v3641 = vld [vmem:[%s55 + $0x5b0] sm:$0xff]
    %v3642 = vld [vmem:[%s55 + $0x5b8] sm:$0xff]
    %v3643 = vld [vmem:[%s55 + $0x5c0] sm:$0xff]
    %v3644 = vld [vmem:[%s55 + $0x5c8] sm:$0xff]
    %v3645 = vld [vmem:[%s55 + $0x5d0] sm:$0xff]
    %v3646 = vld [vmem:[%s55 + $0x5d8] sm:$0xff]
    %v3647 = vld [vmem:[%s55 + $0x5e0] sm:$0xff]
    %v3648 = vld [vmem:[%s55 + $0x5e8] sm:$0xff]
    %v3649 = vld [vmem:[%s55 + $0x5f0] sm:$0xff]
    %v3650 = vld [vmem:[%s55 + $0x5f8] sm:$0xff]
    %v3651 = vld [vmem:[%s55 + $0x600] sm:$0xff]
    %v3652 = vld [vmem:[%s55 + $0x608] sm:$0xff]
    %v3653 = vld [vmem:[%s55 + $0x610] sm:$0xff]
    %v3654 = vld [vmem:[%s55 + $0x618] sm:$0xff]
    %v3655 = vld [vmem:[%s55 + $0x620] sm:$0xff]
    %v3656 = vld [vmem:[%s55 + $0x628] sm:$0xff]
    %v3657 = vld [vmem:[%s55 + $0x630] sm:$0xff]
    %v3658 = vld [vmem:[%s55 + $0x638] sm:$0xff]
    %v3659 = vld [vmem:[%s55 + $0x640] sm:$0xff]
    %v3660 = vld [vmem:[%s55 + $0x648] sm:$0xff]
    %v3661 = vld [vmem:[%s55 + $0x650] sm:$0xff]
    %v3662 = vld [vmem:[%s55 + $0x658] sm:$0xff]
    %v3663 = vld [vmem:[%s55 + $0x660] sm:$0xff]
    %v3664 = vld [vmem:[%s55 + $0x668] sm:$0xff]
    %v3665 = vld [vmem:[%s55 + $0x670] sm:$0xff]
    %v3666 = vld [vmem:[%s55 + $0x678] sm:$0xff]
    %v3667 = vld [vmem:[%s55 + $0x680] sm:$0xff]
    %v3668 = vld [vmem:[%s55 + $0x688] sm:$0xff]
    %v3669 = vld [vmem:[%s55 + $0x690] sm:$0xff]
    %v3670 = vld [vmem:[%s55 + $0x698] sm:$0xff]
    %v3671 = vld [vmem:[%s55 + $0x6a0] sm:$0xff]
    %v3672 = vld [vmem:[%s55 + $0x6a8] sm:$0xff]
    %v3673 = vld [vmem:[%s55 + $0x6b0] sm:$0xff]
    %v3674 = vld [vmem:[%s55 + $0x6b8] sm:$0xff]
    %v3675 = vld [vmem:[%s55 + $0x6c0] sm:$0xff]
    %v3676 = vld [vmem:[%s55 + $0x6c8] sm:$0xff]
    %v3677 = vld [vmem:[%s55 + $0x6d0] sm:$0xff]
    %v3678 = vld [vmem:[%s55 + $0x6d8] sm:$0xff]
    %v3679 = vld [vmem:[%s55 + $0x6e0] sm:$0xff]
    %v3680 = vld [vmem:[%s55 + $0x6e8] sm:$0xff]
    %v3681 = vld [vmem:[%s55 + $0x6f0] sm:$0xff]
    %v3682 = vld [vmem:[%s55 + $0x6f8] sm:$0xff]
    %v3683 = vld [vmem:[%s55 + $0x700] sm:$0xff]
    %v3684 = vld [vmem:[%s55 + $0x708] sm:$0xff]
    %v3685 = vld [vmem:[%s55 + $0x710] sm:$0xff]
    %v3686 = vld [vmem:[%s55 + $0x718] sm:$0xff]
    %v3687 = vld [vmem:[%s55 + $0x720] sm:$0xff]
    %v3688 = vld [vmem:[%s55 + $0x728] sm:$0xff]
    %v3689 = vld [vmem:[%s55 + $0x730] sm:$0xff]
    %v3690 = vld [vmem:[%s55 + $0x738] sm:$0xff]
    %v3691 = vld [vmem:[%s55 + $0x740] sm:$0xff]
    %v3692 = vld [vmem:[%s55 + $0x748] sm:$0xff]
    %v3693 = vld [vmem:[%s55 + $0x750] sm:$0xff]
    %v3694 = vld [vmem:[%s55 + $0x758] sm:$0xff]
    %v3695 = vld [vmem:[%s55 + $0x760] sm:$0xff]
    %v3696 = vld [vmem:[%s55 + $0x768] sm:$0xff]
    %v3697 = vld [vmem:[%s55 + $0x770] sm:$0xff]
    %v3698 = vld [vmem:[%s55 + $0x778] sm:$0xff]
    %v3699 = vld [vmem:[%s55 + $0x780] sm:$0xff]
    %v3700 = vld [vmem:[%s55 + $0x788] sm:$0xff]
    %v3701 = vld [vmem:[%s55 + $0x790] sm:$0xff]
    %v3702 = vld [vmem:[%s55 + $0x798] sm:$0xff]
    %v3703 = vld [vmem:[%s55 + $0x7a0] sm:$0xff]
    %v3704 = vld [vmem:[%s55 + $0x7a8] sm:$0xff]
    %v3705 = vld [vmem:[%s55 + $0x7b0] sm:$0xff]
    %v3706 = vld [vmem:[%s55 + $0x7b8] sm:$0xff]
    %v3707 = vld [vmem:[%s55 + $0x7c0] sm:$0xff]
    %v3708 = vld [vmem:[%s55 + $0x7c8] sm:$0xff]
    %v3709 = vld [vmem:[%s55 + $0x7d0] sm:$0xff]
    %v3710 = vld [vmem:[%s55 + $0x7d8] sm:$0xff]
    %v3711 = vld [vmem:[%s55 + $0x7e0] sm:$0xff]
    %v3712 = vld [vmem:[%s55 + $0x7e8] sm:$0xff]
    %v3713 = vld [vmem:[%s55 + $0x7f0] sm:$0xff]
    %v3714 = vld [vmem:[%s55 + $0x7f8] sm:$0xff]
    %v3715 = vld [vmem:[%s57] sm:$0x1]
    %v3717 = vlaneseq
    %v3718 = vshrl.u32 %v3717, 7
    %v3719 = vsub.s32 0, %v3718
    %v3720 = vrot.slane %v3715, %v3719
    %3722 = vmatprep.subr.mxu0 0.0
    %3723 = vmatpush1.msra.mxu0 %v3459
    %3724 = vmatprep.subr.mxu0 0.0
    %3725 = vmatpush1.msra.mxu0 %v3460
    %3726 = vmatprep.subr.mxu0 0.0
    %3727 = vmatpush1.msra.mxu0 %v3461
    %3728 = vmatprep.subr.mxu0 0.0
    %3729 = vmatpush1.msra.mxu0 %v3462
    %3730 = vmatprep.subr.mxu0 0.0
    %3731 = vmatpush1.msra.mxu0 %v3463
    %3732 = vmatprep.subr.mxu0 0.0
    %3733 = vmatpush1.msra.mxu0 %v3464
    %3734 = vmatprep.subr.mxu0 0.0
    %3735 = vmatpush1.msra.mxu0 %v3465
    %3736 = vmatprep.subr.mxu0 0.0
    %3737 = vmatpush1.msra.mxu0 %v3466
    %3738 = vmatprep.subr.mxu0 0.0
    %3739 = vmatpush1.msra.mxu0 %v3467
    %3740 = vmatprep.subr.mxu0 0.0
    %3741 = vmatpush1.msra.mxu0 %v3468
    %3742 = vmatprep.subr.mxu0 0.0
    %3743 = vmatpush1.msra.mxu0 %v3469
    %3744 = vmatprep.subr.mxu0 0.0
    %3745 = vmatpush1.msra.mxu0 %v3470
    %3746 = vmatprep.subr.mxu0 0.0
    %3747 = vmatpush1.msra.mxu0 %v3471
    %3748 = vmatprep.subr.mxu0 0.0
    %3749 = vmatpush1.msra.mxu0 %v3472
    %3750 = vmatprep.subr.mxu0 0.0
    %3751 = vmatpush1.msra.mxu0 %v3473
    %3752 = vmatprep.subr.mxu0 0.0
    %3753 = vmatpush1.msra.mxu0 %v3474
    %3754 = vmatprep.subr.mxu0 0.0
    %3755 = vmatpush1.msra.mxu0 %v3475
    %3756 = vmatprep.subr.mxu0 0.0
    %3757 = vmatpush1.msra.mxu0 %v3476
    %3758 = vmatprep.subr.mxu0 0.0
    %3759 = vmatpush1.msra.mxu0 %v3477
    %3760 = vmatprep.subr.mxu0 0.0
    %3761 = vmatpush1.msra.mxu0 %v3478
    %3762 = vmatprep.subr.mxu0 0.0
    %3763 = vmatpush1.msra.mxu0 %v3479
    %3764 = vmatprep.subr.mxu0 0.0
    %3765 = vmatpush1.msra.mxu0 %v3480
    %3766 = vmatprep.subr.mxu0 0.0
    %3767 = vmatpush1.msra.mxu0 %v3481
    %3768 = vmatprep.subr.mxu0 0.0
    %3769 = vmatpush1.msra.mxu0 %v3482
    %3770 = vmatprep.subr.mxu0 0.0
    %3771 = vmatpush1.msra.mxu0 %v3483
    %3772 = vmatprep.subr.mxu0 0.0
    %3773 = vmatpush1.msra.mxu0 %v3484
    %3774 = vmatprep.subr.mxu0 0.0
    %3775 = vmatpush1.msra.mxu0 %v3485
    %3776 = vmatprep.subr.mxu0 0.0
    %3777 = vmatpush1.msra.mxu0 %v3486
    %3778 = vmatprep.subr.mxu0 0.0
    %3779 = vmatpush1.msra.mxu0 %v3487
    %3780 = vmatprep.subr.mxu0 0.0
    %3781 = vmatpush1.msra.mxu0 %v3488
    %3782 = vmatprep.subr.mxu0 0.0
    %3783 = vmatpush1.msra.mxu0 %v3489
    %3784 = vmatprep.subr.mxu0 0.0
    %3785 = vmatpush1.msra.mxu0 %v3490
    %3786 = vmatprep.mubr.f32.mxu0 %v3428
    %3787 = vmatmul.mubr.f32.gmra.mrb[0].mxu0 %v3427
    %v3788 = vpop.f32.mrb[0].mxu0
    %v3789 = vadd.f32 %v3720, %v3788
    %v3790 = vpop.f32.mrb[0].mxu0
    %3791 = vmatprep.mubr.f32.mxu0 %v3444
    %3792 = vmatmul.mubr.f32.gmra.mrb[0].mxu0 %v3443
    %v3793 = vpop.f32.mrb[0].mxu0
    %v3794 = vadd.f32 %v3720, %v3793
    %v3795 = vpop.f32.mrb[0].mxu0
    %3796 = vdwg.mxu0
    %3797 = vmatprep.subr.mxu0 0.0
    %3798 = vmatpush1.msra.mxu0 %v3491
    %3799 = vmatprep.subr.mxu0 0.0
    %3800 = vmatpush1.msra.mxu0 %v3492
    %3801 = vmatprep.subr.mxu0 0.0
    %3802 = vmatpush1.msra.mxu0 %v3493
    %3803 = vmatprep.subr.mxu0 0.0
    %3804 = vmatpush1.msra.mxu0 %v3494
    %3805 = vmatprep.subr.mxu0 0.0
    %3806 = vmatpush1.msra.mxu0 %v3495
    %3807 = vmatprep.subr.mxu0 0.0
    %3808 = vmatpush1.msra.mxu0 %v3496
    %3809 = vmatprep.subr.mxu0 0.0
    %3810 = vmatpush1.msra.mxu0 %v3497
    %3811 = vmatprep.subr.mxu0 0.0
    %3812 = vmatpush1.msra.mxu0 %v3498
    %3813 = vmatprep.subr.mxu0 0.0
    %3814 = vmatpush1.msra.mxu0 %v3499
    %3815 = vmatprep.subr.mxu0 0.0
    %3816 = vmatpush1.msra.mxu0 %v3500
    %3817 = vmatprep.subr.mxu0 0.0
    %3818 = vmatpush1.msra.mxu0 %v3501
    %3819 = vmatprep.subr.mxu0 0.0
    %3820 = vmatpush1.msra.mxu0 %v3502
    %3821 = vmatprep.subr.mxu0 0.0
    %3822 = vmatpush1.msra.mxu0 %v3503
    %3823 = vmatprep.subr.mxu0 0.0
    %3824 = vmatpush1.msra.mxu0 %v3504
    %3825 = vmatprep.subr.mxu0 0.0
    %3826 = vmatpush1.msra.mxu0 %v3505
    %3827 = vmatprep.subr.mxu0 0.0
    %3828 = vmatpush1.msra.mxu0 %v3506
    %3829 = vmatprep.subr.mxu0 0.0
    %3830 = vmatpush1.msra.mxu0 %v3507
    %3831 = vmatprep.subr.mxu0 0.0
    %3832 = vmatpush1.msra.mxu0 %v3508
    %3833 = vmatprep.subr.mxu0 0.0
    %3834 = vmatpush1.msra.mxu0 %v3509
    %3835 = vmatprep.subr.mxu0 0.0
    %3836 = vmatpush1.msra.mxu0 %v3510
    %3837 = vmatprep.subr.mxu0 0.0
    %3838 = vmatpush1.msra.mxu0 %v3511
    %3839 = vmatprep.subr.mxu0 0.0
    %3840 = vmatpush1.msra.mxu0 %v3512
    %3841 = vmatprep.subr.mxu0 0.0
    %3842 = vmatpush1.msra.mxu0 %v3513
    %3843 = vmatprep.subr.mxu0 0.0
    %3844 = vmatpush1.msra.mxu0 %v3514
    %3845 = vmatprep.subr.mxu0 0.0
    %3846 = vmatpush1.msra.mxu0 %v3515
    %3847 = vmatprep.subr.mxu0 0.0
    %3848 = vmatpush1.msra.mxu0 %v3516
    %3849 = vmatprep.subr.mxu0 0.0
    %3850 = vmatpush1.msra.mxu0 %v3517
    %3851 = vmatprep.subr.mxu0 0.0
    %3852 = vmatpush1.msra.mxu0 %v3518
    %3853 = vmatprep.subr.mxu0 0.0
    %3854 = vmatpush1.msra.mxu0 %v3519
    %3855 = vmatprep.subr.mxu0 0.0
    %3856 = vmatpush1.msra.mxu0 %v3520
    %3857 = vmatprep.subr.mxu0 0.0
    %3858 = vmatpush1.msra.mxu0 %v3521
    %3859 = vmatprep.subr.mxu0 0.0
    %3860 = vmatpush1.msra.mxu0 %v3522
    %3861 = vmatprep.mubr.f32.mxu0 %v3430
    %3862 = vmatmul.mubr.f32.gmra.mrb[0].mxu0 %v3429
    %v3863 = vpop.f32.mrb[0].mxu0
    %v3864 = vadd.f32 %v3789, %v3863
    %v3865 = vpop.f32.mrb[0].mxu0
    %3866 = vmatprep.mubr.f32.mxu0 %v3446
    %3867 = vmatmul.mubr.f32.gmra.mrb[0].mxu0 %v3445
    %v3868 = vpop.f32.mrb[0].mxu0
    %v3869 = vadd.f32 %v3794, %v3868
    %v3870 = vpop.f32.mrb[0].mxu0
    %3871 = vdwg.mxu0
    %3872 = vmatprep.subr.mxu0 0.0
    %3873 = vmatpush1.msra.mxu0 %v3523
    %3874 = vmatprep.subr.mxu0 0.0
    %3875 = vmatpush1.msra.mxu0 %v3524
    %3876 = vmatprep.subr.mxu0 0.0
    %3877 = vmatpush1.msra.mxu0 %v3525
    %3878 = vmatprep.subr.mxu0 0.0
    %3879 = vmatpush1.msra.mxu0 %v3526
    %3880 = vmatprep.subr.mxu0 0.0
    %3881 = vmatpush1.msra.mxu0 %v3527
    %3882 = vmatprep.subr.mxu0 0.0
    %3883 = vmatpush1.msra.mxu0 %v3528
    %3884 = vmatprep.subr.mxu0 0.0
    %3885 = vmatpush1.msra.mxu0 %v3529
    %3886 = vmatprep.subr.mxu0 0.0
    %3887 = vmatpush1.msra.mxu0 %v3530
    %3888 = vmatprep.subr.mxu0 0.0
    %3889 = vmatpush1.msra.mxu0 %v3531
    %3890 = vmatprep.subr.mxu0 0.0
    %3891 = vmatpush1.msra.mxu0 %v3532
    %3892 = vmatprep.subr.mxu0 0.0
    %3893 = vmatpush1.msra.mxu0 %v3533
    %3894 = vmatprep.subr.mxu0 0.0
    %3895 = vmatpush1.msra.mxu0 %v3534
    %3896 = vmatprep.subr.mxu0 0.0
    %3897 = vmatpush1.msra.mxu0 %v3535
    %3898 = vmatprep.subr.mxu0 0.0
    %3899 = vmatpush1.msra.mxu0 %v3536
    %3900 = vmatprep.subr.mxu0 0.0
    %3901 = vmatpush1.msra.mxu0 %v3537
    %3902 = vmatprep.subr.mxu0 0.0
    %3903 = vmatpush1.msra.mxu0 %v3538
    %3904 = vmatprep.subr.mxu0 0.0
    %3905 = vmatpush1.msra.mxu0 %v3539
    %3906 = vmatprep.subr.mxu0 0.0
    %3907 = vmatpush1.msra.mxu0 %v3540
    %3908 = vmatprep.subr.mxu0 0.0
    %3909 = vmatpush1.msra.mxu0 %v3541
    %3910 = vmatprep.subr.mxu0 0.0
    %3911 = vmatpush1.msra.mxu0 %v3542
    %3912 = vmatprep.subr.mxu0 0.0
    %3913 = vmatpush1.msra.mxu0 %v3543
    %3914 = vmatprep.subr.mxu0 0.0
    %3915 = vmatpush1.msra.mxu0 %v3544
    %3916 = vmatprep.subr.mxu0 0.0
    %3917 = vmatpush1.msra.mxu0 %v3545
    %3918 = vmatprep.subr.mxu0 0.0
    %3919 = vmatpush1.msra.mxu0 %v3546
    %3920 = vmatprep.subr.mxu0 0.0
    %3921 = vmatpush1.msra.mxu0 %v3547
    %3922 = vmatprep.subr.mxu0 0.0
    %3923 = vmatpush1.msra.mxu0 %v3548
    %3924 = vmatprep.subr.mxu0 0.0
    %3925 = vmatpush1.msra.mxu0 %v3549
    %3926 = vmatprep.subr.mxu0 0.0
    %3927 = vmatpush1.msra.mxu0 %v3550
    %3928 = vmatprep.subr.mxu0 0.0
    %3929 = vmatpush1.msra.mxu0 %v3551
    %3930 = vmatprep.subr.mxu0 0.0
    %3931 = vmatpush1.msra.mxu0 %v3552
    %3932 = vmatprep.subr.mxu0 0.0
    %3933 = vmatpush1.msra.mxu0 %v3553
    %3934 = vmatprep.subr.mxu0 0.0
    %3935 = vmatpush1.msra.mxu0 %v3554
    %3936 = vmatprep.mubr.f32.mxu0 %v3432
    %3937 = vmatmul.mubr.f32.gmra.mrb[0].mxu0 %v3431
    %v3938 = vpop.f32.mrb[0].mxu0
    %v3939 = vadd.f32 %v3864, %v3938
    %v3940 = vpop.f32.mrb[0].mxu0
    %3941 = vmatprep.mubr.f32.mxu0 %v3448
    %3942 = vmatmul.mubr.f32.gmra.mrb[0].mxu0 %v3447
    %v3943 = vpop.f32.mrb[0].mxu0
    %v3944 = vadd.f32 %v3869, %v3943
    %v3945 = vpop.f32.mrb[0].mxu0
    %3946 = vdwg.mxu0
    %3947 = vmatprep.subr.mxu0 0.0
    %3948 = vmatpush1.msra.mxu0 %v3555
    %3949 = vmatprep.subr.mxu0 0.0
    %3950 = vmatpush1.msra.mxu0 %v3556
    %3951 = vmatprep.subr.mxu0 0.0
    %3952 = vmatpush1.msra.mxu0 %v3557
    %3953 = vmatprep.subr.mxu0 0.0
    %3954 = vmatpush1.msra.mxu0 %v3558
    %3955 = vmatprep.subr.mxu0 0.0
    %3956 = vmatpush1.msra.mxu0 %v3559
    %3957 = vmatprep.subr.mxu0 0.0
    %3958 = vmatpush1.msra.mxu0 %v3560
    %3959 = vmatprep.subr.mxu0 0.0
    %3960 = vmatpush1.msra.mxu0 %v3561
    %3961 = vmatprep.subr.mxu0 0.0
    %3962 = vmatpush1.msra.mxu0 %v3562
    %3963 = vmatprep.subr.mxu0 0.0
    %3964 = vmatpush1.msra.mxu0 %v3563
    %3965 = vmatprep.subr.mxu0 0.0
    %3966 = vmatpush1.msra.mxu0 %v3564
    %3967 = vmatprep.subr.mxu0 0.0
    %3968 = vmatpush1.msra.mxu0 %v3565
    %3969 = vmatprep.subr.mxu0 0.0
    %3970 = vmatpush1.msra.mxu0 %v3566
    %3971 = vmatprep.subr.mxu0 0.0
    %3972 = vmatpush1.msra.mxu0 %v3567
    %3973 = vmatprep.subr.mxu0 0.0
    %3974 = vmatpush1.msra.mxu0 %v3568
    %3975 = vmatprep.subr.mxu0 0.0
    %3976 = vmatpush1.msra.mxu0 %v3569
    %3977 = vmatprep.subr.mxu0 0.0
    %3978 = vmatpush1.msra.mxu0 %v3570
    %3979 = vmatprep.subr.mxu0 0.0
    %3980 = vmatpush1.msra.mxu0 %v3571
    %3981 = vmatprep.subr.mxu0 0.0
    %3982 = vmatpush1.msra.mxu0 %v3572
    %3983 = vmatprep.subr.mxu0 0.0
    %3984 = vmatpush1.msra.mxu0 %v3573
    %3985 = vmatprep.subr.mxu0 0.0
    %3986 = vmatpush1.msra.mxu0 %v3574
    %3987 = vmatprep.subr.mxu0 0.0
    %3988 = vmatpush1.msra.mxu0 %v3575
    %3989 = vmatprep.subr.mxu0 0.0
    %3990 = vmatpush1.msra.mxu0 %v3576
    %3991 = vmatprep.subr.mxu0 0.0
    %3992 = vmatpush1.msra.mxu0 %v3577
    %3993 = vmatprep.subr.mxu0 0.0
    %3994 = vmatpush1.msra.mxu0 %v3578
    %3995 = vmatprep.subr.mxu0 0.0
    %3996 = vmatpush1.msra.mxu0 %v3579
    %3997 = vmatprep.subr.mxu0 0.0
    %3998 = vmatpush1.msra.mxu0 %v3580
    %3999 = vmatprep.subr.mxu0 0.0
    %4000 = vmatpush1.msra.mxu0 %v3581
    %4001 = vmatprep.subr.mxu0 0.0
    %4002 = vmatpush1.msra.mxu0 %v3582
    %4003 = vmatprep.subr.mxu0 0.0
    %4004 = vmatpush1.msra.mxu0 %v3583
    %4005 = vmatprep.subr.mxu0 0.0
    %4006 = vmatpush1.msra.mxu0 %v3584
    %4007 = vmatprep.subr.mxu0 0.0
    %4008 = vmatpush1.msra.mxu0 %v3585
    %4009 = vmatprep.subr.mxu0 0.0
    %4010 = vmatpush1.msra.mxu0 %v3586
    %4011 = vmatprep.mubr.f32.mxu0 %v3434
    %4012 = vmatmul.mubr.f32.gmra.mrb[0].mxu0 %v3433
    %v4013 = vpop.f32.mrb[0].mxu0
    %v4014 = vadd.f32 %v3939, %v4013
    %v4015 = vpop.f32.mrb[0].mxu0
    %4016 = vmatprep.mubr.f32.mxu0 %v3450
    %4017 = vmatmul.mubr.f32.gmra.mrb[0].mxu0 %v3449
    %v4018 = vpop.f32.mrb[0].mxu0
    %v4019 = vadd.f32 %v3944, %v4018
    %v4020 = vpop.f32.mrb[0].mxu0
    %4021 = vdwg.mxu0
    %4022 = vmatprep.subr.mxu0 0.0
    %4023 = vmatpush1.msra.mxu0 %v3587
    %4024 = vmatprep.subr.mxu0 0.0
    %4025 = vmatpush1.msra.mxu0 %v3588
    %4026 = vmatprep.subr.mxu0 0.0
    %4027 = vmatpush1.msra.mxu0 %v3589
    %4028 = vmatprep.subr.mxu0 0.0
    %4029 = vmatpush1.msra.mxu0 %v3590
    %4030 = vmatprep.subr.mxu0 0.0
    %4031 = vmatpush1.msra.mxu0 %v3591
    %4032 = vmatprep.subr.mxu0 0.0
    %4033 = vmatpush1.msra.mxu0 %v3592
    %4034 = vmatprep.subr.mxu0 0.0
    %4035 = vmatpush1.msra.mxu0 %v3593
    %4036 = vmatprep.subr.mxu0 0.0
    %4037 = vmatpush1.msra.mxu0 %v3594
    %4038 = vmatprep.subr.mxu0 0.0
    %4039 = vmatpush1.msra.mxu0 %v3595
    %4040 = vmatprep.subr.mxu0 0.0
    %4041 = vmatpush1.msra.mxu0 %v3596
    %4042 = vmatprep.subr.mxu0 0.0
    %4043 = vmatpush1.msra.mxu0 %v3597
    %4044 = vmatprep.subr.mxu0 0.0
    %4045 = vmatpush1.msra.mxu0 %v3598
    %4046 = vmatprep.subr.mxu0 0.0
    %4047 = vmatpush1.msra.mxu0 %v3599
    %4048 = vmatprep.subr.mxu0 0.0
    %4049 = vmatpush1.msra.mxu0 %v3600
    %4050 = vmatprep.subr.mxu0 0.0
    %4051 = vmatpush1.msra.mxu0 %v3601
    %4052 = vmatprep.subr.mxu0 0.0
    %4053 = vmatpush1.msra.mxu0 %v3602
    %4054 = vmatprep.subr.mxu0 0.0
    %4055 = vmatpush1.msra.mxu0 %v3603
    %4056 = vmatprep.subr.mxu0 0.0
    %4057 = vmatpush1.msra.mxu0 %v3604
    %4058 = vmatprep.subr.mxu0 0.0
    %4059 = vmatpush1.msra.mxu0 %v3605
    %4060 = vmatprep.subr.mxu0 0.0
    %4061 = vmatpush1.msra.mxu0 %v3606
    %4062 = vmatprep.subr.mxu0 0.0
    %4063 = vmatpush1.msra.mxu0 %v3607
    %4064 = vmatprep.subr.mxu0 0.0
    %4065 = vmatpush1.msra.mxu0 %v3608
    %4066 = vmatprep.subr.mxu0 0.0
    %4067 = vmatpush1.msra.mxu0 %v3609
    %4068 = vmatprep.subr.mxu0 0.0
    %4069 = vmatpush1.msra.mxu0 %v3610
    %4070 = vmatprep.subr.mxu0 0.0
    %4071 = vmatpush1.msra.mxu0 %v3611
    %4072 = vmatprep.subr.mxu0 0.0
    %4073 = vmatpush1.msra.mxu0 %v3612
    %4074 = vmatprep.subr.mxu0 0.0
    %4075 = vmatpush1.msra.mxu0 %v3613
    %4076 = vmatprep.subr.mxu0 0.0
    %4077 = vmatpush1.msra.mxu0 %v3614
    %4078 = vmatprep.subr.mxu0 0.0
    %4079 = vmatpush1.msra.mxu0 %v3615
    %4080 = vmatprep.subr.mxu0 0.0
    %4081 = vmatpush1.msra.mxu0 %v3616
    %4082 = vmatprep.subr.mxu0 0.0
    %4083 = vmatpush1.msra.mxu0 %v3617
    %4084 = vmatprep.subr.mxu0 0.0
    %4085 = vmatpush1.msra.mxu0 %v3618
    %4086 = vmatprep.mubr.f32.mxu0 %v3436
    %4087 = vmatmul.mubr.f32.gmra.mrb[0].mxu0 %v3435
    %v4088 = vpop.f32.mrb[0].mxu0
    %v4089 = vadd.f32 %v4014, %v4088
    %v4090 = vpop.f32.mrb[0].mxu0
    %4091 = vmatprep.mubr.f32.mxu0 %v3452
    %4092 = vmatmul.mubr.f32.gmra.mrb[0].mxu0 %v3451
    %v4093 = vpop.f32.mrb[0].mxu0
    %v4094 = vadd.f32 %v4019, %v4093
    %v4095 = vpop.f32.mrb[0].mxu0
    %4096 = vdwg.mxu0
    %4097 = vmatprep.subr.mxu0 0.0
    %4098 = vmatpush1.msra.mxu0 %v3619
    %4099 = vmatprep.subr.mxu0 0.0
    %4100 = vmatpush1.msra.mxu0 %v3620
    %4101 = vmatprep.subr.mxu0 0.0
    %4102 = vmatpush1.msra.mxu0 %v3621
    %4103 = vmatprep.subr.mxu0 0.0
    %4104 = vmatpush1.msra.mxu0 %v3622
    %4105 = vmatprep.subr.mxu0 0.0
    %4106 = vmatpush1.msra.mxu0 %v3623
    %4107 = vmatprep.subr.mxu0 0.0
    %4108 = vmatpush1.msra.mxu0 %v3624
    %4109 = vmatprep.subr.mxu0 0.0
    %4110 = vmatpush1.msra.mxu0 %v3625
    %4111 = vmatprep.subr.mxu0 0.0
    %4112 = vmatpush1.msra.mxu0 %v3626
    %4113 = vmatprep.subr.mxu0 0.0
    %4114 = vmatpush1.msra.mxu0 %v3627
    %4115 = vmatprep.subr.mxu0 0.0
    %4116 = vmatpush1.msra.mxu0 %v3628
    %4117 = vmatprep.subr.mxu0 0.0
    %4118 = vmatpush1.msra.mxu0 %v3629
    %4119 = vmatprep.subr.mxu0 0.0
    %4120 = vmatpush1.msra.mxu0 %v3630
    %4121 = vmatprep.subr.mxu0 0.0
    %4122 = vmatpush1.msra.mxu0 %v3631
    %4123 = vmatprep.subr.mxu0 0.0
    %4124 = vmatpush1.msra.mxu0 %v3632
    %4125 = vmatprep.subr.mxu0 0.0
    %4126 = vmatpush1.msra.mxu0 %v3633
    %4127 = vmatprep.subr.mxu0 0.0
    %4128 = vmatpush1.msra.mxu0 %v3634
    %4129 = vmatprep.subr.mxu0 0.0
    %4130 = vmatpush1.msra.mxu0 %v3635
    %4131 = vmatprep.subr.mxu0 0.0
    %4132 = vmatpush1.msra.mxu0 %v3636
    %4133 = vmatprep.subr.mxu0 0.0
    %4134 = vmatpush1.msra.mxu0 %v3637
    %4135 = vmatprep.subr.mxu0 0.0
    %4136 = vmatpush1.msra.mxu0 %v3638
    %4137 = vmatprep.subr.mxu0 0.0
    %4138 = vmatpush1.msra.mxu0 %v3639
    %4139 = vmatprep.subr.mxu0 0.0
    %4140 = vmatpush1.msra.mxu0 %v3640
    %4141 = vmatprep.subr.mxu0 0.0
    %4142 = vmatpush1.msra.mxu0 %v3641
    %4143 = vmatprep.subr.mxu0 0.0
    %4144 = vmatpush1.msra.mxu0 %v3642
    %4145 = vmatprep.subr.mxu0 0.0
    %4146 = vmatpush1.msra.mxu0 %v3643
    %4147 = vmatprep.subr.mxu0 0.0
    %4148 = vmatpush1.msra.mxu0 %v3644
    %4149 = vmatprep.subr.mxu0 0.0
    %4150 = vmatpush1.msra.mxu0 %v3645
    %4151 = vmatprep.subr.mxu0 0.0
    %4152 = vmatpush1.msra.mxu0 %v3646
    %4153 = vmatprep.subr.mxu0 0.0
    %4154 = vmatpush1.msra.mxu0 %v3647
    %4155 = vmatprep.subr.mxu0 0.0
    %4156 = vmatpush1.msra.mxu0 %v3648
    %4157 = vmatprep.subr.mxu0 0.0
    %4158 = vmatpush1.msra.mxu0 %v3649
    %4159 = vmatprep.subr.mxu0 0.0
    %4160 = vmatpush1.msra.mxu0 %v3650
    %4161 = vmatprep.mubr.f32.mxu0 %v3438
    %4162 = vmatmul.mubr.f32.gmra.mrb[0].mxu0 %v3437
    %v4163 = vpop.f32.mrb[0].mxu0
    %v4164 = vadd.f32 %v4089, %v4163
    %v4165 = vpop.f32.mrb[0].mxu0
    %4166 = vmatprep.mubr.f32.mxu0 %v3454
    %4167 = vmatmul.mubr.f32.gmra.mrb[0].mxu0 %v3453
    %v4168 = vpop.f32.mrb[0].mxu0
    %v4169 = vadd.f32 %v4094, %v4168
    %v4170 = vpop.f32.mrb[0].mxu0
    %4171 = vdwg.mxu0
    %4172 = vmatprep.subr.mxu0 0.0
    %4173 = vmatpush1.msra.mxu0 %v3651
    %4174 = vmatprep.subr.mxu0 0.0
    %4175 = vmatpush1.msra.mxu0 %v3652
    %4176 = vmatprep.subr.mxu0 0.0
    %4177 = vmatpush1.msra.mxu0 %v3653
    %4178 = vmatprep.subr.mxu0 0.0
    %4179 = vmatpush1.msra.mxu0 %v3654
    %4180 = vmatprep.subr.mxu0 0.0
    %4181 = vmatpush1.msra.mxu0 %v3655
    %4182 = vmatprep.subr.mxu0 0.0
    %4183 = vmatpush1.msra.mxu0 %v3656
    %4184 = vmatprep.subr.mxu0 0.0
    %4185 = vmatpush1.msra.mxu0 %v3657
    %4186 = vmatprep.subr.mxu0 0.0
    %4187 = vmatpush1.msra.mxu0 %v3658
    %4188 = vmatprep.subr.mxu0 0.0
    %4189 = vmatpush1.msra.mxu0 %v3659
    %4190 = vmatprep.subr.mxu0 0.0
    %4191 = vmatpush1.msra.mxu0 %v3660
    %4192 = vmatprep.subr.mxu0 0.0
    %4193 = vmatpush1.msra.mxu0 %v3661
    %4194 = vmatprep.subr.mxu0 0.0
    %4195 = vmatpush1.msra.mxu0 %v3662
    %4196 = vmatprep.subr.mxu0 0.0
    %4197 = vmatpush1.msra.mxu0 %v3663
    %4198 = vmatprep.subr.mxu0 0.0
    %4199 = vmatpush1.msra.mxu0 %v3664
    %4200 = vmatprep.subr.mxu0 0.0
    %4201 = vmatpush1.msra.mxu0 %v3665
    %4202 = vmatprep.subr.mxu0 0.0
    %4203 = vmatpush1.msra.mxu0 %v3666
    %4204 = vmatprep.subr.mxu0 0.0
    %4205 = vmatpush1.msra.mxu0 %v3667
    %4206 = vmatprep.subr.mxu0 0.0
    %4207 = vmatpush1.msra.mxu0 %v3668
    %4208 = vmatprep.subr.mxu0 0.0
    %4209 = vmatpush1.msra.mxu0 %v3669
    %4210 = vmatprep.subr.mxu0 0.0
    %4211 = vmatpush1.msra.mxu0 %v3670
    %4212 = vmatprep.subr.mxu0 0.0
    %4213 = vmatpush1.msra.mxu0 %v3671
    %4214 = vmatprep.subr.mxu0 0.0
    %4215 = vmatpush1.msra.mxu0 %v3672
    %4216 = vmatprep.subr.mxu0 0.0
    %4217 = vmatpush1.msra.mxu0 %v3673
    %4218 = vmatprep.subr.mxu0 0.0
    %4219 = vmatpush1.msra.mxu0 %v3674
    %4220 = vmatprep.subr.mxu0 0.0
    %4221 = vmatpush1.msra.mxu0 %v3675
    %4222 = vmatprep.subr.mxu0 0.0
    %4223 = vmatpush1.msra.mxu0 %v3676
    %4224 = vmatprep.subr.mxu0 0.0
    %4225 = vmatpush1.msra.mxu0 %v3677
    %4226 = vmatprep.subr.mxu0 0.0
    %4227 = vmatpush1.msra.mxu0 %v3678
    %4228 = vmatprep.subr.mxu0 0.0
    %4229 = vmatpush1.msra.mxu0 %v3679
    %4230 = vmatprep.subr.mxu0 0.0
    %4231 = vmatpush1.msra.mxu0 %v3680
    %4232 = vmatprep.subr.mxu0 0.0
    %4233 = vmatpush1.msra.mxu0 %v3681
    %4234 = vmatprep.subr.mxu0 0.0
    %4235 = vmatpush1.msra.mxu0 %v3682
    %4236 = vmatprep.mubr.f32.mxu0 %v3440
    %4237 = vmatmul.mubr.f32.gmra.mrb[0].mxu0 %v3439
    %v4238 = vpop.f32.mrb[0].mxu0
    %v4239 = vadd.f32 %v4164, %v4238
    %v4240 = vpop.f32.mrb[0].mxu0
    %4241 = vmatprep.mubr.f32.mxu0 %v3456
    %4242 = vmatmul.mubr.f32.gmra.mrb[0].mxu0 %v3455
    %v4243 = vpop.f32.mrb[0].mxu0
    %v4244 = vadd.f32 %v4169, %v4243
    %v4245 = vpop.f32.mrb[0].mxu0
    %4246 = vdwg.mxu0
    %4247 = vmatprep.subr.mxu0 0.0
    %4248 = vmatpush1.msra.mxu0 %v3683
    %4249 = vmatprep.subr.mxu0 0.0
    %4250 = vmatpush1.msra.mxu0 %v3684
    %4251 = vmatprep.subr.mxu0 0.0
    %4252 = vmatpush1.msra.mxu0 %v3685
    %4253 = vmatprep.subr.mxu0 0.0
    %4254 = vmatpush1.msra.mxu0 %v3686
    %4255 = vmatprep.subr.mxu0 0.0
    %4256 = vmatpush1.msra.mxu0 %v3687
    %4257 = vmatprep.subr.mxu0 0.0
    %4258 = vmatpush1.msra.mxu0 %v3688
    %4259 = vmatprep.subr.mxu0 0.0
    %4260 = vmatpush1.msra.mxu0 %v3689
    %4261 = vmatprep.subr.mxu0 0.0
    %4262 = vmatpush1.msra.mxu0 %v3690
    %4263 = vmatprep.subr.mxu0 0.0
    %4264 = vmatpush1.msra.mxu0 %v3691
    %4265 = vmatprep.subr.mxu0 0.0
    %4266 = vmatpush1.msra.mxu0 %v3692
    %4267 = vmatprep.subr.mxu0 0.0
    %4268 = vmatpush1.msra.mxu0 %v3693
    %4269 = vmatprep.subr.mxu0 0.0
    %4270 = vmatpush1.msra.mxu0 %v3694
    %4271 = vmatprep.subr.mxu0 0.0
    %4272 = vmatpush1.msra.mxu0 %v3695
    %4273 = vmatprep.subr.mxu0 0.0
    %4274 = vmatpush1.msra.mxu0 %v3696
    %4275 = vmatprep.subr.mxu0 0.0
    %4276 = vmatpush1.msra.mxu0 %v3697
    %4277 = vmatprep.subr.mxu0 0.0
    %4278 = vmatpush1.msra.mxu0 %v3698
    %4279 = vmatprep.subr.mxu0 0.0
    %4280 = vmatpush1.msra.mxu0 %v3699
    %4281 = vmatprep.subr.mxu0 0.0
    %4282 = vmatpush1.msra.mxu0 %v3700
    %4283 = vmatprep.subr.mxu0 0.0
    %4284 = vmatpush1.msra.mxu0 %v3701
    %4285 = vmatprep.subr.mxu0 0.0
    %4286 = vmatpush1.msra.mxu0 %v3702
    %4287 = vmatprep.subr.mxu0 0.0
    %4288 = vmatpush1.msra.mxu0 %v3703
    %4289 = vmatprep.subr.mxu0 0.0
    %4290 = vmatpush1.msra.mxu0 %v3704
    %4291 = vmatprep.subr.mxu0 0.0
    %4292 = vmatpush1.msra.mxu0 %v3705
    %4293 = vmatprep.subr.mxu0 0.0
    %4294 = vmatpush1.msra.mxu0 %v3706
    %4295 = vmatprep.subr.mxu0 0.0
    %4296 = vmatpush1.msra.mxu0 %v3707
    %4297 = vmatprep.subr.mxu0 0.0
    %4298 = vmatpush1.msra.mxu0 %v3708
    %4299 = vmatprep.subr.mxu0 0.0
    %4300 = vmatpush1.msra.mxu0 %v3709
    %4301 = vmatprep.subr.mxu0 0.0
    %4302 = vmatpush1.msra.mxu0 %v3710
    %4303 = vmatprep.subr.mxu0 0.0
    %4304 = vmatpush1.msra.mxu0 %v3711
    %4305 = vmatprep.subr.mxu0 0.0
    %4306 = vmatpush1.msra.mxu0 %v3712
    %4307 = vmatprep.subr.mxu0 0.0
    %4308 = vmatpush1.msra.mxu0 %v3713
    %4309 = vmatprep.subr.mxu0 0.0
    %4310 = vmatpush1.msra.mxu0 %v3714
    %4311 = vmatprep.mubr.f32.mxu0 %v3442
    %4312 = vmatmul.mubr.f32.gmra.mrb[0].mxu0 %v3441
    %v4313 = vpop.f32.mrb[0].mxu0
    %v4314 = vadd.f32 %v4239, %v4313
    %v4315 = vpop.f32.mrb[0].mxu0
    %4316 = vmatprep.mubr.f32.mxu0 %v3458
    %4317 = vmatmul.mubr.f32.gmra.mrb[0].mxu0 %v3457
    %v4318 = vpop.f32.mrb[0].mxu0
    %v4319 = vadd.f32 %v4244, %v4318
    %v4320 = vpop.f32.mrb[0].mxu0
    %4321 = vdwg.mxu0
    %v4322 = vadd.f32 %v2655, %v4314
    %v4323 = vadd.f32 %v2656, %v4319
    %v4324 = vld [vmem:[%s47] sm:$0x1]
    %v4325 = vld [vmem:[%s49] sm:$0x1]
    %v4326 = vsel %vm189, %v4322, 0.0
    %4327 = vadd.xlane.f32.xlu0 %v4326
    %v4328 = vpop.xlane.xlu0 %4327
    %v4329 = vsel %vm189, %v4323, 0.0
    %4330 = vadd.xlane.f32.xlu0 %v4329
    %v4331 = vpop.xlane.xlu0 %4330
    %v4332 = vmul.f32 %v4328, %v1358
    %v4333 = vmul.f32 %v4331, %v1358
    %v4334 = vsub.f32 %v4322, %v4332
    %v4335 = vsub.f32 %v4323, %v4333
    %v4336 = vmul.f32 %v4334, %v4334
    %v4337 = vmul.f32 %v4335, %v4335
    %v4338 = vsel %vm189, %v4336, 0.0
    %4339 = vadd.xlane.f32.xlu0 %v4338
    %v4340 = vpop.xlane.xlu0 %4339
    %v4341 = vsel %vm189, %v4337, 0.0
    %4342 = vadd.xlane.f32.xlu0 %v4341
    %v4343 = vpop.xlane.xlu0 %4342
    %v4344 = vmul.f32 %v4340, %v1358
    %v4345 = vmul.f32 %v4343, %v1358
    %v4346 = vadd.f32 %v4344, 1e-05
    %v4347 = vadd.f32 %v4345, 1e-05
    %v4348 = vrsqrt.pop %v4346
    %v4349 = vrsqrt.pop %v4347
    %v4350 = vmul.f32 %v4334, %v4348
    %v4351 = vmul.f32 %v4335, %v4349
    %v4353 = vlaneseq
    %v4354 = vshrl.u32 %v4353, 7
    %v4355 = vsub.s32 0, %v4354
    %v4356 = vrot.slane %v4324, %v4355
    %v4358 = vmul.f32 %v4350, %v4356
    %v4359 = vmul.f32 %v4351, %v4356
    %v4361 = vlaneseq
    %v4362 = vshrl.u32 %v4361, 7
    %v4363 = vsub.s32 0, %v4362
    %v4364 = vrot.slane %v4325, %v4363
    %v4366 = vadd.f32 %v4358, %v4364
    %v4367 = vadd.f32 %v4359, %v4364
    %4368 = vst.msk [vmem:[#allocation2] sm:$0xff] %vm189, %v4366
    %4369 = vst.msk [vmem:[#allocation2 + $0x8] sm:$0xff] %vm189, %v4367
    // Predicated region
    $region118: #{decoder_forward.1} parent=1 // pred_check
      _
    $region119: #{decoder_forward.1} parent=1 // pred_check_branch
      %4371 = sbr.rel (0) target = $region121
    $region120: #{decoder_forward.1} parent=1 // pred_region
      %s4373 = ssub.s32 256, 256
      %4374 = vsyncadd [#allocation3], %s4373
      %s4375 = sshll.u32 [#allocation2], 4
      %s4376 = int_to_ptr.vmem [resolvable:$true] %s4375
      %4381 = dma.vmem_to_hbm [thread:$0]  %s4376, 256, %s59, [#allocation3], 128, 128, 8
    $region121: #{decoder_forward.1} parent=1 // pred_fallthru
      _
    // Predicated region
    $region122: #{decoder_forward.1} parent=1 // pred_check
      _
    $region123: #{decoder_forward.1} parent=1 // pred_check_branch
      %4383 = sbr.rel (0) target = $region125
    $region124: #{decoder_forward.1} parent=1 // pred_region
      %4384 = dma.done [#allocation3], 256
    $region125: #{decoder_forward.1} parent=1 // pred_fallthru
      _
    %4385 = vsyncpa [#allocation3], 1

</llo_original>
